<compile_context>
chip_gen: v7x
topology: tpu7x:2x2x1
jax: 0.10.0
libtpu: 0.0.40
codegen_flags: <defaults>
</compile_context>

<pallas_src>
import functools

import jax
import jax.numpy as jnp
import numpy as np
from jax import lax
from jax.experimental import pallas as pl
from jax.experimental.pallas import tpu as pltpu


def _lstm_kernel(xproj_ref,   # (Tc, bt, 4H)     layer-0 input pre-activations (bias folded)
                 w01_ref,     # (H, 8H)          fused [W_hh0 | W_ih1], gate cols [i,f,o,2g]
                 whh1_ref,    # (H, 4H)          layer-1 hidden->gates
                 b1_ref,      # (1, 4H)  f32     layer-1 bias (b_ih + b_hh)
                 wfc_ref,     # (H, O)           final linear weight (transposed)
                 bfc_ref,     # (1, O)   f32     final linear bias
                 out_ref,     # (bt, O)  f32     sigmoid(fc(h2[T-1]))
                 state_sc,    # (4, bt, H) f32   carries: h1, c1, h2, c2
                 r0_sc):      # (bt, 4H) f32     carried h1 @ W_hh0 for the next timestep
    Tc, bt, G4 = xproj_ref.shape
    H = G4 // 4
    t_chunk = pl.program_id(1)

    # First time-chunk of this batch tile: zero the recurrent state.
    @pl.when(t_chunk == 0)
    def _():
        state_sc[...] = jnp.zeros_like(state_sc)
        r0_sc[...] = jnp.zeros_like(r0_sc)

    # Loop-invariant weight loads.  Biases stay (1, 4H): the add below is a near-free
    # VPU sublane broadcast, no (bt, 4H) materialization pinning half the register file.
    w01 = w01_ref[...]
    whh1 = whh1_ref[...]
    wdt = w01.dtype
    b1 = b1_ref[...].astype(jnp.float32)

    def gates_to_hc(gates, c_prev):
        # Gate column order is [i, f, o, g]; the wrapper pre-scaled the g columns by 2,
        # so ONE aligned full-width sigmoid covers all gates and tanh(x) = 2*sig(2x)-1.
        s = jax.nn.sigmoid(gates)
        i = s[:, 0 * H:1 * H]
        f = s[:, 1 * H:2 * H]
        o = s[:, 2 * H:3 * H]
        g = 2.0 * s[:, 3 * H:4 * H] - 1.0
        c_new = f * c_prev + i * g
        h_new = o * jnp.tanh(c_new)
        return h_new, c_new

    def step(t, carry):
        h1, c1, h2, c2, r0 = carry
        # ---- layer 0: input projection precomputed; recurrent part carried in r0.
        g0 = xproj_ref[t].astype(jnp.float32) + r0
        h1, c1 = gates_to_hc(g0, c1)
        # ---- ONE fused matmul: [h1 @ W_hh0 (next step's recurrence) | h1 @ W_ih1].
        m = jnp.dot(h1.astype(wdt), w01, preferred_element_type=jnp.float32)
        r0 = m[:, :G4]
        # ---- layer 1 (no concatenate: second matmul only over h2).
        g1 = m[:, G4:] + jnp.dot(h2.astype(wdt), whh1,
                                 preferred_element_type=jnp.float32) + b1
        h2, c2 = gates_to_hc(g1, c2)
        return h1, c1, h2, c2, r0

    carry0 = (state_sc[0], state_sc[1], state_sc[2], state_sc[3], r0_sc[...])
    # Bounded unroll: LLO cross-step scheduling without blowing the 64-vreg file / imem.
    h1, c1, h2, c2, r0 = lax.fori_loop(0, Tc, step, carry0, unroll=min(Tc, 8))

    state_sc[0] = h1
    state_sc[1] = c1
    state_sc[2] = h2
    state_sc[3] = c2
    r0_sc[...] = r0

    # Last time-chunk: final Linear + Sigmoid on the top-layer last hidden state.
    @pl.when(t_chunk == pl.num_programs(1) - 1)
    def _():
        logits = jnp.dot(h2.astype(wdt), wfc_ref[...],
                         preferred_element_type=jnp.float32) + bfc_ref[...]
        out_ref[...] = jax.nn.sigmoid(logits).astype(out_ref.dtype)


def _prep_gates(w, g_scale=2.0):
    """Reorder PyTorch LSTM gate blocks [i, f, g, o] -> [i, f, o, g] along axis 0 and
    pre-scale the g block by `g_scale` (kernel recovers tanh(x) as 2*sigmoid(2x)-1)."""
    i, f, g, o = jnp.split(w, 4, axis=0)
    return jnp.concatenate([i, f, o, g * g_scale], axis=0)


def _round_up(x, m):
    return ((x + m - 1) // m) * m


def _default_batch_tile(B):
    if B <= 8:
        return B
    # Best effort: v7x has 2 TensorCores -> aim for >=2 batch tiles so the "parallel"
    # axis shards across them; 1-TC chips (v5e/v6e) prefer one big MXU-sized tile.
    try:
        kind = jax.devices()[0].device_kind.lower()
    except Exception:  # pragma: no cover
        kind = ""
    n_tc = 2 if "v7" in kind else 1
    return min(256, _round_up(-(-B // n_tc), 8))


@functools.partial(jax.jit, static_argnames=("hidden_dim", "weight_dtype",
                                             "xproj_dtype", "batch_tile", "time_chunk"))
def risk_sequence_forward(x, params, hidden_dim=64, weight_dtype=jnp.float32,
                          xproj_dtype=jnp.float32, batch_tile=None, time_chunk=16):
    """x: (B, T, input_dim) float32 -- batch_first, matching the PyTorch module."""
    B, T, _ = x.shape
    H = hidden_dim
    G4 = 4 * H
    O = params["w_fc"].shape[0]

    # ---- weight prep: gate reorder + g-prescale, transposes, bias folding, fusion ----
    wih0 = _prep_gates(params["w_ih0"]).astype(jnp.float32)             # (4H, D)
    b0 = _prep_gates(params["b_ih0"] + params["b_hh0"])                 # (4H,)
    # Fused [W_hh0 | W_ih1]: one (H, 8H) matmul per step on the h1 critical chain.
    w01 = jnp.concatenate([_prep_gates(params["w_hh0"]).T,
                           _prep_gates(params["w_ih1"]).T], axis=1)     # (H, 8H)
    whh1 = _prep_gates(params["w_hh1"]).T                               # (H, 4H)
    b1 = _prep_gates(params["b_ih1"] + params["b_hh1"]).reshape(1, G4)
    wfc = params["w_fc"].T                                              # (H, O)
    bfc = params["b_fc"].reshape(1, O)

    # Layer-0 input projection for ALL timesteps as one matmul; the batch_first ->
    # time-major transpose is folded into the einsum output layout.  Optionally bf16
    # (dominant VMEM block & HBM traffic); gate math stays f32 in the kernel.
    xproj = (jnp.einsum("btd,gd->tbg", x.astype(jnp.float32), wih0) + b0
             ).astype(xproj_dtype)                                      # (T, B, 4H)

    # bf16 weights are full MXU rate on every generation (f32 accumulation in-kernel).
    w01 = w01.astype(weight_dtype)
    whh1 = whh1.astype(weight_dtype)
    wfc = wfc.astype(weight_dtype)
    b1 = b1.astype(jnp.float32)
    bfc = bfc.astype(jnp.float32)

    # ---- tiling -----------------------------------------------------------------
    bt = batch_tile if batch_tile is not None else _default_batch_tile(B)
    if bt != B and bt % 8:
        bt = _round_up(bt, 8)                 # (8,128) layout rule on the batch dim
    # Time chunk must divide T exactly (padded timesteps would corrupt the recurrence).
    tc = min(T, time_chunk)
    while T % tc:
        tc -= 1

    grid = (-(-B // bt), T // tc)

    # Explicit scoped-VMEM budget: double-buffered blocks + scratch + headroom.
    xp_item = np.dtype(xproj_dtype).itemsize
    w_item = np.dtype(weight_dtype).itemsize
    vmem_bytes = (2 * tc * bt * G4 * xp_item                    # xproj blocks
                  + 2 * (H * 8 * H + H * G4 + H * O) * w_item   # weights
                  + 2 * (G4 + O) * 4                            # biases
                  + 2 * bt * O * 4                              # output block
                  + (4 * bt * H + bt * G4) * 4                  # carry scratch
                  + (8 << 20))                                  # headroom
    vmem_bytes = int(min(max(vmem_bytes, 16 << 20), 64 << 20))  # v7x physical = 64 MiB

    return pl.pallas_call(
        _lstm_kernel,
        out_shape=jax.ShapeDtypeStruct((B, O), jnp.float32),
        grid_spec=pltpu.PrefetchScalarGridSpec(
            num_scalar_prefetch=0,
            grid=grid,
            in_specs=[
                pl.BlockSpec((tc, bt, G4), lambda i, t: (t, i, 0)),   # xproj (streamed)
                pl.BlockSpec((H, 8 * H), lambda i, t: (0, 0)),        # fused [W_hh0|W_ih1]
                pl.BlockSpec((H, G4), lambda i, t: (0, 0)),           # W_hh1
                pl.BlockSpec((1, G4), lambda i, t: (0, 0)),           # b1
                pl.BlockSpec((H, O), lambda i, t: (0, 0)),            # W_fc
                pl.BlockSpec((1, O), lambda i, t: (0, 0)),            # b_fc
            ],
            out_specs=pl.BlockSpec((bt, O), lambda i, t: (i, 0)),
            scratch_shapes=[
                pltpu.VMEM((4, bt, H), jnp.float32),   # h1, c1, h2, c2 carries
                pltpu.VMEM((bt, G4), jnp.float32),     # carried h1 @ W_hh0
            ],
        ),
        compiler_params=pltpu.CompilerParams(
            # Batch tiles are independent ("parallel" -> v7x megacore sharding);
            # the time axis carries the recurrence ("arbitrary").
            dimension_semantics=("parallel", "arbitrary"),
            vmem_limit_bytes=vmem_bytes,
        ),
    )(xproj, w01, whh1, b1, wfc, bfc)


def _reference_forward(x, params, hidden_dim=64):
    """Pure-JAX reference matching torch.nn.LSTM (batch_first) + Linear + Sigmoid."""
    H = hidden_dim
    B, T, _ = x.shape

    def cell(x_in, h, c, w_ih, w_hh, b_ih, b_hh):
        gates = x_in @ w_ih.T + b_ih + h @ w_hh.T + b_hh
        i = jax.nn.sigmoid(gates[:, 0 * H:1 * H])
        f = jax.nn.sigmoid(gates[:, 1 * H:2 * H])
        g = jnp.tanh(gates[:, 2 * H:3 * H])
        o = jax.nn.sigmoid(gates[:, 3 * H:4 * H])
        c = f * c + i * g
        h = o * jnp.tanh(c)
        return h, c

    h1 = c1 = h2 = c2 = jnp.zeros((B, H), jnp.float32)
    for t in range(T):
        h1, c1 = cell(x[:, t, :], h1, c1, params["w_ih0"], params["w_hh0"],
                      params["b_ih0"], params["b_hh0"])
        h2, c2 = cell(h1, h2, c2, params["w_ih1"], params["w_hh1"],
                      params["b_ih1"], params["b_hh1"])
    return jax.nn.sigmoid(h2 @ params["w_fc"].T + params["b_fc"])


def init_params(key, input_dim=3, hidden_dim=64, output_dim=3):
    """Deterministic init mirroring PyTorch LSTM/Linear default U(-1/sqrt(H), 1/sqrt(H))."""
    H = hidden_dim
    k = 1.0 / np.sqrt(H)
    keys = jax.random.split(key, 10)
    u = lambda kk, shape: jax.random.uniform(kk, shape, jnp.float32, -k, k)
    return {
        "w_ih0": u(keys[0], (4 * H, input_dim)),
        "w_hh0": u(keys[1], (4 * H, H)),
        "b_ih0": u(keys[2], (4 * H,)),
        "b_hh0": u(keys[3], (4 * H,)),
        "w_ih1": u(keys[4], (4 * H, H)),
        "w_hh1": u(keys[5], (4 * H, H)),
        "b_ih1": u(keys[6], (4 * H,)),
        "b_hh1": u(keys[7], (4 * H,)),
        "w_fc": u(keys[8], (output_dim, H)),
        "b_fc": u(keys[9], (output_dim,)),
    }


if __name__ == "__main__":
    INPUT_DIM, HIDDEN_DIM, OUTPUT_DIM = 3, 64, 3

    key = jax.random.PRNGKey(0)
    k_x, k_p, k_x2 = jax.random.split(key, 3)
    params = init_params(k_p, INPUT_DIM, HIDDEN_DIM, OUTPUT_DIM)

    # ---- 1) demo shape (B=2, T=8): exact-path f32 check, single grid step. ----
    x = jax.random.normal(k_x, (2, 8, INPUT_DIM), jnp.float32)
    ref = _reference_forward(x, params, hidden_dim=HIDDEN_DIM)
    out_f32 = jax.block_until_ready(
        risk_sequence_forward(x, params, hidden_dim=HIDDEN_DIM,
                              weight_dtype=jnp.float32))
    np.testing.assert_allclose(np.asarray(out_f32), np.asarray(ref),
                               rtol=1e-4, atol=2e-5)

    # ---- 2) bf16 weights + bf16 xproj (fast path on all generations). ----
    out_bf16 = jax.block_until_ready(
        risk_sequence_forward(x, params, hidden_dim=HIDDEN_DIM,
                              weight_dtype=jnp.bfloat16, xproj_dtype=jnp.bfloat16))
    np.testing.assert_allclose(np.asarray(out_bf16), np.asarray(ref),
                               rtol=5e-2, atol=2e-2)

    # ---- 3) exercise multi-chunk time axis, multiple batch tiles and batch padding:
    #         B=10 (padded edge tile), T=12, bt=8 -> grid=(2, 3) with carry scratch. ----
    x2 = jax.random.normal(k_x2, (10, 12, INPUT_DIM), jnp.float32)
    ref2 = _reference_forward(x2, params, hidden_dim=HIDDEN_DIM)
    out2 = jax.block_until_ready(
        risk_sequence_forward(x2, params, hidden_dim=HIDDEN_DIM,
                              weight_dtype=jnp.float32, batch_tile=8, time_chunk=4))
    np.testing.assert_allclose(np.asarray(out2), np.asarray(ref2),
                               rtol=1e-4, atol=2e-5)

    print("KERNEL_OK")
</pallas_src>

<mosaic_0001>
module attributes {stable_mosaic.version = 11 : i64} {
  func.func @_lstm_kernel(%arg0: i32, %arg1: i32, %arg2: memref<8x2x256xf32, #tpu.memory_space<vmem>>, %arg3: memref<64x512xf32, #tpu.memory_space<vmem>>, %arg4: memref<64x256xf32, #tpu.memory_space<vmem>>, %arg5: memref<1x256xf32, #tpu.memory_space<vmem>>, %arg6: memref<64x3xf32, #tpu.memory_space<vmem>>, %arg7: memref<1x3xf32, #tpu.memory_space<vmem>>, %arg8: memref<2x3xf32, #tpu.memory_space<vmem>>, %arg9: memref<4x2x64xf32, #tpu.memory_space<vmem>>, %arg10: memref<2x256xf32, #tpu.memory_space<vmem>>) attributes {dimension_semantics = [#tpu.dimension_semantics<parallel>, #tpu.dimension_semantics<arbitrary>], iteration_bounds = array<i64: 1, 1>, scalar_prefetch = 0 : i64, scratch_operands = 2 : i64, tpu.core_type = #tpu.core_type<tc>, window_params = [{transform_indices = @transform_0, window_bounds = array<i64: 8, 2, 256>}, {pipeline_mode = #tpu.pipeline_mode<synchronous>, transform_indices = @transform_1, window_bounds = array<i64: 64, 512>}, {pipeline_mode = #tpu.pipeline_mode<synchronous>, transform_indices = @transform_2, window_bounds = array<i64: 64, 256>}, {pipeline_mode = #tpu.pipeline_mode<synchronous>, transform_indices = @transform_3, window_bounds = array<i64: 1, 256>}, {pipeline_mode = #tpu.pipeline_mode<synchronous>, transform_indices = @transform_4, window_bounds = array<i64: 64, 3>}, {pipeline_mode = #tpu.pipeline_mode<synchronous>, transform_indices = @transform_5, window_bounds = array<i64: 1, 3>}, {transform_indices = @transform_6, window_bounds = array<i64: 2, 3>}]} {
    %c0_i32 = arith.constant 0 : i32
    %0 = arith.cmpi eq, %arg1, %c0_i32 : i32
    %1 = arith.extui %0 : i1 to i32
    %c0_i32_0 = arith.constant 0 : i32
    %2 = arith.cmpi ne, %1, %c0_i32_0 : i32
    scf.if %2 {
      %cst_113 = arith.constant 0.000000e+00 : f32
      %407 = vector.broadcast %cst_113 : f32 to vector<4x2x64xf32>
      %c0_114 = arith.constant 0 : index
      %c0_115 = arith.constant 0 : index
      %c0_116 = arith.constant 0 : index
      %408 = vector.load %arg9[%c0_114, %c0_115, %c0_116] : memref<4x2x64xf32, #tpu.memory_space<vmem>>, vector<4x2x64xf32>
      tpu.vector_store %arg9[%c0_114, %c0_115, %c0_116], %407 {strides = array<i32>} : memref<4x2x64xf32, #tpu.memory_space<vmem>>, vector<4x2x64xf32>,
      %cst_117 = arith.constant 0.000000e+00 : f32
      %409 = vector.broadcast %cst_117 : f32 to vector<2x256xf32>
      %c0_118 = arith.constant 0 : index
      %c0_119 = arith.constant 0 : index
      %410 = vector.load %arg10[%c0_118, %c0_119] : memref<2x256xf32, #tpu.memory_space<vmem>>, vector<2x256xf32>
      tpu.vector_store %arg10[%c0_118, %c0_119], %409 {strides = array<i32>} : memref<2x256xf32, #tpu.memory_space<vmem>>, vector<2x256xf32>,
    } else {
    }
    %c0 = arith.constant 0 : index
    %c0_1 = arith.constant 0 : index
    %3 = vector.load %arg3[%c0, %c0_1] : memref<64x512xf32, #tpu.memory_space<vmem>>, vector<64x512xf32>
    %c0_2 = arith.constant 0 : index
    %c0_3 = arith.constant 0 : index
    %4 = vector.load %arg4[%c0_2, %c0_3] : memref<64x256xf32, #tpu.memory_space<vmem>>, vector<64x256xf32>
    %c0_4 = arith.constant 0 : index
    %c0_5 = arith.constant 0 : index
    %5 = vector.load %arg5[%c0_4, %c0_5] : memref<1x256xf32, #tpu.memory_space<vmem>>, vector<1x256xf32>
    %c0_6 = arith.constant 0 : index
    %c0_7 = arith.constant 0 : index
    %c0_8 = arith.constant 0 : index
    %6 = vector.load %arg9[%c0_6, %c0_7, %c0_8] : memref<4x2x64xf32, #tpu.memory_space<vmem>>, vector<1x2x64xf32>
    %7 = vector.shape_cast %6 : vector<1x2x64xf32> to vector<2x64xf32>
    %c1 = arith.constant 1 : index
    %c0_9 = arith.constant 0 : index
    %c0_10 = arith.constant 0 : index
    %8 = vector.load %arg9[%c1, %c0_9, %c0_10] : memref<4x2x64xf32, #tpu.memory_space<vmem>>, vector<1x2x64xf32>
    %9 = vector.shape_cast %8 : vector<1x2x64xf32> to vector<2x64xf32>
    %c2 = arith.constant 2 : index
    %c0_11 = arith.constant 0 : index
    %c0_12 = arith.constant 0 : index
    %10 = vector.load %arg9[%c2, %c0_11, %c0_12] : memref<4x2x64xf32, #tpu.memory_space<vmem>>, vector<1x2x64xf32>
    %11 = vector.shape_cast %10 : vector<1x2x64xf32> to vector<2x64xf32>
    %c3 = arith.constant 3 : index
    %c0_13 = arith.constant 0 : index
    %c0_14 = arith.constant 0 : index
    %12 = vector.load %arg9[%c3, %c0_13, %c0_14] : memref<4x2x64xf32, #tpu.memory_space<vmem>>, vector<1x2x64xf32>
    %13 = vector.shape_cast %12 : vector<1x2x64xf32> to vector<2x64xf32>
    %c0_15 = arith.constant 0 : index
    %c0_16 = arith.constant 0 : index
    %14 = vector.load %arg10[%c0_15, %c0_16] : memref<2x256xf32, #tpu.memory_space<vmem>>, vector<2x256xf32>
    %c0_i32_17 = arith.constant 0 : i32
    %15 = arith.index_cast %c0_i32_17 : i32 to index
    %c0_18 = arith.constant 0 : index
    %c0_19 = arith.constant 0 : index
    %16 = vector.load %arg2[%15, %c0_18, %c0_19] : memref<8x2x256xf32, #tpu.memory_space<vmem>>, vector<1x2x256xf32>
    %17 = vector.shape_cast %16 : vector<1x2x256xf32> to vector<2x256xf32>
    %18 = arith.addf %17, %14 : vector<2x256xf32>
    %19 = arith.negf %18 : vector<2x256xf32>
    %20 = math.exp %19 : vector<2x256xf32>
    %cst = arith.constant 1.000000e+00 : f32
    %21 = vector.broadcast %cst : f32 to vector<2x256xf32>
    %22 = arith.addf %21, %20 : vector<2x256xf32>
    %23 = arith.divf %21, %22 : vector<2x256xf32>
    %24 = vector.extract_strided_slice %23 {offsets = [0, 0], sizes = [2, 64], strides = [1, 1]} : vector<2x256xf32> to vector<2x64xf32>
    %25 = vector.extract_strided_slice %23 {offsets = [0, 64], sizes = [2, 64], strides = [1, 1]} : vector<2x256xf32> to vector<2x64xf32>
    %26 = vector.extract_strided_slice %23 {offsets = [0, 128], sizes = [2, 64], strides = [1, 1]} : vector<2x256xf32> to vector<2x64xf32>
    %27 = vector.extract_strided_slice %23 {offsets = [0, 192], sizes = [2, 64], strides = [1, 1]} : vector<2x256xf32> to vector<2x64xf32>
    %cst_20 = arith.constant 2.000000e+00 : f32
    %28 = vector.broadcast %cst_20 : f32 to vector<2x64xf32>
    %29 = arith.mulf %28, %27 : vector<2x64xf32>
    %cst_21 = arith.constant 1.000000e+00 : f32
    %30 = vector.broadcast %cst_21 : f32 to vector<2x64xf32>
    %31 = arith.subf %29, %30 : vector<2x64xf32>
    %32 = arith.mulf %25, %9 : vector<2x64xf32>
    %33 = arith.mulf %24, %31 : vector<2x64xf32>
    %34 = arith.addf %32, %33 : vector<2x64xf32>
    %35 = math.tanh %34 : vector<2x64xf32>
    %36 = arith.mulf %26, %35 : vector<2x64xf32>
    %cst_22 = arith.constant dense<0.000000e+00> : vector<2x512xf32>
    %37 = tpu.matmul %36, %3, %cst_22 {dimension_numbers = #tpu.dot_dimension_numbers<[1], [0], [0], [1], [0, 0, 1, 1], [], []>} : vector<2x64xf32>, vector<64x512xf32>, vector<2x512xf32> -> vector<2x512xf32>
    %38 = vector.extract_strided_slice %37 {offsets = [0, 0], sizes = [2, 256], strides = [1, 1]} : vector<2x512xf32> to vector<2x256xf32>
    %39 = vector.extract_strided_slice %37 {offsets = [0, 256], sizes = [2, 256], strides = [1, 1]} : vector<2x512xf32> to vector<2x256xf32>
    %cst_23 = arith.constant dense<0.000000e+00> : vector<2x256xf32>
    %40 = tpu.matmul %11, %4, %cst_23 {dimension_numbers = #tpu.dot_dimension_numbers<[1], [0], [0], [1], [0, 0, 1, 1], [], []>} : vector<2x64xf32>, vector<64x256xf32>, vector<2x256xf32> -> vector<2x256xf32>
    %41 = arith.addf %39, %40 : vector<2x256xf32>
    %42 = vector.broadcast %5 : vector<1x256xf32> to vector<2x256xf32>
    %43 = arith.addf %41, %42 : vector<2x256xf32>
    %44 = arith.negf %43 : vector<2x256xf32>
    %45 = math.exp %44 : vector<2x256xf32>
    %cst_24 = arith.constant 1.000000e+00 : f32
    %46 = vector.broadcast %cst_24 : f32 to vector<2x256xf32>
    %47 = arith.addf %46, %45 : vector<2x256xf32>
    %48 = arith.divf %46, %47 : vector<2x256xf32>
    %49 = vector.extract_strided_slice %48 {offsets = [0, 0], sizes = [2, 64], strides = [1, 1]} : vector<2x256xf32> to vector<2x64xf32>
    %50 = vector.extract_strided_slice %48 {offsets = [0, 64], sizes = [2, 64], strides = [1, 1]} : vector<2x256xf32> to vector<2x64xf32>
    %51 = vector.extract_strided_slice %48 {offsets = [0, 128], sizes = [2, 64], strides = [1, 1]} : vector<2x256xf32> to vector<2x64xf32>
    %52 = vector.extract_strided_slice %48 {offsets = [0, 192], sizes = [2, 64], strides = [1, 1]} : vector<2x256xf32> to vector<2x64xf32>
    %cst_25 = arith.constant 2.000000e+00 : f32
    %53 = vector.broadcast %cst_25 : f32 to vector<2x64xf32>
    %54 = arith.mulf %53, %52 : vector<2x64xf32>
    %cst_26 = arith.constant 1.000000e+00 : f32
    %55 = vector.broadcast %cst_26 : f32 to vector<2x64xf32>
    %56 = arith.subf %54, %55 : vector<2x64xf32>
    %57 = arith.mulf %50, %13 : vector<2x64xf32>
    %58 = arith.mulf %49, %56 : vector<2x64xf32>
    %59 = arith.addf %57, %58 : vector<2x64xf32>
    %60 = math.tanh %59 : vector<2x64xf32>
    %61 = arith.mulf %51, %60 : vector<2x64xf32>
    %c1_i32 = arith.constant 1 : i32
    %62 = arith.index_cast %c1_i32 : i32 to index
    %c0_27 = arith.constant 0 : index
    %c0_28 = arith.constant 0 : index
    %63 = vector.load %arg2[%62, %c0_27, %c0_28] : memref<8x2x256xf32, #tpu.memory_space<vmem>>, vector<1x2x256xf32>
    %64 = vector.shape_cast %63 : vector<1x2x256xf32> to vector<2x256xf32>
    %65 = arith.addf %64, %38 : vector<2x256xf32>
    %66 = arith.negf %65 : vector<2x256xf32>
    %67 = math.exp %66 : vector<2x256xf32>
    %cst_29 = arith.constant 1.000000e+00 : f32
    %68 = vector.broadcast %cst_29 : f32 to vector<2x256xf32>
    %69 = arith.addf %68, %67 : vector<2x256xf32>
    %70 = arith.divf %68, %69 : vector<2x256xf32>
    %71 = vector.extract_strided_slice %70 {offsets = [0, 0], sizes = [2, 64], strides = [1, 1]} : vector<2x256xf32> to vector<2x64xf32>
    %72 = vector.extract_strided_slice %70 {offsets = [0, 64], sizes = [2, 64], strides = [1, 1]} : vector<2x256xf32> to vector<2x64xf32>
    %73 = vector.extract_strided_slice %70 {offsets = [0, 128], sizes = [2, 64], strides = [1, 1]} : vector<2x256xf32> to vector<2x64xf32>
    %74 = vector.extract_strided_slice %70 {offsets = [0, 192], sizes = [2, 64], strides = [1, 1]} : vector<2x256xf32> to vector<2x64xf32>
    %cst_30 = arith.constant 2.000000e+00 : f32
    %75 = vector.broadcast %cst_30 : f32 to vector<2x64xf32>
    %76 = arith.mulf %75, %74 : vector<2x64xf32>
    %cst_31 = arith.constant 1.000000e+00 : f32
    %77 = vector.broadcast %cst_31 : f32 to vector<2x64xf32>
    %78 = arith.subf %76, %77 : vector<2x64xf32>
    %79 = arith.mulf %72, %34 : vector<2x64xf32>
    %80 = arith.mulf %71, %78 : vector<2x64xf32>
    %81 = arith.addf %79, %80 : vector<2x64xf32>
    %82 = math.tanh %81 : vector<2x64xf32>
    %83 = arith.mulf %73, %82 : vector<2x64xf32>
    %cst_32 = arith.constant dense<0.000000e+00> : vector<2x512xf32>
    %84 = tpu.matmul %83, %3, %cst_32 {dimension_numbers = #tpu.dot_dimension_numbers<[1], [0], [0], [1], [0, 0, 1, 1], [], []>} : vector<2x64xf32>, vector<64x512xf32>, vector<2x512xf32> -> vector<2x512xf32>
    %85 = vector.extract_strided_slice %84 {offsets = [0, 0], sizes = [2, 256], strides = [1, 1]} : vector<2x512xf32> to vector<2x256xf32>
    %86 = vector.extract_strided_slice %84 {offsets = [0, 256], sizes = [2, 256], strides = [1, 1]} : vector<2x512xf32> to vector<2x256xf32>
    %cst_33 = arith.constant dense<0.000000e+00> : vector<2x256xf32>
    %87 = tpu.matmul %61, %4, %cst_33 {dimension_numbers = #tpu.dot_dimension_numbers<[1], [0], [0], [1], [0, 0, 1, 1], [], []>} : vector<2x64xf32>, vector<64x256xf32>, vector<2x256xf32> -> vector<2x256xf32>
    %88 = arith.addf %86, %87 : vector<2x256xf32>
    %89 = vector.broadcast %5 : vector<1x256xf32> to vector<2x256xf32>
    %90 = arith.addf %88, %89 : vector<2x256xf32>
    %91 = arith.negf %90 : vector<2x256xf32>
    %92 = math.exp %91 : vector<2x256xf32>
    %cst_34 = arith.constant 1.000000e+00 : f32
    %93 = vector.broadcast %cst_34 : f32 to vector<2x256xf32>
    %94 = arith.addf %93, %92 : vector<2x256xf32>
    %95 = arith.divf %93, %94 : vector<2x256xf32>
    %96 = vector.extract_strided_slice %95 {offsets = [0, 0], sizes = [2, 64], strides = [1, 1]} : vector<2x256xf32> to vector<2x64xf32>
    %97 = vector.extract_strided_slice %95 {offsets = [0, 64], sizes = [2, 64], strides = [1, 1]} : vector<2x256xf32> to vector<2x64xf32>
    %98 = vector.extract_strided_slice %95 {offsets = [0, 128], sizes = [2, 64], strides = [1, 1]} : vector<2x256xf32> to vector<2x64xf32>
    %99 = vector.extract_strided_slice %95 {offsets = [0, 192], sizes = [2, 64], strides = [1, 1]} : vector<2x256xf32> to vector<2x64xf32>
    %cst_35 = arith.constant 2.000000e+00 : f32
    %100 = vector.broadcast %cst_35 : f32 to vector<2x64xf32>
    %101 = arith.mulf %100, %99 : vector<2x64xf32>
    %cst_36 = arith.constant 1.000000e+00 : f32
    %102 = vector.broadcast %cst_36 : f32 to vector<2x64xf32>
    %103 = arith.subf %101, %102 : vector<2x64xf32>
    %104 = arith.mulf %97, %59 : vector<2x64xf32>
    %105 = arith.mulf %96, %103 : vector<2x64xf32>
    %106 = arith.addf %104, %105 : vector<2x64xf32>
    %107 = math.tanh %106 : vector<2x64xf32>
    %108 = arith.mulf %98, %107 : vector<2x64xf32>
    %c2_i32 = arith.constant 2 : i32
    %109 = arith.index_cast %c2_i32 : i32 to index
    %c0_37 = arith.constant 0 : index
    %c0_38 = arith.constant 0 : index
    %110 = vector.load %arg2[%109, %c0_37, %c0_38] : memref<8x2x256xf32, #tpu.memory_space<vmem>>, vector<1x2x256xf32>
    %111 = vector.shape_cast %110 : vector<1x2x256xf32> to vector<2x256xf32>
    %112 = arith.addf %111, %85 : vector<2x256xf32>
    %113 = arith.negf %112 : vector<2x256xf32>
    %114 = math.exp %113 : vector<2x256xf32>
    %cst_39 = arith.constant 1.000000e+00 : f32
    %115 = vector.broadcast %cst_39 : f32 to vector<2x256xf32>
    %116 = arith.addf %115, %114 : vector<2x256xf32>
    %117 = arith.divf %115, %116 : vector<2x256xf32>
    %118 = vector.extract_strided_slice %117 {offsets = [0, 0], sizes = [2, 64], strides = [1, 1]} : vector<2x256xf32> to vector<2x64xf32>
    %119 = vector.extract_strided_slice %117 {offsets = [0, 64], sizes = [2, 64], strides = [1, 1]} : vector<2x256xf32> to vector<2x64xf32>
    %120 = vector.extract_strided_slice %117 {offsets = [0, 128], sizes = [2, 64], strides = [1, 1]} : vector<2x256xf32> to vector<2x64xf32>
    %121 = vector.extract_strided_slice %117 {offsets = [0, 192], sizes = [2, 64], strides = [1, 1]} : vector<2x256xf32> to vector<2x64xf32>
    %cst_40 = arith.constant 2.000000e+00 : f32
    %122 = vector.broadcast %cst_40 : f32 to vector<2x64xf32>
    %123 = arith.mulf %122, %121 : vector<2x64xf32>
    %cst_41 = arith.constant 1.000000e+00 : f32
    %124 = vector.broadcast %cst_41 : f32 to vector<2x64xf32>
    %125 = arith.subf %123, %124 : vector<2x64xf32>
    %126 = arith.mulf %119, %81 : vector<2x64xf32>
    %127 = arith.mulf %118, %125 : vector<2x64xf32>
    %128 = arith.addf %126, %127 : vector<2x64xf32>
    %129 = math.tanh %128 : vector<2x64xf32>
    %130 = arith.mulf %120, %129 : vector<2x64xf32>
    %cst_42 = arith.constant dense<0.000000e+00> : vector<2x512xf32>
    %131 = tpu.matmul %130, %3, %cst_42 {dimension_numbers = #tpu.dot_dimension_numbers<[1], [0], [0], [1], [0, 0, 1, 1], [], []>} : vector<2x64xf32>, vector<64x512xf32>, vector<2x512xf32> -> vector<2x512xf32>
    %132 = vector.extract_strided_slice %131 {offsets = [0, 0], sizes = [2, 256], strides = [1, 1]} : vector<2x512xf32> to vector<2x256xf32>
    %133 = vector.extract_strided_slice %131 {offsets = [0, 256], sizes = [2, 256], strides = [1, 1]} : vector<2x512xf32> to vector<2x256xf32>
    %cst_43 = arith.constant dense<0.000000e+00> : vector<2x256xf32>
    %134 = tpu.matmul %108, %4, %cst_43 {dimension_numbers = #tpu.dot_dimension_numbers<[1], [0], [0], [1], [0, 0, 1, 1], [], []>} : vector<2x64xf32>, vector<64x256xf32>, vector<2x256xf32> -> vector<2x256xf32>
    %135 = arith.addf %133, %134 : vector<2x256xf32>
    %136 = vector.broadcast %5 : vector<1x256xf32> to vector<2x256xf32>
    %137 = arith.addf %135, %136 : vector<2x256xf32>
    %138 = arith.negf %137 : vector<2x256xf32>
    %139 = math.exp %138 : vector<2x256xf32>
    %cst_44 = arith.constant 1.000000e+00 : f32
    %140 = vector.broadcast %cst_44 : f32 to vector<2x256xf32>
    %141 = arith.addf %140, %139 : vector<2x256xf32>
    %142 = arith.divf %140, %141 : vector<2x256xf32>
    %143 = vector.extract_strided_slice %142 {offsets = [0, 0], sizes = [2, 64], strides = [1, 1]} : vector<2x256xf32> to vector<2x64xf32>
    %144 = vector.extract_strided_slice %142 {offsets = [0, 64], sizes = [2, 64], strides = [1, 1]} : vector<2x256xf32> to vector<2x64xf32>
    %145 = vector.extract_strided_slice %142 {offsets = [0, 128], sizes = [2, 64], strides = [1, 1]} : vector<2x256xf32> to vector<2x64xf32>
    %146 = vector.extract_strided_slice %142 {offsets = [0, 192], sizes = [2, 64], strides = [1, 1]} : vector<2x256xf32> to vector<2x64xf32>
    %cst_45 = arith.constant 2.000000e+00 : f32
    %147 = vector.broadcast %cst_45 : f32 to vector<2x64xf32>
    %148 = arith.mulf %147, %146 : vector<2x64xf32>
    %cst_46 = arith.constant 1.000000e+00 : f32
    %149 = vector.broadcast %cst_46 : f32 to vector<2x64xf32>
    %150 = arith.subf %148, %149 : vector<2x64xf32>
    %151 = arith.mulf %144, %106 : vector<2x64xf32>
    %152 = arith.mulf %143, %150 : vector<2x64xf32>
    %153 = arith.addf %151, %152 : vector<2x64xf32>
    %154 = math.tanh %153 : vector<2x64xf32>
    %155 = arith.mulf %145, %154 : vector<2x64xf32>
    %c3_i32 = arith.constant 3 : i32
    %156 = arith.index_cast %c3_i32 : i32 to index
    %c0_47 = arith.constant 0 : index
    %c0_48 = arith.constant 0 : index
    %157 = vector.load %arg2[%156, %c0_47, %c0_48] : memref<8x2x256xf32, #tpu.memory_space<vmem>>, vector<1x2x256xf32>
    %158 = vector.shape_cast %157 : vector<1x2x256xf32> to vector<2x256xf32>
    %159 = arith.addf %158, %132 : vector<2x256xf32>
    %160 = arith.negf %159 : vector<2x256xf32>
    %161 = math.exp %160 : vector<2x256xf32>
    %cst_49 = arith.constant 1.000000e+00 : f32
    %162 = vector.broadcast %cst_49 : f32 to vector<2x256xf32>
    %163 = arith.addf %162, %161 : vector<2x256xf32>
    %164 = arith.divf %162, %163 : vector<2x256xf32>
    %165 = vector.extract_strided_slice %164 {offsets = [0, 0], sizes = [2, 64], strides = [1, 1]} : vector<2x256xf32> to vector<2x64xf32>
    %166 = vector.extract_strided_slice %164 {offsets = [0, 64], sizes = [2, 64], strides = [1, 1]} : vector<2x256xf32> to vector<2x64xf32>
    %167 = vector.extract_strided_slice %164 {offsets = [0, 128], sizes = [2, 64], strides = [1, 1]} : vector<2x256xf32> to vector<2x64xf32>
    %168 = vector.extract_strided_slice %164 {offsets = [0, 192], sizes = [2, 64], strides = [1, 1]} : vector<2x256xf32> to vector<2x64xf32>
    %cst_50 = arith.constant 2.000000e+00 : f32
    %169 = vector.broadcast %cst_50 : f32 to vector<2x64xf32>
    %170 = arith.mulf %169, %168 : vector<2x64xf32>
    %cst_51 = arith.constant 1.000000e+00 : f32
    %171 = vector.broadcast %cst_51 : f32 to vector<2x64xf32>
    %172 = arith.subf %170, %171 : vector<2x64xf32>
    %173 = arith.mulf %166, %128 : vector<2x64xf32>
    %174 = arith.mulf %165, %172 : vector<2x64xf32>
    %175 = arith.addf %173, %174 : vector<2x64xf32>
    %176 = math.tanh %175 : vector<2x64xf32>
    %177 = arith.mulf %167, %176 : vector<2x64xf32>
    %cst_52 = arith.constant dense<0.000000e+00> : vector<2x512xf32>
    %178 = tpu.matmul %177, %3, %cst_52 {dimension_numbers = #tpu.dot_dimension_numbers<[1], [0], [0], [1], [0, 0, 1, 1], [], []>} : vector<2x64xf32>, vector<64x512xf32>, vector<2x512xf32> -> vector<2x512xf32>
    %179 = vector.extract_strided_slice %178 {offsets = [0, 0], sizes = [2, 256], strides = [1, 1]} : vector<2x512xf32> to vector<2x256xf32>
    %180 = vector.extract_strided_slice %178 {offsets = [0, 256], sizes = [2, 256], strides = [1, 1]} : vector<2x512xf32> to vector<2x256xf32>
    %cst_53 = arith.constant dense<0.000000e+00> : vector<2x256xf32>
    %181 = tpu.matmul %155, %4, %cst_53 {dimension_numbers = #tpu.dot_dimension_numbers<[1], [0], [0], [1], [0, 0, 1, 1], [], []>} : vector<2x64xf32>, vector<64x256xf32>, vector<2x256xf32> -> vector<2x256xf32>
    %182 = arith.addf %180, %181 : vector<2x256xf32>
    %183 = vector.broadcast %5 : vector<1x256xf32> to vector<2x256xf32>
    %184 = arith.addf %182, %183 : vector<2x256xf32>
    %185 = arith.negf %184 : vector<2x256xf32>
    %186 = math.exp %185 : vector<2x256xf32>
    %cst_54 = arith.constant 1.000000e+00 : f32
    %187 = vector.broadcast %cst_54 : f32 to vector<2x256xf32>
    %188 = arith.addf %187, %186 : vector<2x256xf32>
    %189 = arith.divf %187, %188 : vector<2x256xf32>
    %190 = vector.extract_strided_slice %189 {offsets = [0, 0], sizes = [2, 64], strides = [1, 1]} : vector<2x256xf32> to vector<2x64xf32>
    %191 = vector.extract_strided_slice %189 {offsets = [0, 64], sizes = [2, 64], strides = [1, 1]} : vector<2x256xf32> to vector<2x64xf32>
    %192 = vector.extract_strided_slice %189 {offsets = [0, 128], sizes = [2, 64], strides = [1, 1]} : vector<2x256xf32> to vector<2x64xf32>
    %193 = vector.extract_strided_slice %189 {offsets = [0, 192], sizes = [2, 64], strides = [1, 1]} : vector<2x256xf32> to vector<2x64xf32>
    %cst_55 = arith.constant 2.000000e+00 : f32
    %194 = vector.broadcast %cst_55 : f32 to vector<2x64xf32>
    %195 = arith.mulf %194, %193 : vector<2x64xf32>
    %cst_56 = arith.constant 1.000000e+00 : f32
    %196 = vector.broadcast %cst_56 : f32 to vector<2x64xf32>
    %197 = arith.subf %195, %196 : vector<2x64xf32>
    %198 = arith.mulf %191, %153 : vector<2x64xf32>
    %199 = arith.mulf %190, %197 : vector<2x64xf32>
    %200 = arith.addf %198, %199 : vector<2x64xf32>
    %201 = math.tanh %200 : vector<2x64xf32>
    %202 = arith.mulf %192, %201 : vector<2x64xf32>
    %c4_i32 = arith.constant 4 : i32
    %203 = arith.index_cast %c4_i32 : i32 to index
    %c0_57 = arith.constant 0 : index
    %c0_58 = arith.constant 0 : index
    %204 = vector.load %arg2[%203, %c0_57, %c0_58] : memref<8x2x256xf32, #tpu.memory_space<vmem>>, vector<1x2x256xf32>
    %205 = vector.shape_cast %204 : vector<1x2x256xf32> to vector<2x256xf32>
    %206 = arith.addf %205, %179 : vector<2x256xf32>
    %207 = arith.negf %206 : vector<2x256xf32>
    %208 = math.exp %207 : vector<2x256xf32>
    %cst_59 = arith.constant 1.000000e+00 : f32
    %209 = vector.broadcast %cst_59 : f32 to vector<2x256xf32>
    %210 = arith.addf %209, %208 : vector<2x256xf32>
    %211 = arith.divf %209, %210 : vector<2x256xf32>
    %212 = vector.extract_strided_slice %211 {offsets = [0, 0], sizes = [2, 64], strides = [1, 1]} : vector<2x256xf32> to vector<2x64xf32>
    %213 = vector.extract_strided_slice %211 {offsets = [0, 64], sizes = [2, 64], strides = [1, 1]} : vector<2x256xf32> to vector<2x64xf32>
    %214 = vector.extract_strided_slice %211 {offsets = [0, 128], sizes = [2, 64], strides = [1, 1]} : vector<2x256xf32> to vector<2x64xf32>
    %215 = vector.extract_strided_slice %211 {offsets = [0, 192], sizes = [2, 64], strides = [1, 1]} : vector<2x256xf32> to vector<2x64xf32>
    %cst_60 = arith.constant 2.000000e+00 : f32
    %216 = vector.broadcast %cst_60 : f32 to vector<2x64xf32>
    %217 = arith.mulf %216, %215 : vector<2x64xf32>
    %cst_61 = arith.constant 1.000000e+00 : f32
    %218 = vector.broadcast %cst_61 : f32 to vector<2x64xf32>
    %219 = arith.subf %217, %218 : vector<2x64xf32>
    %220 = arith.mulf %213, %175 : vector<2x64xf32>
    %221 = arith.mulf %212, %219 : vector<2x64xf32>
    %222 = arith.addf %220, %221 : vector<2x64xf32>
    %223 = math.tanh %222 : vector<2x64xf32>
    %224 = arith.mulf %214, %223 : vector<2x64xf32>
    %cst_62 = arith.constant dense<0.000000e+00> : vector<2x512xf32>
    %225 = tpu.matmul %224, %3, %cst_62 {dimension_numbers = #tpu.dot_dimension_numbers<[1], [0], [0], [1], [0, 0, 1, 1], [], []>} : vector<2x64xf32>, vector<64x512xf32>, vector<2x512xf32> -> vector<2x512xf32>
    %226 = vector.extract_strided_slice %225 {offsets = [0, 0], sizes = [2, 256], strides = [1, 1]} : vector<2x512xf32> to vector<2x256xf32>
    %227 = vector.extract_strided_slice %225 {offsets = [0, 256], sizes = [2, 256], strides = [1, 1]} : vector<2x512xf32> to vector<2x256xf32>
    %cst_63 = arith.constant dense<0.000000e+00> : vector<2x256xf32>
    %228 = tpu.matmul %202, %4, %cst_63 {dimension_numbers = #tpu.dot_dimension_numbers<[1], [0], [0], [1], [0, 0, 1, 1], [], []>} : vector<2x64xf32>, vector<64x256xf32>, vector<2x256xf32> -> vector<2x256xf32>
    %229 = arith.addf %227, %228 : vector<2x256xf32>
    %230 = vector.broadcast %5 : vector<1x256xf32> to vector<2x256xf32>
    %231 = arith.addf %229, %230 : vector<2x256xf32>
    %232 = arith.negf %231 : vector<2x256xf32>
    %233 = math.exp %232 : vector<2x256xf32>
    %cst_64 = arith.constant 1.000000e+00 : f32
    %234 = vector.broadcast %cst_64 : f32 to vector<2x256xf32>
    %235 = arith.addf %234, %233 : vector<2x256xf32>
    %236 = arith.divf %234, %235 : vector<2x256xf32>
    %237 = vector.extract_strided_slice %236 {offsets = [0, 0], sizes = [2, 64], strides = [1, 1]} : vector<2x256xf32> to vector<2x64xf32>
    %238 = vector.extract_strided_slice %236 {offsets = [0, 64], sizes = [2, 64], strides = [1, 1]} : vector<2x256xf32> to vector<2x64xf32>
    %239 = vector.extract_strided_slice %236 {offsets = [0, 128], sizes = [2, 64], strides = [1, 1]} : vector<2x256xf32> to vector<2x64xf32>
    %240 = vector.extract_strided_slice %236 {offsets = [0, 192], sizes = [2, 64], strides = [1, 1]} : vector<2x256xf32> to vector<2x64xf32>
    %cst_65 = arith.constant 2.000000e+00 : f32
    %241 = vector.broadcast %cst_65 : f32 to vector<2x64xf32>
    %242 = arith.mulf %241, %240 : vector<2x64xf32>
    %cst_66 = arith.constant 1.000000e+00 : f32
    %243 = vector.broadcast %cst_66 : f32 to vector<2x64xf32>
    %244 = arith.subf %242, %243 : vector<2x64xf32>
    %245 = arith.mulf %238, %200 : vector<2x64xf32>
    %246 = arith.mulf %237, %244 : vector<2x64xf32>
    %247 = arith.addf %245, %246 : vector<2x64xf32>
    %248 = math.tanh %247 : vector<2x64xf32>
    %249 = arith.mulf %239, %248 : vector<2x64xf32>
    %c5_i32 = arith.constant 5 : i32
    %250 = arith.index_cast %c5_i32 : i32 to index
    %c0_67 = arith.constant 0 : index
    %c0_68 = arith.constant 0 : index
    %251 = vector.load %arg2[%250, %c0_67, %c0_68] : memref<8x2x256xf32, #tpu.memory_space<vmem>>, vector<1x2x256xf32>
    %252 = vector.shape_cast %251 : vector<1x2x256xf32> to vector<2x256xf32>
    %253 = arith.addf %252, %226 : vector<2x256xf32>
    %254 = arith.negf %253 : vector<2x256xf32>
    %255 = math.exp %254 : vector<2x256xf32>
    %cst_69 = arith.constant 1.000000e+00 : f32
    %256 = vector.broadcast %cst_69 : f32 to vector<2x256xf32>
    %257 = arith.addf %256, %255 : vector<2x256xf32>
    %258 = arith.divf %256, %257 : vector<2x256xf32>
    %259 = vector.extract_strided_slice %258 {offsets = [0, 0], sizes = [2, 64], strides = [1, 1]} : vector<2x256xf32> to vector<2x64xf32>
    %260 = vector.extract_strided_slice %258 {offsets = [0, 64], sizes = [2, 64], strides = [1, 1]} : vector<2x256xf32> to vector<2x64xf32>
    %261 = vector.extract_strided_slice %258 {offsets = [0, 128], sizes = [2, 64], strides = [1, 1]} : vector<2x256xf32> to vector<2x64xf32>
    %262 = vector.extract_strided_slice %258 {offsets = [0, 192], sizes = [2, 64], strides = [1, 1]} : vector<2x256xf32> to vector<2x64xf32>
    %cst_70 = arith.constant 2.000000e+00 : f32
    %263 = vector.broadcast %cst_70 : f32 to vector<2x64xf32>
    %264 = arith.mulf %263, %262 : vector<2x64xf32>
    %cst_71 = arith.constant 1.000000e+00 : f32
    %265 = vector.broadcast %cst_71 : f32 to vector<2x64xf32>
    %266 = arith.subf %264, %265 : vector<2x64xf32>
    %267 = arith.mulf %260, %222 : vector<2x64xf32>
    %268 = arith.mulf %259, %266 : vector<2x64xf32>
    %269 = arith.addf %267, %268 : vector<2x64xf32>
    %270 = math.tanh %269 : vector<2x64xf32>
    %271 = arith.mulf %261, %270 : vector<2x64xf32>
    %cst_72 = arith.constant dense<0.000000e+00> : vector<2x512xf32>
    %272 = tpu.matmul %271, %3, %cst_72 {dimension_numbers = #tpu.dot_dimension_numbers<[1], [0], [0], [1], [0, 0, 1, 1], [], []>} : vector<2x64xf32>, vector<64x512xf32>, vector<2x512xf32> -> vector<2x512xf32>
    %273 = vector.extract_strided_slice %272 {offsets = [0, 0], sizes = [2, 256], strides = [1, 1]} : vector<2x512xf32> to vector<2x256xf32>
    %274 = vector.extract_strided_slice %272 {offsets = [0, 256], sizes = [2, 256], strides = [1, 1]} : vector<2x512xf32> to vector<2x256xf32>
    %cst_73 = arith.constant dense<0.000000e+00> : vector<2x256xf32>
    %275 = tpu.matmul %249, %4, %cst_73 {dimension_numbers = #tpu.dot_dimension_numbers<[1], [0], [0], [1], [0, 0, 1, 1], [], []>} : vector<2x64xf32>, vector<64x256xf32>, vector<2x256xf32> -> vector<2x256xf32>
    %276 = arith.addf %274, %275 : vector<2x256xf32>
    %277 = vector.broadcast %5 : vector<1x256xf32> to vector<2x256xf32>
    %278 = arith.addf %276, %277 : vector<2x256xf32>
    %279 = arith.negf %278 : vector<2x256xf32>
    %280 = math.exp %279 : vector<2x256xf32>
    %cst_74 = arith.constant 1.000000e+00 : f32
    %281 = vector.broadcast %cst_74 : f32 to vector<2x256xf32>
    %282 = arith.addf %281, %280 : vector<2x256xf32>
    %283 = arith.divf %281, %282 : vector<2x256xf32>
    %284 = vector.extract_strided_slice %283 {offsets = [0, 0], sizes = [2, 64], strides = [1, 1]} : vector<2x256xf32> to vector<2x64xf32>
    %285 = vector.extract_strided_slice %283 {offsets = [0, 64], sizes = [2, 64], strides = [1, 1]} : vector<2x256xf32> to vector<2x64xf32>
    %286 = vector.extract_strided_slice %283 {offsets = [0, 128], sizes = [2, 64], strides = [1, 1]} : vector<2x256xf32> to vector<2x64xf32>
    %287 = vector.extract_strided_slice %283 {offsets = [0, 192], sizes = [2, 64], strides = [1, 1]} : vector<2x256xf32> to vector<2x64xf32>
    %cst_75 = arith.constant 2.000000e+00 : f32
    %288 = vector.broadcast %cst_75 : f32 to vector<2x64xf32>
    %289 = arith.mulf %288, %287 : vector<2x64xf32>
    %cst_76 = arith.constant 1.000000e+00 : f32
    %290 = vector.broadcast %cst_76 : f32 to vector<2x64xf32>
    %291 = arith.subf %289, %290 : vector<2x64xf32>
    %292 = arith.mulf %285, %247 : vector<2x64xf32>
    %293 = arith.mulf %284, %291 : vector<2x64xf32>
    %294 = arith.addf %292, %293 : vector<2x64xf32>
    %295 = math.tanh %294 : vector<2x64xf32>
    %296 = arith.mulf %286, %295 : vector<2x64xf32>
    %c6_i32 = arith.constant 6 : i32
    %297 = arith.index_cast %c6_i32 : i32 to index
    %c0_77 = arith.constant 0 : index
    %c0_78 = arith.constant 0 : index
    %298 = vector.load %arg2[%297, %c0_77, %c0_78] : memref<8x2x256xf32, #tpu.memory_space<vmem>>, vector<1x2x256xf32>
    %299 = vector.shape_cast %298 : vector<1x2x256xf32> to vector<2x256xf32>
    %300 = arith.addf %299, %273 : vector<2x256xf32>
    %301 = arith.negf %300 : vector<2x256xf32>
    %302 = math.exp %301 : vector<2x256xf32>
    %cst_79 = arith.constant 1.000000e+00 : f32
    %303 = vector.broadcast %cst_79 : f32 to vector<2x256xf32>
    %304 = arith.addf %303, %302 : vector<2x256xf32>
    %305 = arith.divf %303, %304 : vector<2x256xf32>
    %306 = vector.extract_strided_slice %305 {offsets = [0, 0], sizes = [2, 64], strides = [1, 1]} : vector<2x256xf32> to vector<2x64xf32>
    %307 = vector.extract_strided_slice %305 {offsets = [0, 64], sizes = [2, 64], strides = [1, 1]} : vector<2x256xf32> to vector<2x64xf32>
    %308 = vector.extract_strided_slice %305 {offsets = [0, 128], sizes = [2, 64], strides = [1, 1]} : vector<2x256xf32> to vector<2x64xf32>
    %309 = vector.extract_strided_slice %305 {offsets = [0, 192], sizes = [2, 64], strides = [1, 1]} : vector<2x256xf32> to vector<2x64xf32>
    %cst_80 = arith.constant 2.000000e+00 : f32
    %310 = vector.broadcast %cst_80 : f32 to vector<2x64xf32>
    %311 = arith.mulf %310, %309 : vector<2x64xf32>
    %cst_81 = arith.constant 1.000000e+00 : f32
    %312 = vector.broadcast %cst_81 : f32 to vector<2x64xf32>
    %313 = arith.subf %311, %312 : vector<2x64xf32>
    %314 = arith.mulf %307, %269 : vector<2x64xf32>
    %315 = arith.mulf %306, %313 : vector<2x64xf32>
    %316 = arith.addf %314, %315 : vector<2x64xf32>
    %317 = math.tanh %316 : vector<2x64xf32>
    %318 = arith.mulf %308, %317 : vector<2x64xf32>
    %cst_82 = arith.constant dense<0.000000e+00> : vector<2x512xf32>
    %319 = tpu.matmul %318, %3, %cst_82 {dimension_numbers = #tpu.dot_dimension_numbers<[1], [0], [0], [1], [0, 0, 1, 1], [], []>} : vector<2x64xf32>, vector<64x512xf32>, vector<2x512xf32> -> vector<2x512xf32>
    %320 = vector.extract_strided_slice %319 {offsets = [0, 0], sizes = [2, 256], strides = [1, 1]} : vector<2x512xf32> to vector<2x256xf32>
    %321 = vector.extract_strided_slice %319 {offsets = [0, 256], sizes = [2, 256], strides = [1, 1]} : vector<2x512xf32> to vector<2x256xf32>
    %cst_83 = arith.constant dense<0.000000e+00> : vector<2x256xf32>
    %322 = tpu.matmul %296, %4, %cst_83 {dimension_numbers = #tpu.dot_dimension_numbers<[1], [0], [0], [1], [0, 0, 1, 1], [], []>} : vector<2x64xf32>, vector<64x256xf32>, vector<2x256xf32> -> vector<2x256xf32>
    %323 = arith.addf %321, %322 : vector<2x256xf32>
    %324 = vector.broadcast %5 : vector<1x256xf32> to vector<2x256xf32>
    %325 = arith.addf %323, %324 : vector<2x256xf32>
    %326 = arith.negf %325 : vector<2x256xf32>
    %327 = math.exp %326 : vector<2x256xf32>
    %cst_84 = arith.constant 1.000000e+00 : f32
    %328 = vector.broadcast %cst_84 : f32 to vector<2x256xf32>
    %329 = arith.addf %328, %327 : vector<2x256xf32>
    %330 = arith.divf %328, %329 : vector<2x256xf32>
    %331 = vector.extract_strided_slice %330 {offsets = [0, 0], sizes = [2, 64], strides = [1, 1]} : vector<2x256xf32> to vector<2x64xf32>
    %332 = vector.extract_strided_slice %330 {offsets = [0, 64], sizes = [2, 64], strides = [1, 1]} : vector<2x256xf32> to vector<2x64xf32>
    %333 = vector.extract_strided_slice %330 {offsets = [0, 128], sizes = [2, 64], strides = [1, 1]} : vector<2x256xf32> to vector<2x64xf32>
    %334 = vector.extract_strided_slice %330 {offsets = [0, 192], sizes = [2, 64], strides = [1, 1]} : vector<2x256xf32> to vector<2x64xf32>
    %cst_85 = arith.constant 2.000000e+00 : f32
    %335 = vector.broadcast %cst_85 : f32 to vector<2x64xf32>
    %336 = arith.mulf %335, %334 : vector<2x64xf32>
    %cst_86 = arith.constant 1.000000e+00 : f32
    %337 = vector.broadcast %cst_86 : f32 to vector<2x64xf32>
    %338 = arith.subf %336, %337 : vector<2x64xf32>
    %339 = arith.mulf %332, %294 : vector<2x64xf32>
    %340 = arith.mulf %331, %338 : vector<2x64xf32>
    %341 = arith.addf %339, %340 : vector<2x64xf32>
    %342 = math.tanh %341 : vector<2x64xf32>
    %343 = arith.mulf %333, %342 : vector<2x64xf32>
    %c7_i32 = arith.constant 7 : i32
    %344 = arith.index_cast %c7_i32 : i32 to index
    %c0_87 = arith.constant 0 : index
    %c0_88 = arith.constant 0 : index
    %345 = vector.load %arg2[%344, %c0_87, %c0_88] : memref<8x2x256xf32, #tpu.memory_space<vmem>>, vector<1x2x256xf32>
    %346 = vector.shape_cast %345 : vector<1x2x256xf32> to vector<2x256xf32>
    %347 = arith.addf %346, %320 : vector<2x256xf32>
    %348 = arith.negf %347 : vector<2x256xf32>
    %349 = math.exp %348 : vector<2x256xf32>
    %cst_89 = arith.constant 1.000000e+00 : f32
    %350 = vector.broadcast %cst_89 : f32 to vector<2x256xf32>
    %351 = arith.addf %350, %349 : vector<2x256xf32>
    %352 = arith.divf %350, %351 : vector<2x256xf32>
    %353 = vector.extract_strided_slice %352 {offsets = [0, 0], sizes = [2, 64], strides = [1, 1]} : vector<2x256xf32> to vector<2x64xf32>
    %354 = vector.extract_strided_slice %352 {offsets = [0, 64], sizes = [2, 64], strides = [1, 1]} : vector<2x256xf32> to vector<2x64xf32>
    %355 = vector.extract_strided_slice %352 {offsets = [0, 128], sizes = [2, 64], strides = [1, 1]} : vector<2x256xf32> to vector<2x64xf32>
    %356 = vector.extract_strided_slice %352 {offsets = [0, 192], sizes = [2, 64], strides = [1, 1]} : vector<2x256xf32> to vector<2x64xf32>
    %cst_90 = arith.constant 2.000000e+00 : f32
    %357 = vector.broadcast %cst_90 : f32 to vector<2x64xf32>
    %358 = arith.mulf %357, %356 : vector<2x64xf32>
    %cst_91 = arith.constant 1.000000e+00 : f32
    %359 = vector.broadcast %cst_91 : f32 to vector<2x64xf32>
    %360 = arith.subf %358, %359 : vector<2x64xf32>
    %361 = arith.mulf %354, %316 : vector<2x64xf32>
    %362 = arith.mulf %353, %360 : vector<2x64xf32>
    %363 = arith.addf %361, %362 : vector<2x64xf32>
    %364 = math.tanh %363 : vector<2x64xf32>
    %365 = arith.mulf %355, %364 : vector<2x64xf32>
    %cst_92 = arith.constant dense<0.000000e+00> : vector<2x512xf32>
    %366 = tpu.matmul %365, %3, %cst_92 {dimension_numbers = #tpu.dot_dimension_numbers<[1], [0], [0], [1], [0, 0, 1, 1], [], []>} : vector<2x64xf32>, vector<64x512xf32>, vector<2x512xf32> -> vector<2x512xf32>
    %367 = vector.extract_strided_slice %366 {offsets = [0, 0], sizes = [2, 256], strides = [1, 1]} : vector<2x512xf32> to vector<2x256xf32>
    %368 = vector.extract_strided_slice %366 {offsets = [0, 256], sizes = [2, 256], strides = [1, 1]} : vector<2x512xf32> to vector<2x256xf32>
    %cst_93 = arith.constant dense<0.000000e+00> : vector<2x256xf32>
    %369 = tpu.matmul %343, %4, %cst_93 {dimension_numbers = #tpu.dot_dimension_numbers<[1], [0], [0], [1], [0, 0, 1, 1], [], []>} : vector<2x64xf32>, vector<64x256xf32>, vector<2x256xf32> -> vector<2x256xf32>
    %370 = arith.addf %368, %369 : vector<2x256xf32>
    %371 = vector.broadcast %5 : vector<1x256xf32> to vector<2x256xf32>
    %372 = arith.addf %370, %371 : vector<2x256xf32>
    %373 = arith.negf %372 : vector<2x256xf32>
    %374 = math.exp %373 : vector<2x256xf32>
    %cst_94 = arith.constant 1.000000e+00 : f32
    %375 = vector.broadcast %cst_94 : f32 to vector<2x256xf32>
    %376 = arith.addf %375, %374 : vector<2x256xf32>
    %377 = arith.divf %375, %376 : vector<2x256xf32>
    %378 = vector.extract_strided_slice %377 {offsets = [0, 0], sizes = [2, 64], strides = [1, 1]} : vector<2x256xf32> to vector<2x64xf32>
    %379 = vector.extract_strided_slice %377 {offsets = [0, 64], sizes = [2, 64], strides = [1, 1]} : vector<2x256xf32> to vector<2x64xf32>
    %380 = vector.extract_strided_slice %377 {offsets = [0, 128], sizes = [2, 64], strides = [1, 1]} : vector<2x256xf32> to vector<2x64xf32>
    %381 = vector.extract_strided_slice %377 {offsets = [0, 192], sizes = [2, 64], strides = [1, 1]} : vector<2x256xf32> to vector<2x64xf32>
    %cst_95 = arith.constant 2.000000e+00 : f32
    %382 = vector.broadcast %cst_95 : f32 to vector<2x64xf32>
    %383 = arith.mulf %382, %381 : vector<2x64xf32>
    %cst_96 = arith.constant 1.000000e+00 : f32
    %384 = vector.broadcast %cst_96 : f32 to vector<2x64xf32>
    %385 = arith.subf %383, %384 : vector<2x64xf32>
    %386 = arith.mulf %379, %341 : vector<2x64xf32>
    %387 = arith.mulf %378, %385 : vector<2x64xf32>
    %388 = arith.addf %386, %387 : vector<2x64xf32>
    %389 = math.tanh %388 : vector<2x64xf32>
    %390 = arith.mulf %380, %389 : vector<2x64xf32>
    %c8_i32 = arith.constant 8 : i32
    %c0_97 = arith.constant 0 : index
    %c0_98 = arith.constant 0 : index
    %c0_99 = arith.constant 0 : index
    %391 = vector.load %arg9[%c0_97, %c0_98, %c0_99] : memref<4x2x64xf32, #tpu.memory_space<vmem>>, vector<1x2x64xf32>
    %392 = vector.shape_cast %391 : vector<1x2x64xf32> to vector<2x64xf32>
    %393 = vector.shape_cast %365 : vector<2x64xf32> to vector<1x2x64xf32>
    tpu.vector_store %arg9[%c0_97, %c0_98, %c0_99], %393 {strides = array<i32>} : memref<4x2x64xf32, #tpu.memory_space<vmem>>, vector<1x2x64xf32>,
    %c1_100 = arith.constant 1 : index
    %c0_101 = arith.constant 0 : index
    %c0_102 = arith.constant 0 : index
    %394 = vector.load %arg9[%c1_100, %c0_101, %c0_102] : memref<4x2x64xf32, #tpu.memory_space<vmem>>, vector<1x2x64xf32>
    %395 = vector.shape_cast %394 : vector<1x2x64xf32> to vector<2x64xf32>
    %396 = vector.shape_cast %363 : vector<2x64xf32> to vector<1x2x64xf32>
    tpu.vector_store %arg9[%c1_100, %c0_101, %c0_102], %396 {strides = array<i32>} : memref<4x2x64xf32, #tpu.memory_space<vmem>>, vector<1x2x64xf32>,
    %c2_103 = arith.constant 2 : index
    %c0_104 = arith.constant 0 : index
    %c0_105 = arith.constant 0 : index
    %397 = vector.load %arg9[%c2_103, %c0_104, %c0_105] : memref<4x2x64xf32, #tpu.memory_space<vmem>>, vector<1x2x64xf32>
    %398 = vector.shape_cast %397 : vector<1x2x64xf32> to vector<2x64xf32>
    %399 = vector.shape_cast %390 : vector<2x64xf32> to vector<1x2x64xf32>
    tpu.vector_store %arg9[%c2_103, %c0_104, %c0_105], %399 {strides = array<i32>} : memref<4x2x64xf32, #tpu.memory_space<vmem>>, vector<1x2x64xf32>,
    %c3_106 = arith.constant 3 : index
    %c0_107 = arith.constant 0 : index
    %c0_108 = arith.constant 0 : index
    %400 = vector.load %arg9[%c3_106, %c0_107, %c0_108] : memref<4x2x64xf32, #tpu.memory_space<vmem>>, vector<1x2x64xf32>
    %401 = vector.shape_cast %400 : vector<1x2x64xf32> to vector<2x64xf32>
    %402 = vector.shape_cast %388 : vector<2x64xf32> to vector<1x2x64xf32>
    tpu.vector_store %arg9[%c3_106, %c0_107, %c0_108], %402 {strides = array<i32>} : memref<4x2x64xf32, #tpu.memory_space<vmem>>, vector<1x2x64xf32>,
    %c0_109 = arith.constant 0 : index
    %c0_110 = arith.constant 0 : index
    %403 = vector.load %arg10[%c0_109, %c0_110] : memref<2x256xf32, #tpu.memory_space<vmem>>, vector<2x256xf32>
    tpu.vector_store %arg10[%c0_109, %c0_110], %367 {strides = array<i32>} : memref<2x256xf32, #tpu.memory_space<vmem>>, vector<2x256xf32>,
    %c0_i32_111 = arith.constant 0 : i32
    %404 = arith.cmpi eq, %arg1, %c0_i32_111 : i32
    %405 = arith.extui %404 : i1 to i32
    %c0_i32_112 = arith.constant 0 : i32
    %406 = arith.cmpi ne, %405, %c0_i32_112 : i32
    scf.if %406 {
      %c0_113 = arith.constant 0 : index
      %c0_114 = arith.constant 0 : index
      %407 = vector.load %arg6[%c0_113, %c0_114] : memref<64x3xf32, #tpu.memory_space<vmem>>, vector<64x3xf32>
      %cst_115 = arith.constant dense<0.000000e+00> : vector<2x3xf32>
      %408 = tpu.matmul %390, %407, %cst_115 {dimension_numbers = #tpu.dot_dimension_numbers<[1], [0], [0], [1], [0, 0, 1, 1], [], []>} : vector<2x64xf32>, vector<64x3xf32>, vector<2x3xf32> -> vector<2x3xf32>
      %c0_116 = arith.constant 0 : index
      %c0_117 = arith.constant 0 : index
      %409 = vector.load %arg7[%c0_116, %c0_117] : memref<1x3xf32, #tpu.memory_space<vmem>>, vector<1x3xf32>
      %410 = vector.broadcast %409 : vector<1x3xf32> to vector<2x3xf32>
      %411 = arith.addf %408, %410 : vector<2x3xf32>
      %412 = arith.negf %411 : vector<2x3xf32>
      %413 = math.exp %412 : vector<2x3xf32>
      %cst_118 = arith.constant 1.000000e+00 : f32
      %414 = vector.broadcast %cst_118 : f32 to vector<2x3xf32>
      %415 = arith.addf %414, %413 : vector<2x3xf32>
      %416 = arith.divf %414, %415 : vector<2x3xf32>
      %c0_119 = arith.constant 0 : index
      %c0_120 = arith.constant 0 : index
      %417 = vector.load %arg8[%c0_119, %c0_120] : memref<2x3xf32, #tpu.memory_space<vmem>>, vector<2x3xf32>
      tpu.vector_store %arg8[%c0_119, %c0_120], %416 {strides = array<i32>} : memref<2x3xf32, #tpu.memory_space<vmem>>, vector<2x3xf32>,
    } else {
    }
    return
  }
  func.func @transform_0(%arg0: i32, %arg1: i32) -> (i32, i32, i32) {
    %c0_i32 = arith.constant 0 : i32
    %c0_i32_0 = arith.constant 0 : i32
    return %arg1, %arg0, %c0_i32 : i32, i32, i32
  }
  func.func @transform_1(%arg0: i32, %arg1: i32) -> (i32, i32) {
    %c0_i32 = arith.constant 0 : i32
    %c0_i32_0 = arith.constant 0 : i32
    %c0_i32_1 = arith.constant 0 : i32
    return %c0_i32, %c0_i32_0 : i32, i32
  }
  func.func @transform_2(%arg0: i32, %arg1: i32) -> (i32, i32) {
    %c0_i32 = arith.constant 0 : i32
    %c0_i32_0 = arith.constant 0 : i32
    %c0_i32_1 = arith.constant 0 : i32
    return %c0_i32, %c0_i32_0 : i32, i32
  }
  func.func @transform_3(%arg0: i32, %arg1: i32) -> (i32, i32) {
    %c0_i32 = arith.constant 0 : i32
    %c0_i32_0 = arith.constant 0 : i32
    %c0_i32_1 = arith.constant 0 : i32
    return %c0_i32, %c0_i32_0 : i32, i32
  }
  func.func @transform_4(%arg0: i32, %arg1: i32) -> (i32, i32) {
    %c0_i32 = arith.constant 0 : i32
    %c0_i32_0 = arith.constant 0 : i32
    %c0_i32_1 = arith.constant 0 : i32
    return %c0_i32, %c0_i32_0 : i32, i32
  }
  func.func @transform_5(%arg0: i32, %arg1: i32) -> (i32, i32) {
    %c0_i32 = arith.constant 0 : i32
    %c0_i32_0 = arith.constant 0 : i32
    %c0_i32_1 = arith.constant 0 : i32
    return %c0_i32, %c0_i32_0 : i32, i32
  }
  func.func @transform_6(%arg0: i32, %arg1: i32) -> (i32, i32) {
    %c0_i32 = arith.constant 0 : i32
    %c0_i32_0 = arith.constant 0 : i32
    return %arg0, %c0_i32 : i32, i32
  }
}

</mosaic_0001>

<llo_original>
// kernel: risk_sequence_forward.1
$region0: #{risk_sequence_forward.1}
  #allocation0 [shape = 'u32[]', space=smem, size = 0x4, offset = 0x4, fixed_abs, tag = 'smem constant byte address 0x4 - core index']
  #allocation1 [shape = 'u32[144,128]{1,0:T(1,128)}', space=vmem, size = 0x12000, scoped, tag = 'internal scratch']
  #allocation2 [shape = 'f32[4,2,64]{2,1,0:T(2,128)}', space=vmem, size = 0x1000, scoped, tag = 'scratch operand']
  #allocation3 [shape = 'f32[2,256]{1,0:T(2,128)}', space=vmem, size = 0x800, scoped, tag = 'scratch operand']
  %s0 = inlined_call_operand.vmem [shape: f32[8,2,256], index: 0, kind: input, shape index: {}]
  %s1 = inlined_call_operand.vmem [shape: f32[64,512], index: 1, kind: input, shape index: {}]
  %s2 = inlined_call_operand.vmem [shape: f32[64,256], index: 2, kind: input, shape index: {}]
  %s3 = inlined_call_operand.vmem [shape: f32[1,256], index: 3, kind: input, shape index: {}]
  %s4 = inlined_call_operand.vmem [shape: f32[64,3], index: 4, kind: input, shape index: {}]
  %s5 = inlined_call_operand.vmem [shape: f32[1,3], index: 5, kind: input, shape index: {}]
  %s6 = inlined_call_operand.hbm [shape: f32[2,3], index: 6, kind: output, shape index: {}]
  %s7 = sld [smem:[#allocation0]]
  $region42: #{risk_sequence_forward.1} parent=0
    _
  %s9 = ssub.s32 1, %s7
  %s10 = scalar_select 0, %s9, %s7
  $region1: #{risk_sequence_forward.1} parent=0
    #allocation4 [shape = 'u8[1024]{0}', space=vmem, size = 0x400, scoped, tag = 'output window, operand 0, single buffered']
    #allocation5 [shape = 's32[1]{0}', space=sflag, size = 0x4, scoped, tag = 'scoped memory for risk_sequence_forward.1']
    %11 = vsyncpa [#allocation5], 0
    // Predicated region
    $region2: #{risk_sequence_forward.1} parent=1 // pred_check
      _
    $region3: #{risk_sequence_forward.1} parent=1 // pred_check_branch
      %13 = sbr.rel (0) target = $region5
    $region4: #{risk_sequence_forward.1} parent=1 // pred_region
      _
    $region5: #{risk_sequence_forward.1} parent=1 // pred_fallthru
      _
    // Predicated region
    $region6: #{risk_sequence_forward.1} parent=1 // pred_check
      _
    $region7: #{risk_sequence_forward.1} parent=1 // pred_check_branch
      %15 = sbr.rel (0) target = $region9
    $region8: #{risk_sequence_forward.1} parent=1 // pred_region
      _
    $region9: #{risk_sequence_forward.1} parent=1 // pred_fallthru
      _
    // Predicated region
    $region10: #{risk_sequence_forward.1} parent=1 // pred_check
      _
    $region11: #{risk_sequence_forward.1} parent=1 // pred_check_branch
      %17 = sbr.rel (0) target = $region13
    $region12: #{risk_sequence_forward.1} parent=1 // pred_region
      _
    $region13: #{risk_sequence_forward.1} parent=1 // pred_fallthru
      _
    // Predicated region
    $region14: #{risk_sequence_forward.1} parent=1 // pred_check
      _
    $region15: #{risk_sequence_forward.1} parent=1 // pred_check_branch
      %19 = sbr.rel (0) target = $region17
    $region16: #{risk_sequence_forward.1} parent=1 // pred_region
      _
    $region17: #{risk_sequence_forward.1} parent=1 // pred_fallthru
      _
    // Predicated region
    $region18: #{risk_sequence_forward.1} parent=1 // pred_check
      _
    $region19: #{risk_sequence_forward.1} parent=1 // pred_check_branch
      %21 = sbr.rel (0) target = $region21
    $region20: #{risk_sequence_forward.1} parent=1 // pred_region
      _
    $region21: #{risk_sequence_forward.1} parent=1 // pred_fallthru
      _
    // Predicated region
    $region22: #{risk_sequence_forward.1} parent=1 // pred_check
      _
    $region23: #{risk_sequence_forward.1} parent=1 // pred_check_branch
      %23 = sbr.rel (0) target = $region25
    $region24: #{risk_sequence_forward.1} parent=1 // pred_region
      _
    $region25: #{risk_sequence_forward.1} parent=1 // pred_fallthru
      _
    %p24 = scmp.eq.s32.totalorder 0, 0
    // Predicated region
    $region26: #{risk_sequence_forward.1} parent=1 // pred_check
      %p25 = pneg %p24
    $region27: #{risk_sequence_forward.1} parent=1 // pred_check_branch
      %27 = sbr.rel (%p25) target = $region29
    $region28: #{risk_sequence_forward.1} parent=1 // pred_region
      %vm28 = vcmask 517120
      %29 = vst.msk [vmem:[#allocation2] sm:$0x3] %vm28, 0.0
      %30 = vst.msk [vmem:[#allocation2 + $0x2] sm:$0x3] %vm28, 0.0
      %31 = vst.msk [vmem:[#allocation2 + $0x4] sm:$0x3] %vm28, 0.0
      %32 = vst.msk [vmem:[#allocation2 + $0x6] sm:$0x3] %vm28, 0.0
      %33 = vst [vmem:[#allocation3] sm:$0xf] 0.0
    $region29: #{risk_sequence_forward.1} parent=1 // pred_fallthru
      _
    %v34 = vld [vmem:[%s1] sm:$0xff]
    %v35 = vld [vmem:[%s1 + $0x8] sm:$0xff]
    %v36 = vld [vmem:[%s1 + $0x10] sm:$0xff]
    %v37 = vld [vmem:[%s1 + $0x18] sm:$0xff]
    %v38 = vld [vmem:[%s1 + $0x20] sm:$0xff]
    %v39 = vld [vmem:[%s1 + $0x28] sm:$0xff]
    %v40 = vld [vmem:[%s1 + $0x30] sm:$0xff]
    %v41 = vld [vmem:[%s1 + $0x38] sm:$0xff]
    %v42 = vld [vmem:[%s1 + $0x40] sm:$0xff]
    %v43 = vld [vmem:[%s1 + $0x48] sm:$0xff]
    %v44 = vld [vmem:[%s1 + $0x50] sm:$0xff]
    %v45 = vld [vmem:[%s1 + $0x58] sm:$0xff]
    %v46 = vld [vmem:[%s1 + $0x60] sm:$0xff]
    %v47 = vld [vmem:[%s1 + $0x68] sm:$0xff]
    %v48 = vld [vmem:[%s1 + $0x70] sm:$0xff]
    %v49 = vld [vmem:[%s1 + $0x78] sm:$0xff]
    %v50 = vld [vmem:[%s1 + $0x80] sm:$0xff]
    %v51 = vld [vmem:[%s1 + $0x88] sm:$0xff]
    %v52 = vld [vmem:[%s1 + $0x90] sm:$0xff]
    %v53 = vld [vmem:[%s1 + $0x98] sm:$0xff]
    %v54 = vld [vmem:[%s1 + $0xa0] sm:$0xff]
    %v55 = vld [vmem:[%s1 + $0xa8] sm:$0xff]
    %v56 = vld [vmem:[%s1 + $0xb0] sm:$0xff]
    %v57 = vld [vmem:[%s1 + $0xb8] sm:$0xff]
    %v58 = vld [vmem:[%s1 + $0xc0] sm:$0xff]
    %v59 = vld [vmem:[%s1 + $0xc8] sm:$0xff]
    %v60 = vld [vmem:[%s1 + $0xd0] sm:$0xff]
    %v61 = vld [vmem:[%s1 + $0xd8] sm:$0xff]
    %v62 = vld [vmem:[%s1 + $0xe0] sm:$0xff]
    %v63 = vld [vmem:[%s1 + $0xe8] sm:$0xff]
    %v64 = vld [vmem:[%s1 + $0xf0] sm:$0xff]
    %v65 = vld [vmem:[%s1 + $0xf8] sm:$0xff]
    %v66 = vld [vmem:[%s2] sm:$0xff]
    %v67 = vld [vmem:[%s2 + $0x8] sm:$0xff]
    %v68 = vld [vmem:[%s2 + $0x10] sm:$0xff]
    %v69 = vld [vmem:[%s2 + $0x18] sm:$0xff]
    %v70 = vld [vmem:[%s2 + $0x20] sm:$0xff]
    %v71 = vld [vmem:[%s2 + $0x28] sm:$0xff]
    %v72 = vld [vmem:[%s2 + $0x30] sm:$0xff]
    %v73 = vld [vmem:[%s2 + $0x38] sm:$0xff]
    %v74 = vld [vmem:[%s2 + $0x40] sm:$0xff]
    %v75 = vld [vmem:[%s2 + $0x48] sm:$0xff]
    %v76 = vld [vmem:[%s2 + $0x50] sm:$0xff]
    %v77 = vld [vmem:[%s2 + $0x58] sm:$0xff]
    %v78 = vld [vmem:[%s2 + $0x60] sm:$0xff]
    %v79 = vld [vmem:[%s2 + $0x68] sm:$0xff]
    %v80 = vld [vmem:[%s2 + $0x70] sm:$0xff]
    %v81 = vld [vmem:[%s2 + $0x78] sm:$0xff]
    %v82 = vld [vmem:[%s3] sm:$0x3]
    %s83 = scalar_lea.vmem [#allocation2], 2
    %v84 = vld [vmem:[%s83] sm:$0x3]
    %s85 = scalar_lea.vmem [#allocation2], 4
    %v86 = vld [vmem:[%s85] sm:$0x3]
    %s87 = scalar_lea.vmem [#allocation2], 6
    %v88 = vld [vmem:[%s87] sm:$0x3]
    %v89 = vld [vmem:[#allocation3] sm:$0xf]
    %v90 = vld [vmem:[%s0] sm:$0xf]
    %v91 = vadd.f32 %v90, %v89
    %v92 = vxor.u32 %v91, 2147483648
    %v93 = vmul.f32 %v92, 1.442695
    %v94 = vpow.pop %v93
    %v95 = vadd.f32 %v94, 1.0
    %v96 = vrcp.pop %v95
    %v97 = vmul.f32 1.0, %v96
    %99 = vrot.lane.b32.xlu0 %v97, 64
    %v100 = vpop.permute.xlu0 %99
    %v101 = vrot.slane %v100, 2
    %v103 = vmul.f32 %v101, 2.0
    %v104 = vsub.f32 %v103, 1.0
    %v107 = vunpack.c.l.s4 1983009808
    %v108 = vunpack.c.0.s8 %v107
    %v109 = vlaneseq
    %v110 = vshrl.u32 %v109, 7
    %v111 = vsub.s32 %v108, %v110
    %v112 = vrot.slane %v84, %v111
    %113 = vrot.lane.b32.xlu0 %v112, 64
    %v114 = vpop.permute.xlu0 %113
    %v116 = vmul.f32 %v97, %v114
    %v117 = vmul.f32 %v97, %v104
    %119 = vrot.lane.b32.xlu0 %v117, 64
    %v120 = vpop.permute.xlu0 %119
    %v122 = vadd.f32 %v116, %v120
    %v123 = vtanh.pop %v122
    %v124 = vrot.slane %v97, 2
    %127 = vrot.lane.b32.xlu0 %v123, 64
    %v128 = vpop.permute.xlu0 %127
    %v130 = vmul.f32 %v124, %v128
    %vm131 = vcmask 523264
    %v133 = vsel %vm131, %v130, 0
    %135 = vmatprep.subr.mxu0 %v35
    %136 = vmatpush1.msra.mxu0 %v34
    %137 = vmatprep.subr.mxu0 %v39
    %138 = vmatpush1.msra.mxu0 %v38
    %139 = vmatprep.subr.mxu0 %v43
    %140 = vmatpush1.msra.mxu0 %v42
    %141 = vmatprep.subr.mxu0 %v47
    %142 = vmatpush1.msra.mxu0 %v46
    %143 = vmatprep.subr.mxu0 %v51
    %144 = vmatpush1.msra.mxu0 %v50
    %145 = vmatprep.subr.mxu0 %v55
    %146 = vmatpush1.msra.mxu0 %v54
    %147 = vmatprep.subr.mxu0 %v59
    %148 = vmatpush1.msra.mxu0 %v58
    %149 = vmatprep.subr.mxu0 %v63
    %150 = vmatpush1.msra.mxu0 %v62
    %151 = vmatprep.subr.mxu0 0.0
    %152 = vmatpush1.msra.mxu0 0.0
    %153 = vmatprep.subr.mxu0 0.0
    %154 = vmatpush1.msra.mxu0 0.0
    %155 = vmatprep.subr.mxu0 0.0
    %156 = vmatpush1.msra.mxu0 0.0
    %157 = vmatprep.subr.mxu0 0.0
    %158 = vmatpush1.msra.mxu0 0.0
    %159 = vmatprep.subr.mxu0 0.0
    %160 = vmatpush1.msra.mxu0 0.0
    %161 = vmatprep.subr.mxu0 0.0
    %162 = vmatpush1.msra.mxu0 0.0
    %163 = vmatprep.subr.mxu0 0.0
    %164 = vmatpush1.msra.mxu0 0.0
    %165 = vmatprep.subr.mxu0 0.0
    %166 = vmatpush1.msra.mxu0 0.0
    %167 = vmatprep.subr.mxu0 0.0
    %168 = vmatpush1.msra.mxu0 0.0
    %169 = vmatprep.subr.mxu0 0.0
    %170 = vmatpush1.msra.mxu0 0.0
    %171 = vmatprep.subr.mxu0 0.0
    %172 = vmatpush1.msra.mxu0 0.0
    %173 = vmatprep.subr.mxu0 0.0
    %174 = vmatpush1.msra.mxu0 0.0
    %175 = vmatprep.subr.mxu0 0.0
    %176 = vmatpush1.msra.mxu0 0.0
    %177 = vmatprep.subr.mxu0 0.0
    %178 = vmatpush1.msra.mxu0 0.0
    %179 = vmatprep.subr.mxu0 0.0
    %180 = vmatpush1.msra.mxu0 0.0
    %181 = vmatprep.subr.mxu0 0.0
    %182 = vmatpush1.msra.mxu0 0.0
    %183 = vmatprep.subr.mxu0 0.0
    %184 = vmatpush1.msra.mxu0 0.0
    %185 = vmatprep.subr.mxu0 0.0
    %186 = vmatpush1.msra.mxu0 0.0
    %187 = vmatprep.subr.mxu0 0.0
    %188 = vmatpush1.msra.mxu0 0.0
    %189 = vmatprep.subr.mxu0 0.0
    %190 = vmatpush1.msra.mxu0 0.0
    %191 = vmatprep.subr.mxu0 0.0
    %192 = vmatpush1.msra.mxu0 0.0
    %193 = vmatprep.subr.mxu0 0.0
    %194 = vmatpush1.msra.mxu0 0.0
    %195 = vmatprep.subr.mxu0 0.0
    %196 = vmatpush1.msra.mxu0 0.0
    %197 = vmatprep.subr.mxu0 0.0
    %198 = vmatpush1.msra.mxu0 0.0
    %199 = vmatprep.mubr.f32.mxu0 0.0
    %200 = vmatmul.mubr.f32.gmra.mrb[0].mxu0 %v133
    %v201 = vpop.f32.mrb[0].mxu0
    %v202 = vadd.f32 0.0, %v201
    %v203 = vpop.f32.mrb[0].mxu0
    %v204 = vadd.f32 0.0, %v203
    %205 = vdwg.mxu0
    %206 = vmatprep.subr.mxu0 %v37
    %207 = vmatpush1.msra.mxu0 %v36
    %208 = vmatprep.subr.mxu0 %v41
    %209 = vmatpush1.msra.mxu0 %v40
    %210 = vmatprep.subr.mxu0 %v45
    %211 = vmatpush1.msra.mxu0 %v44
    %212 = vmatprep.subr.mxu0 %v49
    %213 = vmatpush1.msra.mxu0 %v48
    %214 = vmatprep.subr.mxu0 %v53
    %215 = vmatpush1.msra.mxu0 %v52
    %216 = vmatprep.subr.mxu0 %v57
    %217 = vmatpush1.msra.mxu0 %v56
    %218 = vmatprep.subr.mxu0 %v61
    %219 = vmatpush1.msra.mxu0 %v60
    %220 = vmatprep.subr.mxu0 %v65
    %221 = vmatpush1.msra.mxu0 %v64
    %222 = vmatprep.subr.mxu0 0.0
    %223 = vmatpush1.msra.mxu0 0.0
    %224 = vmatprep.subr.mxu0 0.0
    %225 = vmatpush1.msra.mxu0 0.0
    %226 = vmatprep.subr.mxu0 0.0
    %227 = vmatpush1.msra.mxu0 0.0
    %228 = vmatprep.subr.mxu0 0.0
    %229 = vmatpush1.msra.mxu0 0.0
    %230 = vmatprep.subr.mxu0 0.0
    %231 = vmatpush1.msra.mxu0 0.0
    %232 = vmatprep.subr.mxu0 0.0
    %233 = vmatpush1.msra.mxu0 0.0
    %234 = vmatprep.subr.mxu0 0.0
    %235 = vmatpush1.msra.mxu0 0.0
    %236 = vmatprep.subr.mxu0 0.0
    %237 = vmatpush1.msra.mxu0 0.0
    %238 = vmatprep.subr.mxu0 0.0
    %239 = vmatpush1.msra.mxu0 0.0
    %240 = vmatprep.subr.mxu0 0.0
    %241 = vmatpush1.msra.mxu0 0.0
    %242 = vmatprep.subr.mxu0 0.0
    %243 = vmatpush1.msra.mxu0 0.0
    %244 = vmatprep.subr.mxu0 0.0
    %245 = vmatpush1.msra.mxu0 0.0
    %246 = vmatprep.subr.mxu0 0.0
    %247 = vmatpush1.msra.mxu0 0.0
    %248 = vmatprep.subr.mxu0 0.0
    %249 = vmatpush1.msra.mxu0 0.0
    %250 = vmatprep.subr.mxu0 0.0
    %251 = vmatpush1.msra.mxu0 0.0
    %252 = vmatprep.subr.mxu0 0.0
    %253 = vmatpush1.msra.mxu0 0.0
    %254 = vmatprep.subr.mxu0 0.0
    %255 = vmatpush1.msra.mxu0 0.0
    %256 = vmatprep.subr.mxu0 0.0
    %257 = vmatpush1.msra.mxu0 0.0
    %258 = vmatprep.subr.mxu0 0.0
    %259 = vmatpush1.msra.mxu0 0.0
    %260 = vmatprep.subr.mxu0 0.0
    %261 = vmatpush1.msra.mxu0 0.0
    %262 = vmatprep.subr.mxu0 0.0
    %263 = vmatpush1.msra.mxu0 0.0
    %264 = vmatprep.subr.mxu0 0.0
    %265 = vmatpush1.msra.mxu0 0.0
    %266 = vmatprep.subr.mxu0 0.0
    %267 = vmatpush1.msra.mxu0 0.0
    %268 = vmatprep.subr.mxu0 0.0
    %269 = vmatpush1.msra.mxu0 0.0
    %270 = vmatprep.mubr.f32.mxu0 0.0
    %271 = vmatmul.mubr.f32.gmra.mrb[0].mxu0 %v133
    %v272 = vpop.f32.mrb[0].mxu0
    %v273 = vadd.f32 0.0, %v272
    %v274 = vpop.f32.mrb[0].mxu0
    %v275 = vadd.f32 0.0, %v274
    %276 = vdwg.mxu0
    %v278 = vsel %vm131, %v86, 0
    %280 = vmatprep.subr.mxu0 %v67
    %281 = vmatpush1.msra.mxu0 %v66
    %282 = vmatprep.subr.mxu0 %v69
    %283 = vmatpush1.msra.mxu0 %v68
    %284 = vmatprep.subr.mxu0 %v71
    %285 = vmatpush1.msra.mxu0 %v70
    %286 = vmatprep.subr.mxu0 %v73
    %287 = vmatpush1.msra.mxu0 %v72
    %288 = vmatprep.subr.mxu0 %v75
    %289 = vmatpush1.msra.mxu0 %v74
    %290 = vmatprep.subr.mxu0 %v77
    %291 = vmatpush1.msra.mxu0 %v76
    %292 = vmatprep.subr.mxu0 %v79
    %293 = vmatpush1.msra.mxu0 %v78
    %294 = vmatprep.subr.mxu0 %v81
    %295 = vmatpush1.msra.mxu0 %v80
    %296 = vmatprep.subr.mxu0 0.0
    %297 = vmatpush1.msra.mxu0 0.0
    %298 = vmatprep.subr.mxu0 0.0
    %299 = vmatpush1.msra.mxu0 0.0
    %300 = vmatprep.subr.mxu0 0.0
    %301 = vmatpush1.msra.mxu0 0.0
    %302 = vmatprep.subr.mxu0 0.0
    %303 = vmatpush1.msra.mxu0 0.0
    %304 = vmatprep.subr.mxu0 0.0
    %305 = vmatpush1.msra.mxu0 0.0
    %306 = vmatprep.subr.mxu0 0.0
    %307 = vmatpush1.msra.mxu0 0.0
    %308 = vmatprep.subr.mxu0 0.0
    %309 = vmatpush1.msra.mxu0 0.0
    %310 = vmatprep.subr.mxu0 0.0
    %311 = vmatpush1.msra.mxu0 0.0
    %312 = vmatprep.subr.mxu0 0.0
    %313 = vmatpush1.msra.mxu0 0.0
    %314 = vmatprep.subr.mxu0 0.0
    %315 = vmatpush1.msra.mxu0 0.0
    %316 = vmatprep.subr.mxu0 0.0
    %317 = vmatpush1.msra.mxu0 0.0
    %318 = vmatprep.subr.mxu0 0.0
    %319 = vmatpush1.msra.mxu0 0.0
    %320 = vmatprep.subr.mxu0 0.0
    %321 = vmatpush1.msra.mxu0 0.0
    %322 = vmatprep.subr.mxu0 0.0
    %323 = vmatpush1.msra.mxu0 0.0
    %324 = vmatprep.subr.mxu0 0.0
    %325 = vmatpush1.msra.mxu0 0.0
    %326 = vmatprep.subr.mxu0 0.0
    %327 = vmatpush1.msra.mxu0 0.0
    %328 = vmatprep.subr.mxu0 0.0
    %329 = vmatpush1.msra.mxu0 0.0
    %330 = vmatprep.subr.mxu0 0.0
    %331 = vmatpush1.msra.mxu0 0.0
    %332 = vmatprep.subr.mxu0 0.0
    %333 = vmatpush1.msra.mxu0 0.0
    %334 = vmatprep.subr.mxu0 0.0
    %335 = vmatpush1.msra.mxu0 0.0
    %336 = vmatprep.subr.mxu0 0.0
    %337 = vmatpush1.msra.mxu0 0.0
    %338 = vmatprep.subr.mxu0 0.0
    %339 = vmatpush1.msra.mxu0 0.0
    %340 = vmatprep.subr.mxu0 0.0
    %341 = vmatpush1.msra.mxu0 0.0
    %342 = vmatprep.subr.mxu0 0.0
    %343 = vmatpush1.msra.mxu0 0.0
    %344 = vmatprep.mubr.f32.mxu0 0.0
    %345 = vmatmul.mubr.f32.gmra.mrb[0].mxu0 %v278
    %v346 = vpop.f32.mrb[0].mxu0
    %v347 = vadd.f32 0.0, %v346
    %v348 = vpop.f32.mrb[0].mxu0
    %v349 = vadd.f32 0.0, %v348
    %350 = vdwg.mxu0
    %v351 = vadd.f32 %v273, %v347
    %v352 = vadd.f32 %v275, %v349
    %v354 = vlaneseq
    %v355 = vshrl.u32 %v354, 7
    %v356 = vsub.s32 0, %v355
    %v357 = vrot.slane %v82, %v356
    %v358 = vlaneseq
    %v359 = vshrl.u32 %v358, 7
    %v360 = vsub.s32 1, %v359
    %v361 = vrot.slane %v82, %v360
    %v364 = vadd.f32 %v351, %v357
    %v365 = vadd.f32 %v352, %v361
    %v366 = vxor.u32 %v364, 2147483648
    %v367 = vxor.u32 %v365, 2147483648
    %v368 = vmul.f32 %v366, 1.442695
    %v369 = vpow.pop %v368
    %v370 = vmul.f32 %v367, 1.442695
    %v371 = vpow.pop %v370
    %v372 = vadd.f32 %v369, 1.0
    %v373 = vadd.f32 %v371, 1.0
    %v374 = vrcp.pop %v372
    %v375 = vmul.f32 1.0, %v374
    %v376 = vrcp.pop %v373
    %v377 = vmul.f32 1.0, %v376
    %v378 = vmul.f32 %v377, 2.0
    %v379 = vsub.f32 %v378, 1.0
    %381 = vrot.lane.b32.xlu0 %v88, 64
    %v382 = vpop.permute.xlu0 %381
    %v384 = vmul.f32 %v375, %v382
    %386 = vrot.lane.b32.xlu0 %v379, 64
    %v387 = vpop.permute.xlu0 %386
    %v389 = vmul.f32 %v375, %v387
    %391 = vrot.lane.b32.xlu0 %v389, 64
    %v392 = vpop.permute.xlu0 %391
    %v394 = vadd.f32 %v384, %v392
    %v395 = vtanh.pop %v394
    %397 = vrot.lane.b32.xlu0 %v395, 64
    %v398 = vpop.permute.xlu0 %397
    %v400 = vmul.f32 %v377, %v398
    %s401 = scalar_lea.vmem %s0, 4
    %v402 = vld [vmem:[%s401] sm:$0xf]
    %v405 = vcombine.low %v202, %v204
    %v407 = vunpack.c.l.s4 1983009808
    %v408 = vunpack.c.0.s8 %v407
    %v409 = vlaneseq
    %v410 = vshrl.u32 %v409, 7
    %v411 = vsub.s32 %v408, %v410
    %v412 = vrot.slane %v405, %v411
    %v414 = vadd.f32 %v402, %v412
    %v415 = vxor.u32 %v414, 2147483648
    %v416 = vmul.f32 %v415, 1.442695
    %v417 = vpow.pop %v416
    %v418 = vadd.f32 %v417, 1.0
    %v419 = vrcp.pop %v418
    %v420 = vmul.f32 1.0, %v419
    %422 = vrot.lane.b32.xlu0 %v420, 64
    %v423 = vpop.permute.xlu0 %422
    %v424 = vrot.slane %v423, 2
    %v426 = vmul.f32 %v424, 2.0
    %v427 = vsub.f32 %v426, 1.0
    %v428 = vmul.f32 %v420, %v122
    %v429 = vmul.f32 %v420, %v427
    %431 = vrot.lane.b32.xlu0 %v429, 64
    %v432 = vpop.permute.xlu0 %431
    %v434 = vadd.f32 %v428, %v432
    %v435 = vtanh.pop %v434
    %v436 = vrot.slane %v420, 2
    %439 = vrot.lane.b32.xlu0 %v435, 64
    %v440 = vpop.permute.xlu0 %439
    %v442 = vmul.f32 %v436, %v440
    %v444 = vsel %vm131, %v442, 0
    %446 = vmatprep.subr.mxu0 %v35
    %447 = vmatpush1.msra.mxu0 %v34
    %448 = vmatprep.subr.mxu0 %v39
    %449 = vmatpush1.msra.mxu0 %v38
    %450 = vmatprep.subr.mxu0 %v43
    %451 = vmatpush1.msra.mxu0 %v42
    %452 = vmatprep.subr.mxu0 %v47
    %453 = vmatpush1.msra.mxu0 %v46
    %454 = vmatprep.subr.mxu0 %v51
    %455 = vmatpush1.msra.mxu0 %v50
    %456 = vmatprep.subr.mxu0 %v55
    %457 = vmatpush1.msra.mxu0 %v54
    %458 = vmatprep.subr.mxu0 %v59
    %459 = vmatpush1.msra.mxu0 %v58
    %460 = vmatprep.subr.mxu0 %v63
    %461 = vmatpush1.msra.mxu0 %v62
    %462 = vmatprep.subr.mxu0 0.0
    %463 = vmatpush1.msra.mxu0 0.0
    %464 = vmatprep.subr.mxu0 0.0
    %465 = vmatpush1.msra.mxu0 0.0
    %466 = vmatprep.subr.mxu0 0.0
    %467 = vmatpush1.msra.mxu0 0.0
    %468 = vmatprep.subr.mxu0 0.0
    %469 = vmatpush1.msra.mxu0 0.0
    %470 = vmatprep.subr.mxu0 0.0
    %471 = vmatpush1.msra.mxu0 0.0
    %472 = vmatprep.subr.mxu0 0.0
    %473 = vmatpush1.msra.mxu0 0.0
    %474 = vmatprep.subr.mxu0 0.0
    %475 = vmatpush1.msra.mxu0 0.0
    %476 = vmatprep.subr.mxu0 0.0
    %477 = vmatpush1.msra.mxu0 0.0
    %478 = vmatprep.subr.mxu0 0.0
    %479 = vmatpush1.msra.mxu0 0.0
    %480 = vmatprep.subr.mxu0 0.0
    %481 = vmatpush1.msra.mxu0 0.0
    %482 = vmatprep.subr.mxu0 0.0
    %483 = vmatpush1.msra.mxu0 0.0
    %484 = vmatprep.subr.mxu0 0.0
    %485 = vmatpush1.msra.mxu0 0.0
    %486 = vmatprep.subr.mxu0 0.0
    %487 = vmatpush1.msra.mxu0 0.0
    %488 = vmatprep.subr.mxu0 0.0
    %489 = vmatpush1.msra.mxu0 0.0
    %490 = vmatprep.subr.mxu0 0.0
    %491 = vmatpush1.msra.mxu0 0.0
    %492 = vmatprep.subr.mxu0 0.0
    %493 = vmatpush1.msra.mxu0 0.0
    %494 = vmatprep.subr.mxu0 0.0
    %495 = vmatpush1.msra.mxu0 0.0
    %496 = vmatprep.subr.mxu0 0.0
    %497 = vmatpush1.msra.mxu0 0.0
    %498 = vmatprep.subr.mxu0 0.0
    %499 = vmatpush1.msra.mxu0 0.0
    %500 = vmatprep.subr.mxu0 0.0
    %501 = vmatpush1.msra.mxu0 0.0
    %502 = vmatprep.subr.mxu0 0.0
    %503 = vmatpush1.msra.mxu0 0.0
    %504 = vmatprep.subr.mxu0 0.0
    %505 = vmatpush1.msra.mxu0 0.0
    %506 = vmatprep.subr.mxu0 0.0
    %507 = vmatpush1.msra.mxu0 0.0
    %508 = vmatprep.subr.mxu0 0.0
    %509 = vmatpush1.msra.mxu0 0.0
    %510 = vmatprep.mubr.f32.mxu0 0.0
    %511 = vmatmul.mubr.f32.gmra.mrb[0].mxu0 %v444
    %v512 = vpop.f32.mrb[0].mxu0
    %v513 = vadd.f32 0.0, %v512
    %v514 = vpop.f32.mrb[0].mxu0
    %v515 = vadd.f32 0.0, %v514
    %516 = vdwg.mxu0
    %517 = vmatprep.subr.mxu0 %v37
    %518 = vmatpush1.msra.mxu0 %v36
    %519 = vmatprep.subr.mxu0 %v41
    %520 = vmatpush1.msra.mxu0 %v40
    %521 = vmatprep.subr.mxu0 %v45
    %522 = vmatpush1.msra.mxu0 %v44
    %523 = vmatprep.subr.mxu0 %v49
    %524 = vmatpush1.msra.mxu0 %v48
    %525 = vmatprep.subr.mxu0 %v53
    %526 = vmatpush1.msra.mxu0 %v52
    %527 = vmatprep.subr.mxu0 %v57
    %528 = vmatpush1.msra.mxu0 %v56
    %529 = vmatprep.subr.mxu0 %v61
    %530 = vmatpush1.msra.mxu0 %v60
    %531 = vmatprep.subr.mxu0 %v65
    %532 = vmatpush1.msra.mxu0 %v64
    %533 = vmatprep.subr.mxu0 0.0
    %534 = vmatpush1.msra.mxu0 0.0
    %535 = vmatprep.subr.mxu0 0.0
    %536 = vmatpush1.msra.mxu0 0.0
    %537 = vmatprep.subr.mxu0 0.0
    %538 = vmatpush1.msra.mxu0 0.0
    %539 = vmatprep.subr.mxu0 0.0
    %540 = vmatpush1.msra.mxu0 0.0
    %541 = vmatprep.subr.mxu0 0.0
    %542 = vmatpush1.msra.mxu0 0.0
    %543 = vmatprep.subr.mxu0 0.0
    %544 = vmatpush1.msra.mxu0 0.0
    %545 = vmatprep.subr.mxu0 0.0
    %546 = vmatpush1.msra.mxu0 0.0
    %547 = vmatprep.subr.mxu0 0.0
    %548 = vmatpush1.msra.mxu0 0.0
    %549 = vmatprep.subr.mxu0 0.0
    %550 = vmatpush1.msra.mxu0 0.0
    %551 = vmatprep.subr.mxu0 0.0
    %552 = vmatpush1.msra.mxu0 0.0
    %553 = vmatprep.subr.mxu0 0.0
    %554 = vmatpush1.msra.mxu0 0.0
    %555 = vmatprep.subr.mxu0 0.0
    %556 = vmatpush1.msra.mxu0 0.0
    %557 = vmatprep.subr.mxu0 0.0
    %558 = vmatpush1.msra.mxu0 0.0
    %559 = vmatprep.subr.mxu0 0.0
    %560 = vmatpush1.msra.mxu0 0.0
    %561 = vmatprep.subr.mxu0 0.0
    %562 = vmatpush1.msra.mxu0 0.0
    %563 = vmatprep.subr.mxu0 0.0
    %564 = vmatpush1.msra.mxu0 0.0
    %565 = vmatprep.subr.mxu0 0.0
    %566 = vmatpush1.msra.mxu0 0.0
    %567 = vmatprep.subr.mxu0 0.0
    %568 = vmatpush1.msra.mxu0 0.0
    %569 = vmatprep.subr.mxu0 0.0
    %570 = vmatpush1.msra.mxu0 0.0
    %571 = vmatprep.subr.mxu0 0.0
    %572 = vmatpush1.msra.mxu0 0.0
    %573 = vmatprep.subr.mxu0 0.0
    %574 = vmatpush1.msra.mxu0 0.0
    %575 = vmatprep.subr.mxu0 0.0
    %576 = vmatpush1.msra.mxu0 0.0
    %577 = vmatprep.subr.mxu0 0.0
    %578 = vmatpush1.msra.mxu0 0.0
    %579 = vmatprep.subr.mxu0 0.0
    %580 = vmatpush1.msra.mxu0 0.0
    %581 = vmatprep.mubr.f32.mxu0 0.0
    %582 = vmatmul.mubr.f32.gmra.mrb[0].mxu0 %v444
    %v583 = vpop.f32.mrb[0].mxu0
    %v584 = vadd.f32 0.0, %v583
    %v585 = vpop.f32.mrb[0].mxu0
    %v586 = vadd.f32 0.0, %v585
    %587 = vdwg.mxu0
    %v589 = vsel %vm131, %v400, 0
    %591 = vmatprep.subr.mxu0 %v67
    %592 = vmatpush1.msra.mxu0 %v66
    %593 = vmatprep.subr.mxu0 %v69
    %594 = vmatpush1.msra.mxu0 %v68
    %595 = vmatprep.subr.mxu0 %v71
    %596 = vmatpush1.msra.mxu0 %v70
    %597 = vmatprep.subr.mxu0 %v73
    %598 = vmatpush1.msra.mxu0 %v72
    %599 = vmatprep.subr.mxu0 %v75
    %600 = vmatpush1.msra.mxu0 %v74
    %601 = vmatprep.subr.mxu0 %v77
    %602 = vmatpush1.msra.mxu0 %v76
    %603 = vmatprep.subr.mxu0 %v79
    %604 = vmatpush1.msra.mxu0 %v78
    %605 = vmatprep.subr.mxu0 %v81
    %606 = vmatpush1.msra.mxu0 %v80
    %607 = vmatprep.subr.mxu0 0.0
    %608 = vmatpush1.msra.mxu0 0.0
    %609 = vmatprep.subr.mxu0 0.0
    %610 = vmatpush1.msra.mxu0 0.0
    %611 = vmatprep.subr.mxu0 0.0
    %612 = vmatpush1.msra.mxu0 0.0
    %613 = vmatprep.subr.mxu0 0.0
    %614 = vmatpush1.msra.mxu0 0.0
    %615 = vmatprep.subr.mxu0 0.0
    %616 = vmatpush1.msra.mxu0 0.0
    %617 = vmatprep.subr.mxu0 0.0
    %618 = vmatpush1.msra.mxu0 0.0
    %619 = vmatprep.subr.mxu0 0.0
    %620 = vmatpush1.msra.mxu0 0.0
    %621 = vmatprep.subr.mxu0 0.0
    %622 = vmatpush1.msra.mxu0 0.0
    %623 = vmatprep.subr.mxu0 0.0
    %624 = vmatpush1.msra.mxu0 0.0
    %625 = vmatprep.subr.mxu0 0.0
    %626 = vmatpush1.msra.mxu0 0.0
    %627 = vmatprep.subr.mxu0 0.0
    %628 = vmatpush1.msra.mxu0 0.0
    %629 = vmatprep.subr.mxu0 0.0
    %630 = vmatpush1.msra.mxu0 0.0
    %631 = vmatprep.subr.mxu0 0.0
    %632 = vmatpush1.msra.mxu0 0.0
    %633 = vmatprep.subr.mxu0 0.0
    %634 = vmatpush1.msra.mxu0 0.0
    %635 = vmatprep.subr.mxu0 0.0
    %636 = vmatpush1.msra.mxu0 0.0
    %637 = vmatprep.subr.mxu0 0.0
    %638 = vmatpush1.msra.mxu0 0.0
    %639 = vmatprep.subr.mxu0 0.0
    %640 = vmatpush1.msra.mxu0 0.0
    %641 = vmatprep.subr.mxu0 0.0
    %642 = vmatpush1.msra.mxu0 0.0
    %643 = vmatprep.subr.mxu0 0.0
    %644 = vmatpush1.msra.mxu0 0.0
    %645 = vmatprep.subr.mxu0 0.0
    %646 = vmatpush1.msra.mxu0 0.0
    %647 = vmatprep.subr.mxu0 0.0
    %648 = vmatpush1.msra.mxu0 0.0
    %649 = vmatprep.subr.mxu0 0.0
    %650 = vmatpush1.msra.mxu0 0.0
    %651 = vmatprep.subr.mxu0 0.0
    %652 = vmatpush1.msra.mxu0 0.0
    %653 = vmatprep.subr.mxu0 0.0
    %654 = vmatpush1.msra.mxu0 0.0
    %655 = vmatprep.mubr.f32.mxu0 0.0
    %656 = vmatmul.mubr.f32.gmra.mrb[0].mxu0 %v589
    %v657 = vpop.f32.mrb[0].mxu0
    %v658 = vadd.f32 0.0, %v657
    %v659 = vpop.f32.mrb[0].mxu0
    %v660 = vadd.f32 0.0, %v659
    %661 = vdwg.mxu0
    %v662 = vadd.f32 %v584, %v658
    %v663 = vadd.f32 %v586, %v660
    %v664 = vadd.f32 %v662, %v357
    %v665 = vadd.f32 %v663, %v361
    %v666 = vxor.u32 %v664, 2147483648
    %v667 = vxor.u32 %v665, 2147483648
    %v668 = vmul.f32 %v666, 1.442695
    %v669 = vpow.pop %v668
    %v670 = vmul.f32 %v667, 1.442695
    %v671 = vpow.pop %v670
    %v672 = vadd.f32 %v669, 1.0
    %v673 = vadd.f32 %v671, 1.0
    %v674 = vrcp.pop %v672
    %v675 = vmul.f32 1.0, %v674
    %v676 = vrcp.pop %v673
    %v677 = vmul.f32 1.0, %v676
    %v678 = vmul.f32 %v677, 2.0
    %v679 = vsub.f32 %v678, 1.0
    %v680 = vmul.f32 %v675, %v394
    %682 = vrot.lane.b32.xlu0 %v679, 64
    %v683 = vpop.permute.xlu0 %682
    %v685 = vmul.f32 %v675, %v683
    %687 = vrot.lane.b32.xlu0 %v685, 64
    %v688 = vpop.permute.xlu0 %687
    %v690 = vadd.f32 %v680, %v688
    %v691 = vtanh.pop %v690
    %693 = vrot.lane.b32.xlu0 %v691, 64
    %v694 = vpop.permute.xlu0 %693
    %v696 = vmul.f32 %v677, %v694
    %s697 = scalar_lea.vmem %s0, 8
    %v698 = vld [vmem:[%s697] sm:$0xf]
    %v701 = vcombine.low %v513, %v515
    %v703 = vunpack.c.l.s4 1983009808
    %v704 = vunpack.c.0.s8 %v703
    %v705 = vlaneseq
    %v706 = vshrl.u32 %v705, 7
    %v707 = vsub.s32 %v704, %v706
    %v708 = vrot.slane %v701, %v707
    %v710 = vadd.f32 %v698, %v708
    %v711 = vxor.u32 %v710, 2147483648
    %v712 = vmul.f32 %v711, 1.442695
    %v713 = vpow.pop %v712
    %v714 = vadd.f32 %v713, 1.0
    %v715 = vrcp.pop %v714
    %v716 = vmul.f32 1.0, %v715
    %718 = vrot.lane.b32.xlu0 %v716, 64
    %v719 = vpop.permute.xlu0 %718
    %v720 = vrot.slane %v719, 2
    %v722 = vmul.f32 %v720, 2.0
    %v723 = vsub.f32 %v722, 1.0
    %v724 = vmul.f32 %v716, %v434
    %v725 = vmul.f32 %v716, %v723
    %727 = vrot.lane.b32.xlu0 %v725, 64
    %v728 = vpop.permute.xlu0 %727
    %v730 = vadd.f32 %v724, %v728
    %v731 = vtanh.pop %v730
    %v732 = vrot.slane %v716, 2
    %735 = vrot.lane.b32.xlu0 %v731, 64
    %v736 = vpop.permute.xlu0 %735
    %v738 = vmul.f32 %v732, %v736
    %v740 = vsel %vm131, %v738, 0
    %742 = vmatprep.subr.mxu0 %v35
    %743 = vmatpush1.msra.mxu0 %v34
    %744 = vmatprep.subr.mxu0 %v39
    %745 = vmatpush1.msra.mxu0 %v38
    %746 = vmatprep.subr.mxu0 %v43
    %747 = vmatpush1.msra.mxu0 %v42
    %748 = vmatprep.subr.mxu0 %v47
    %749 = vmatpush1.msra.mxu0 %v46
    %750 = vmatprep.subr.mxu0 %v51
    %751 = vmatpush1.msra.mxu0 %v50
    %752 = vmatprep.subr.mxu0 %v55
    %753 = vmatpush1.msra.mxu0 %v54
    %754 = vmatprep.subr.mxu0 %v59
    %755 = vmatpush1.msra.mxu0 %v58
    %756 = vmatprep.subr.mxu0 %v63
    %757 = vmatpush1.msra.mxu0 %v62
    %758 = vmatprep.subr.mxu0 0.0
    %759 = vmatpush1.msra.mxu0 0.0
    %760 = vmatprep.subr.mxu0 0.0
    %761 = vmatpush1.msra.mxu0 0.0
    %762 = vmatprep.subr.mxu0 0.0
    %763 = vmatpush1.msra.mxu0 0.0
    %764 = vmatprep.subr.mxu0 0.0
    %765 = vmatpush1.msra.mxu0 0.0
    %766 = vmatprep.subr.mxu0 0.0
    %767 = vmatpush1.msra.mxu0 0.0
    %768 = vmatprep.subr.mxu0 0.0
    %769 = vmatpush1.msra.mxu0 0.0
    %770 = vmatprep.subr.mxu0 0.0
    %771 = vmatpush1.msra.mxu0 0.0
    %772 = vmatprep.subr.mxu0 0.0
    %773 = vmatpush1.msra.mxu0 0.0
    %774 = vmatprep.subr.mxu0 0.0
    %775 = vmatpush1.msra.mxu0 0.0
    %776 = vmatprep.subr.mxu0 0.0
    %777 = vmatpush1.msra.mxu0 0.0
    %778 = vmatprep.subr.mxu0 0.0
    %779 = vmatpush1.msra.mxu0 0.0
    %780 = vmatprep.subr.mxu0 0.0
    %781 = vmatpush1.msra.mxu0 0.0
    %782 = vmatprep.subr.mxu0 0.0
    %783 = vmatpush1.msra.mxu0 0.0
    %784 = vmatprep.subr.mxu0 0.0
    %785 = vmatpush1.msra.mxu0 0.0
    %786 = vmatprep.subr.mxu0 0.0
    %787 = vmatpush1.msra.mxu0 0.0
    %788 = vmatprep.subr.mxu0 0.0
    %789 = vmatpush1.msra.mxu0 0.0
    %790 = vmatprep.subr.mxu0 0.0
    %791 = vmatpush1.msra.mxu0 0.0
    %792 = vmatprep.subr.mxu0 0.0
    %793 = vmatpush1.msra.mxu0 0.0
    %794 = vmatprep.subr.mxu0 0.0
    %795 = vmatpush1.msra.mxu0 0.0
    %796 = vmatprep.subr.mxu0 0.0
    %797 = vmatpush1.msra.mxu0 0.0
    %798 = vmatprep.subr.mxu0 0.0
    %799 = vmatpush1.msra.mxu0 0.0
    %800 = vmatprep.subr.mxu0 0.0
    %801 = vmatpush1.msra.mxu0 0.0
    %802 = vmatprep.subr.mxu0 0.0
    %803 = vmatpush1.msra.mxu0 0.0
    %804 = vmatprep.subr.mxu0 0.0
    %805 = vmatpush1.msra.mxu0 0.0
    %806 = vmatprep.mubr.f32.mxu0 0.0
    %807 = vmatmul.mubr.f32.gmra.mrb[0].mxu0 %v740
    %v808 = vpop.f32.mrb[0].mxu0
    %v809 = vadd.f32 0.0, %v808
    %v810 = vpop.f32.mrb[0].mxu0
    %v811 = vadd.f32 0.0, %v810
    %812 = vdwg.mxu0
    %813 = vmatprep.subr.mxu0 %v37
    %814 = vmatpush1.msra.mxu0 %v36
    %815 = vmatprep.subr.mxu0 %v41
    %816 = vmatpush1.msra.mxu0 %v40
    %817 = vmatprep.subr.mxu0 %v45
    %818 = vmatpush1.msra.mxu0 %v44
    %819 = vmatprep.subr.mxu0 %v49
    %820 = vmatpush1.msra.mxu0 %v48
    %821 = vmatprep.subr.mxu0 %v53
    %822 = vmatpush1.msra.mxu0 %v52
    %823 = vmatprep.subr.mxu0 %v57
    %824 = vmatpush1.msra.mxu0 %v56
    %825 = vmatprep.subr.mxu0 %v61
    %826 = vmatpush1.msra.mxu0 %v60
    %827 = vmatprep.subr.mxu0 %v65
    %828 = vmatpush1.msra.mxu0 %v64
    %829 = vmatprep.subr.mxu0 0.0
    %830 = vmatpush1.msra.mxu0 0.0
    %831 = vmatprep.subr.mxu0 0.0
    %832 = vmatpush1.msra.mxu0 0.0
    %833 = vmatprep.subr.mxu0 0.0
    %834 = vmatpush1.msra.mxu0 0.0
    %835 = vmatprep.subr.mxu0 0.0
    %836 = vmatpush1.msra.mxu0 0.0
    %837 = vmatprep.subr.mxu0 0.0
    %838 = vmatpush1.msra.mxu0 0.0
    %839 = vmatprep.subr.mxu0 0.0
    %840 = vmatpush1.msra.mxu0 0.0
    %841 = vmatprep.subr.mxu0 0.0
    %842 = vmatpush1.msra.mxu0 0.0
    %843 = vmatprep.subr.mxu0 0.0
    %844 = vmatpush1.msra.mxu0 0.0
    %845 = vmatprep.subr.mxu0 0.0
    %846 = vmatpush1.msra.mxu0 0.0
    %847 = vmatprep.subr.mxu0 0.0
    %848 = vmatpush1.msra.mxu0 0.0
    %849 = vmatprep.subr.mxu0 0.0
    %850 = vmatpush1.msra.mxu0 0.0
    %851 = vmatprep.subr.mxu0 0.0
    %852 = vmatpush1.msra.mxu0 0.0
    %853 = vmatprep.subr.mxu0 0.0
    %854 = vmatpush1.msra.mxu0 0.0
    %855 = vmatprep.subr.mxu0 0.0
    %856 = vmatpush1.msra.mxu0 0.0
    %857 = vmatprep.subr.mxu0 0.0
    %858 = vmatpush1.msra.mxu0 0.0
    %859 = vmatprep.subr.mxu0 0.0
    %860 = vmatpush1.msra.mxu0 0.0
    %861 = vmatprep.subr.mxu0 0.0
    %862 = vmatpush1.msra.mxu0 0.0
    %863 = vmatprep.subr.mxu0 0.0
    %864 = vmatpush1.msra.mxu0 0.0
    %865 = vmatprep.subr.mxu0 0.0
    %866 = vmatpush1.msra.mxu0 0.0
    %867 = vmatprep.subr.mxu0 0.0
    %868 = vmatpush1.msra.mxu0 0.0
    %869 = vmatprep.subr.mxu0 0.0
    %870 = vmatpush1.msra.mxu0 0.0
    %871 = vmatprep.subr.mxu0 0.0
    %872 = vmatpush1.msra.mxu0 0.0
    %873 = vmatprep.subr.mxu0 0.0
    %874 = vmatpush1.msra.mxu0 0.0
    %875 = vmatprep.subr.mxu0 0.0
    %876 = vmatpush1.msra.mxu0 0.0
    %877 = vmatprep.mubr.f32.mxu0 0.0
    %878 = vmatmul.mubr.f32.gmra.mrb[0].mxu0 %v740
    %v879 = vpop.f32.mrb[0].mxu0
    %v880 = vadd.f32 0.0, %v879
    %v881 = vpop.f32.mrb[0].mxu0
    %v882 = vadd.f32 0.0, %v881
    %883 = vdwg.mxu0
    %v885 = vsel %vm131, %v696, 0
    %887 = vmatprep.subr.mxu0 %v67
    %888 = vmatpush1.msra.mxu0 %v66
    %889 = vmatprep.subr.mxu0 %v69
    %890 = vmatpush1.msra.mxu0 %v68
    %891 = vmatprep.subr.mxu0 %v71
    %892 = vmatpush1.msra.mxu0 %v70
    %893 = vmatprep.subr.mxu0 %v73
    %894 = vmatpush1.msra.mxu0 %v72
    %895 = vmatprep.subr.mxu0 %v75
    %896 = vmatpush1.msra.mxu0 %v74
    %897 = vmatprep.subr.mxu0 %v77
    %898 = vmatpush1.msra.mxu0 %v76
    %899 = vmatprep.subr.mxu0 %v79
    %900 = vmatpush1.msra.mxu0 %v78
    %901 = vmatprep.subr.mxu0 %v81
    %902 = vmatpush1.msra.mxu0 %v80
    %903 = vmatprep.subr.mxu0 0.0
    %904 = vmatpush1.msra.mxu0 0.0
    %905 = vmatprep.subr.mxu0 0.0
    %906 = vmatpush1.msra.mxu0 0.0
    %907 = vmatprep.subr.mxu0 0.0
    %908 = vmatpush1.msra.mxu0 0.0
    %909 = vmatprep.subr.mxu0 0.0
    %910 = vmatpush1.msra.mxu0 0.0
    %911 = vmatprep.subr.mxu0 0.0
    %912 = vmatpush1.msra.mxu0 0.0
    %913 = vmatprep.subr.mxu0 0.0
    %914 = vmatpush1.msra.mxu0 0.0
    %915 = vmatprep.subr.mxu0 0.0
    %916 = vmatpush1.msra.mxu0 0.0
    %917 = vmatprep.subr.mxu0 0.0
    %918 = vmatpush1.msra.mxu0 0.0
    %919 = vmatprep.subr.mxu0 0.0
    %920 = vmatpush1.msra.mxu0 0.0
    %921 = vmatprep.subr.mxu0 0.0
    %922 = vmatpush1.msra.mxu0 0.0
    %923 = vmatprep.subr.mxu0 0.0
    %924 = vmatpush1.msra.mxu0 0.0
    %925 = vmatprep.subr.mxu0 0.0
    %926 = vmatpush1.msra.mxu0 0.0
    %927 = vmatprep.subr.mxu0 0.0
    %928 = vmatpush1.msra.mxu0 0.0
    %929 = vmatprep.subr.mxu0 0.0
    %930 = vmatpush1.msra.mxu0 0.0
    %931 = vmatprep.subr.mxu0 0.0
    %932 = vmatpush1.msra.mxu0 0.0
    %933 = vmatprep.subr.mxu0 0.0
    %934 = vmatpush1.msra.mxu0 0.0
    %935 = vmatprep.subr.mxu0 0.0
    %936 = vmatpush1.msra.mxu0 0.0
    %937 = vmatprep.subr.mxu0 0.0
    %938 = vmatpush1.msra.mxu0 0.0
    %939 = vmatprep.subr.mxu0 0.0
    %940 = vmatpush1.msra.mxu0 0.0
    %941 = vmatprep.subr.mxu0 0.0
    %942 = vmatpush1.msra.mxu0 0.0
    %943 = vmatprep.subr.mxu0 0.0
    %944 = vmatpush1.msra.mxu0 0.0
    %945 = vmatprep.subr.mxu0 0.0
    %946 = vmatpush1.msra.mxu0 0.0
    %947 = vmatprep.subr.mxu0 0.0
    %948 = vmatpush1.msra.mxu0 0.0
    %949 = vmatprep.subr.mxu0 0.0
    %950 = vmatpush1.msra.mxu0 0.0
    %951 = vmatprep.mubr.f32.mxu0 0.0
    %952 = vmatmul.mubr.f32.gmra.mrb[0].mxu0 %v885
    %v953 = vpop.f32.mrb[0].mxu0
    %v954 = vadd.f32 0.0, %v953
    %v955 = vpop.f32.mrb[0].mxu0
    %v956 = vadd.f32 0.0, %v955
    %957 = vdwg.mxu0
    %v958 = vadd.f32 %v880, %v954
    %v959 = vadd.f32 %v882, %v956
    %v960 = vadd.f32 %v958, %v357
    %v961 = vadd.f32 %v959, %v361
    %v962 = vxor.u32 %v960, 2147483648
    %v963 = vxor.u32 %v961, 2147483648
    %v964 = vmul.f32 %v962, 1.442695
    %v965 = vpow.pop %v964
    %v966 = vmul.f32 %v963, 1.442695
    %v967 = vpow.pop %v966
    %v968 = vadd.f32 %v965, 1.0
    %v969 = vadd.f32 %v967, 1.0
    %v970 = vrcp.pop %v968
    %v971 = vmul.f32 1.0, %v970
    %v972 = vrcp.pop %v969
    %v973 = vmul.f32 1.0, %v972
    %v974 = vmul.f32 %v973, 2.0
    %v975 = vsub.f32 %v974, 1.0
    %v976 = vmul.f32 %v971, %v690
    %978 = vrot.lane.b32.xlu0 %v975, 64
    %v979 = vpop.permute.xlu0 %978
    %v981 = vmul.f32 %v971, %v979
    %983 = vrot.lane.b32.xlu0 %v981, 64
    %v984 = vpop.permute.xlu0 %983
    %v986 = vadd.f32 %v976, %v984
    %v987 = vtanh.pop %v986
    %989 = vrot.lane.b32.xlu0 %v987, 64
    %v990 = vpop.permute.xlu0 %989
    %v992 = vmul.f32 %v973, %v990
    %s993 = scalar_lea.vmem %s0, 12
    %v994 = vld [vmem:[%s993] sm:$0xf]
    %v997 = vcombine.low %v809, %v811
    %v999 = vunpack.c.l.s4 1983009808
    %v1000 = vunpack.c.0.s8 %v999
    %v1001 = vlaneseq
    %v1002 = vshrl.u32 %v1001, 7
    %v1003 = vsub.s32 %v1000, %v1002
    %v1004 = vrot.slane %v997, %v1003
    %v1006 = vadd.f32 %v994, %v1004
    %v1007 = vxor.u32 %v1006, 2147483648
    %v1008 = vmul.f32 %v1007, 1.442695
    %v1009 = vpow.pop %v1008
    %v1010 = vadd.f32 %v1009, 1.0
    %v1011 = vrcp.pop %v1010
    %v1012 = vmul.f32 1.0, %v1011
    %1014 = vrot.lane.b32.xlu0 %v1012, 64
    %v1015 = vpop.permute.xlu0 %1014
    %v1016 = vrot.slane %v1015, 2
    %v1018 = vmul.f32 %v1016, 2.0
    %v1019 = vsub.f32 %v1018, 1.0
    %v1020 = vmul.f32 %v1012, %v730
    %v1021 = vmul.f32 %v1012, %v1019
    %1023 = vrot.lane.b32.xlu0 %v1021, 64
    %v1024 = vpop.permute.xlu0 %1023
    %v1026 = vadd.f32 %v1020, %v1024
    %v1027 = vtanh.pop %v1026
    %v1028 = vrot.slane %v1012, 2
    %1031 = vrot.lane.b32.xlu0 %v1027, 64
    %v1032 = vpop.permute.xlu0 %1031
    %v1034 = vmul.f32 %v1028, %v1032
    %v1036 = vsel %vm131, %v1034, 0
    %1038 = vmatprep.subr.mxu0 %v35
    %1039 = vmatpush1.msra.mxu0 %v34
    %1040 = vmatprep.subr.mxu0 %v39
    %1041 = vmatpush1.msra.mxu0 %v38
    %1042 = vmatprep.subr.mxu0 %v43
    %1043 = vmatpush1.msra.mxu0 %v42
    %1044 = vmatprep.subr.mxu0 %v47
    %1045 = vmatpush1.msra.mxu0 %v46
    %1046 = vmatprep.subr.mxu0 %v51
    %1047 = vmatpush1.msra.mxu0 %v50
    %1048 = vmatprep.subr.mxu0 %v55
    %1049 = vmatpush1.msra.mxu0 %v54
    %1050 = vmatprep.subr.mxu0 %v59
    %1051 = vmatpush1.msra.mxu0 %v58
    %1052 = vmatprep.subr.mxu0 %v63
    %1053 = vmatpush1.msra.mxu0 %v62
    %1054 = vmatprep.subr.mxu0 0.0
    %1055 = vmatpush1.msra.mxu0 0.0
    %1056 = vmatprep.subr.mxu0 0.0
    %1057 = vmatpush1.msra.mxu0 0.0
    %1058 = vmatprep.subr.mxu0 0.0
    %1059 = vmatpush1.msra.mxu0 0.0
    %1060 = vmatprep.subr.mxu0 0.0
    %1061 = vmatpush1.msra.mxu0 0.0
    %1062 = vmatprep.subr.mxu0 0.0
    %1063 = vmatpush1.msra.mxu0 0.0
    %1064 = vmatprep.subr.mxu0 0.0
    %1065 = vmatpush1.msra.mxu0 0.0
    %1066 = vmatprep.subr.mxu0 0.0
    %1067 = vmatpush1.msra.mxu0 0.0
    %1068 = vmatprep.subr.mxu0 0.0
    %1069 = vmatpush1.msra.mxu0 0.0
    %1070 = vmatprep.subr.mxu0 0.0
    %1071 = vmatpush1.msra.mxu0 0.0
    %1072 = vmatprep.subr.mxu0 0.0
    %1073 = vmatpush1.msra.mxu0 0.0
    %1074 = vmatprep.subr.mxu0 0.0
    %1075 = vmatpush1.msra.mxu0 0.0
    %1076 = vmatprep.subr.mxu0 0.0
    %1077 = vmatpush1.msra.mxu0 0.0
    %1078 = vmatprep.subr.mxu0 0.0
    %1079 = vmatpush1.msra.mxu0 0.0
    %1080 = vmatprep.subr.mxu0 0.0
    %1081 = vmatpush1.msra.mxu0 0.0
    %1082 = vmatprep.subr.mxu0 0.0
    %1083 = vmatpush1.msra.mxu0 0.0
    %1084 = vmatprep.subr.mxu0 0.0
    %1085 = vmatpush1.msra.mxu0 0.0
    %1086 = vmatprep.subr.mxu0 0.0
    %1087 = vmatpush1.msra.mxu0 0.0
    %1088 = vmatprep.subr.mxu0 0.0
    %1089 = vmatpush1.msra.mxu0 0.0
    %1090 = vmatprep.subr.mxu0 0.0
    %1091 = vmatpush1.msra.mxu0 0.0
    %1092 = vmatprep.subr.mxu0 0.0
    %1093 = vmatpush1.msra.mxu0 0.0
    %1094 = vmatprep.subr.mxu0 0.0
    %1095 = vmatpush1.msra.mxu0 0.0
    %1096 = vmatprep.subr.mxu0 0.0
    %1097 = vmatpush1.msra.mxu0 0.0
    %1098 = vmatprep.subr.mxu0 0.0
    %1099 = vmatpush1.msra.mxu0 0.0
    %1100 = vmatprep.subr.mxu0 0.0
    %1101 = vmatpush1.msra.mxu0 0.0
    %1102 = vmatprep.mubr.f32.mxu0 0.0
    %1103 = vmatmul.mubr.f32.gmra.mrb[0].mxu0 %v1036
    %v1104 = vpop.f32.mrb[0].mxu0
    %v1105 = vadd.f32 0.0, %v1104
    %v1106 = vpop.f32.mrb[0].mxu0
    %v1107 = vadd.f32 0.0, %v1106
    %1108 = vdwg.mxu0
    %1109 = vmatprep.subr.mxu0 %v37
    %1110 = vmatpush1.msra.mxu0 %v36
    %1111 = vmatprep.subr.mxu0 %v41
    %1112 = vmatpush1.msra.mxu0 %v40
    %1113 = vmatprep.subr.mxu0 %v45
    %1114 = vmatpush1.msra.mxu0 %v44
    %1115 = vmatprep.subr.mxu0 %v49
    %1116 = vmatpush1.msra.mxu0 %v48
    %1117 = vmatprep.subr.mxu0 %v53
    %1118 = vmatpush1.msra.mxu0 %v52
    %1119 = vmatprep.subr.mxu0 %v57
    %1120 = vmatpush1.msra.mxu0 %v56
    %1121 = vmatprep.subr.mxu0 %v61
    %1122 = vmatpush1.msra.mxu0 %v60
    %1123 = vmatprep.subr.mxu0 %v65
    %1124 = vmatpush1.msra.mxu0 %v64
    %1125 = vmatprep.subr.mxu0 0.0
    %1126 = vmatpush1.msra.mxu0 0.0
    %1127 = vmatprep.subr.mxu0 0.0
    %1128 = vmatpush1.msra.mxu0 0.0
    %1129 = vmatprep.subr.mxu0 0.0
    %1130 = vmatpush1.msra.mxu0 0.0
    %1131 = vmatprep.subr.mxu0 0.0
    %1132 = vmatpush1.msra.mxu0 0.0
    %1133 = vmatprep.subr.mxu0 0.0
    %1134 = vmatpush1.msra.mxu0 0.0
    %1135 = vmatprep.subr.mxu0 0.0
    %1136 = vmatpush1.msra.mxu0 0.0
    %1137 = vmatprep.subr.mxu0 0.0
    %1138 = vmatpush1.msra.mxu0 0.0
    %1139 = vmatprep.subr.mxu0 0.0
    %1140 = vmatpush1.msra.mxu0 0.0
    %1141 = vmatprep.subr.mxu0 0.0
    %1142 = vmatpush1.msra.mxu0 0.0
    %1143 = vmatprep.subr.mxu0 0.0
    %1144 = vmatpush1.msra.mxu0 0.0
    %1145 = vmatprep.subr.mxu0 0.0
    %1146 = vmatpush1.msra.mxu0 0.0
    %1147 = vmatprep.subr.mxu0 0.0
    %1148 = vmatpush1.msra.mxu0 0.0
    %1149 = vmatprep.subr.mxu0 0.0
    %1150 = vmatpush1.msra.mxu0 0.0
    %1151 = vmatprep.subr.mxu0 0.0
    %1152 = vmatpush1.msra.mxu0 0.0
    %1153 = vmatprep.subr.mxu0 0.0
    %1154 = vmatpush1.msra.mxu0 0.0
    %1155 = vmatprep.subr.mxu0 0.0
    %1156 = vmatpush1.msra.mxu0 0.0
    %1157 = vmatprep.subr.mxu0 0.0
    %1158 = vmatpush1.msra.mxu0 0.0
    %1159 = vmatprep.subr.mxu0 0.0
    %1160 = vmatpush1.msra.mxu0 0.0
    %1161 = vmatprep.subr.mxu0 0.0
    %1162 = vmatpush1.msra.mxu0 0.0
    %1163 = vmatprep.subr.mxu0 0.0
    %1164 = vmatpush1.msra.mxu0 0.0
    %1165 = vmatprep.subr.mxu0 0.0
    %1166 = vmatpush1.msra.mxu0 0.0
    %1167 = vmatprep.subr.mxu0 0.0
    %1168 = vmatpush1.msra.mxu0 0.0
    %1169 = vmatprep.subr.mxu0 0.0
    %1170 = vmatpush1.msra.mxu0 0.0
    %1171 = vmatprep.subr.mxu0 0.0
    %1172 = vmatpush1.msra.mxu0 0.0
    %1173 = vmatprep.mubr.f32.mxu0 0.0
    %1174 = vmatmul.mubr.f32.gmra.mrb[0].mxu0 %v1036
    %v1175 = vpop.f32.mrb[0].mxu0
    %v1176 = vadd.f32 0.0, %v1175
    %v1177 = vpop.f32.mrb[0].mxu0
    %v1178 = vadd.f32 0.0, %v1177
    %1179 = vdwg.mxu0
    %v1181 = vsel %vm131, %v992, 0
    %1183 = vmatprep.subr.mxu0 %v67
    %1184 = vmatpush1.msra.mxu0 %v66
    %1185 = vmatprep.subr.mxu0 %v69
    %1186 = vmatpush1.msra.mxu0 %v68
    %1187 = vmatprep.subr.mxu0 %v71
    %1188 = vmatpush1.msra.mxu0 %v70
    %1189 = vmatprep.subr.mxu0 %v73
    %1190 = vmatpush1.msra.mxu0 %v72
    %1191 = vmatprep.subr.mxu0 %v75
    %1192 = vmatpush1.msra.mxu0 %v74
    %1193 = vmatprep.subr.mxu0 %v77
    %1194 = vmatpush1.msra.mxu0 %v76
    %1195 = vmatprep.subr.mxu0 %v79
    %1196 = vmatpush1.msra.mxu0 %v78
    %1197 = vmatprep.subr.mxu0 %v81
    %1198 = vmatpush1.msra.mxu0 %v80
    %1199 = vmatprep.subr.mxu0 0.0
    %1200 = vmatpush1.msra.mxu0 0.0
    %1201 = vmatprep.subr.mxu0 0.0
    %1202 = vmatpush1.msra.mxu0 0.0
    %1203 = vmatprep.subr.mxu0 0.0
    %1204 = vmatpush1.msra.mxu0 0.0
    %1205 = vmatprep.subr.mxu0 0.0
    %1206 = vmatpush1.msra.mxu0 0.0
    %1207 = vmatprep.subr.mxu0 0.0
    %1208 = vmatpush1.msra.mxu0 0.0
    %1209 = vmatprep.subr.mxu0 0.0
    %1210 = vmatpush1.msra.mxu0 0.0
    %1211 = vmatprep.subr.mxu0 0.0
    %1212 = vmatpush1.msra.mxu0 0.0
    %1213 = vmatprep.subr.mxu0 0.0
    %1214 = vmatpush1.msra.mxu0 0.0
    %1215 = vmatprep.subr.mxu0 0.0
    %1216 = vmatpush1.msra.mxu0 0.0
    %1217 = vmatprep.subr.mxu0 0.0
    %1218 = vmatpush1.msra.mxu0 0.0
    %1219 = vmatprep.subr.mxu0 0.0
    %1220 = vmatpush1.msra.mxu0 0.0
    %1221 = vmatprep.subr.mxu0 0.0
    %1222 = vmatpush1.msra.mxu0 0.0
    %1223 = vmatprep.subr.mxu0 0.0
    %1224 = vmatpush1.msra.mxu0 0.0
    %1225 = vmatprep.subr.mxu0 0.0
    %1226 = vmatpush1.msra.mxu0 0.0
    %1227 = vmatprep.subr.mxu0 0.0
    %1228 = vmatpush1.msra.mxu0 0.0
    %1229 = vmatprep.subr.mxu0 0.0
    %1230 = vmatpush1.msra.mxu0 0.0
    %1231 = vmatprep.subr.mxu0 0.0
    %1232 = vmatpush1.msra.mxu0 0.0
    %1233 = vmatprep.subr.mxu0 0.0
    %1234 = vmatpush1.msra.mxu0 0.0
    %1235 = vmatprep.subr.mxu0 0.0
    %1236 = vmatpush1.msra.mxu0 0.0
    %1237 = vmatprep.subr.mxu0 0.0
    %1238 = vmatpush1.msra.mxu0 0.0
    %1239 = vmatprep.subr.mxu0 0.0
    %1240 = vmatpush1.msra.mxu0 0.0
    %1241 = vmatprep.subr.mxu0 0.0
    %1242 = vmatpush1.msra.mxu0 0.0
    %1243 = vmatprep.subr.mxu0 0.0
    %1244 = vmatpush1.msra.mxu0 0.0
    %1245 = vmatprep.subr.mxu0 0.0
    %1246 = vmatpush1.msra.mxu0 0.0
    %1247 = vmatprep.mubr.f32.mxu0 0.0
    %1248 = vmatmul.mubr.f32.gmra.mrb[0].mxu0 %v1181
    %v1249 = vpop.f32.mrb[0].mxu0
    %v1250 = vadd.f32 0.0, %v1249
    %v1251 = vpop.f32.mrb[0].mxu0
    %v1252 = vadd.f32 0.0, %v1251
    %1253 = vdwg.mxu0
    %v1254 = vadd.f32 %v1176, %v1250
    %v1255 = vadd.f32 %v1178, %v1252
    %v1256 = vadd.f32 %v1254, %v357
    %v1257 = vadd.f32 %v1255, %v361
    %v1258 = vxor.u32 %v1256, 2147483648
    %v1259 = vxor.u32 %v1257, 2147483648
    %v1260 = vmul.f32 %v1258, 1.442695
    %v1261 = vpow.pop %v1260
    %v1262 = vmul.f32 %v1259, 1.442695
    %v1263 = vpow.pop %v1262
    %v1264 = vadd.f32 %v1261, 1.0
    %v1265 = vadd.f32 %v1263, 1.0
    %v1266 = vrcp.pop %v1264
    %v1267 = vmul.f32 1.0, %v1266
    %v1268 = vrcp.pop %v1265
    %v1269 = vmul.f32 1.0, %v1268
    %v1270 = vmul.f32 %v1269, 2.0
    %v1271 = vsub.f32 %v1270, 1.0
    %v1272 = vmul.f32 %v1267, %v986
    %1274 = vrot.lane.b32.xlu0 %v1271, 64
    %v1275 = vpop.permute.xlu0 %1274
    %v1277 = vmul.f32 %v1267, %v1275
    %1279 = vrot.lane.b32.xlu0 %v1277, 64
    %v1280 = vpop.permute.xlu0 %1279
    %v1282 = vadd.f32 %v1272, %v1280
    %v1283 = vtanh.pop %v1282
    %1285 = vrot.lane.b32.xlu0 %v1283, 64
    %v1286 = vpop.permute.xlu0 %1285
    %v1288 = vmul.f32 %v1269, %v1286
    %s1289 = scalar_lea.vmem %s0, 16
    %v1290 = vld [vmem:[%s1289] sm:$0xf]
    %v1293 = vcombine.low %v1105, %v1107
    %v1295 = vunpack.c.l.s4 1983009808
    %v1296 = vunpack.c.0.s8 %v1295
    %v1297 = vlaneseq
    %v1298 = vshrl.u32 %v1297, 7
    %v1299 = vsub.s32 %v1296, %v1298
    %v1300 = vrot.slane %v1293, %v1299
    %v1302 = vadd.f32 %v1290, %v1300
    %v1303 = vxor.u32 %v1302, 2147483648
    %v1304 = vmul.f32 %v1303, 1.442695
    %v1305 = vpow.pop %v1304
    %v1306 = vadd.f32 %v1305, 1.0
    %v1307 = vrcp.pop %v1306
    %v1308 = vmul.f32 1.0, %v1307
    %1310 = vrot.lane.b32.xlu0 %v1308, 64
    %v1311 = vpop.permute.xlu0 %1310
    %v1312 = vrot.slane %v1311, 2
    %v1314 = vmul.f32 %v1312, 2.0
    %v1315 = vsub.f32 %v1314, 1.0
    %v1316 = vmul.f32 %v1308, %v1026
    %v1317 = vmul.f32 %v1308, %v1315
    %1319 = vrot.lane.b32.xlu0 %v1317, 64
    %v1320 = vpop.permute.xlu0 %1319
    %v1322 = vadd.f32 %v1316, %v1320
    %v1323 = vtanh.pop %v1322
    %v1324 = vrot.slane %v1308, 2
    %1327 = vrot.lane.b32.xlu0 %v1323, 64
    %v1328 = vpop.permute.xlu0 %1327
    %v1330 = vmul.f32 %v1324, %v1328
    %v1332 = vsel %vm131, %v1330, 0
    %1334 = vmatprep.subr.mxu0 %v35
    %1335 = vmatpush1.msra.mxu0 %v34
    %1336 = vmatprep.subr.mxu0 %v39
    %1337 = vmatpush1.msra.mxu0 %v38
    %1338 = vmatprep.subr.mxu0 %v43
    %1339 = vmatpush1.msra.mxu0 %v42
    %1340 = vmatprep.subr.mxu0 %v47
    %1341 = vmatpush1.msra.mxu0 %v46
    %1342 = vmatprep.subr.mxu0 %v51
    %1343 = vmatpush1.msra.mxu0 %v50
    %1344 = vmatprep.subr.mxu0 %v55
    %1345 = vmatpush1.msra.mxu0 %v54
    %1346 = vmatprep.subr.mxu0 %v59
    %1347 = vmatpush1.msra.mxu0 %v58
    %1348 = vmatprep.subr.mxu0 %v63
    %1349 = vmatpush1.msra.mxu0 %v62
    %1350 = vmatprep.subr.mxu0 0.0
    %1351 = vmatpush1.msra.mxu0 0.0
    %1352 = vmatprep.subr.mxu0 0.0
    %1353 = vmatpush1.msra.mxu0 0.0
    %1354 = vmatprep.subr.mxu0 0.0
    %1355 = vmatpush1.msra.mxu0 0.0
    %1356 = vmatprep.subr.mxu0 0.0
    %1357 = vmatpush1.msra.mxu0 0.0
    %1358 = vmatprep.subr.mxu0 0.0
    %1359 = vmatpush1.msra.mxu0 0.0
    %1360 = vmatprep.subr.mxu0 0.0
    %1361 = vmatpush1.msra.mxu0 0.0
    %1362 = vmatprep.subr.mxu0 0.0
    %1363 = vmatpush1.msra.mxu0 0.0
    %1364 = vmatprep.subr.mxu0 0.0
    %1365 = vmatpush1.msra.mxu0 0.0
    %1366 = vmatprep.subr.mxu0 0.0
    %1367 = vmatpush1.msra.mxu0 0.0
    %1368 = vmatprep.subr.mxu0 0.0
    %1369 = vmatpush1.msra.mxu0 0.0
    %1370 = vmatprep.subr.mxu0 0.0
    %1371 = vmatpush1.msra.mxu0 0.0
    %1372 = vmatprep.subr.mxu0 0.0
    %1373 = vmatpush1.msra.mxu0 0.0
    %1374 = vmatprep.subr.mxu0 0.0
    %1375 = vmatpush1.msra.mxu0 0.0
    %1376 = vmatprep.subr.mxu0 0.0
    %1377 = vmatpush1.msra.mxu0 0.0
    %1378 = vmatprep.subr.mxu0 0.0
    %1379 = vmatpush1.msra.mxu0 0.0
    %1380 = vmatprep.subr.mxu0 0.0
    %1381 = vmatpush1.msra.mxu0 0.0
    %1382 = vmatprep.subr.mxu0 0.0
    %1383 = vmatpush1.msra.mxu0 0.0
    %1384 = vmatprep.subr.mxu0 0.0
    %1385 = vmatpush1.msra.mxu0 0.0
    %1386 = vmatprep.subr.mxu0 0.0
    %1387 = vmatpush1.msra.mxu0 0.0
    %1388 = vmatprep.subr.mxu0 0.0
    %1389 = vmatpush1.msra.mxu0 0.0
    %1390 = vmatprep.subr.mxu0 0.0
    %1391 = vmatpush1.msra.mxu0 0.0
    %1392 = vmatprep.subr.mxu0 0.0
    %1393 = vmatpush1.msra.mxu0 0.0
    %1394 = vmatprep.subr.mxu0 0.0
    %1395 = vmatpush1.msra.mxu0 0.0
    %1396 = vmatprep.subr.mxu0 0.0
    %1397 = vmatpush1.msra.mxu0 0.0
    %1398 = vmatprep.mubr.f32.mxu0 0.0
    %1399 = vmatmul.mubr.f32.gmra.mrb[0].mxu0 %v1332
    %v1400 = vpop.f32.mrb[0].mxu0
    %v1401 = vadd.f32 0.0, %v1400
    %v1402 = vpop.f32.mrb[0].mxu0
    %v1403 = vadd.f32 0.0, %v1402
    %1404 = vdwg.mxu0
    %1405 = vmatprep.subr.mxu0 %v37
    %1406 = vmatpush1.msra.mxu0 %v36
    %1407 = vmatprep.subr.mxu0 %v41
    %1408 = vmatpush1.msra.mxu0 %v40
    %1409 = vmatprep.subr.mxu0 %v45
    %1410 = vmatpush1.msra.mxu0 %v44
    %1411 = vmatprep.subr.mxu0 %v49
    %1412 = vmatpush1.msra.mxu0 %v48
    %1413 = vmatprep.subr.mxu0 %v53
    %1414 = vmatpush1.msra.mxu0 %v52
    %1415 = vmatprep.subr.mxu0 %v57
    %1416 = vmatpush1.msra.mxu0 %v56
    %1417 = vmatprep.subr.mxu0 %v61
    %1418 = vmatpush1.msra.mxu0 %v60
    %1419 = vmatprep.subr.mxu0 %v65
    %1420 = vmatpush1.msra.mxu0 %v64
    %1421 = vmatprep.subr.mxu0 0.0
    %1422 = vmatpush1.msra.mxu0 0.0
    %1423 = vmatprep.subr.mxu0 0.0
    %1424 = vmatpush1.msra.mxu0 0.0
    %1425 = vmatprep.subr.mxu0 0.0
    %1426 = vmatpush1.msra.mxu0 0.0
    %1427 = vmatprep.subr.mxu0 0.0
    %1428 = vmatpush1.msra.mxu0 0.0
    %1429 = vmatprep.subr.mxu0 0.0
    %1430 = vmatpush1.msra.mxu0 0.0
    %1431 = vmatprep.subr.mxu0 0.0
    %1432 = vmatpush1.msra.mxu0 0.0
    %1433 = vmatprep.subr.mxu0 0.0
    %1434 = vmatpush1.msra.mxu0 0.0
    %1435 = vmatprep.subr.mxu0 0.0
    %1436 = vmatpush1.msra.mxu0 0.0
    %1437 = vmatprep.subr.mxu0 0.0
    %1438 = vmatpush1.msra.mxu0 0.0
    %1439 = vmatprep.subr.mxu0 0.0
    %1440 = vmatpush1.msra.mxu0 0.0
    %1441 = vmatprep.subr.mxu0 0.0
    %1442 = vmatpush1.msra.mxu0 0.0
    %1443 = vmatprep.subr.mxu0 0.0
    %1444 = vmatpush1.msra.mxu0 0.0
    %1445 = vmatprep.subr.mxu0 0.0
    %1446 = vmatpush1.msra.mxu0 0.0
    %1447 = vmatprep.subr.mxu0 0.0
    %1448 = vmatpush1.msra.mxu0 0.0
    %1449 = vmatprep.subr.mxu0 0.0
    %1450 = vmatpush1.msra.mxu0 0.0
    %1451 = vmatprep.subr.mxu0 0.0
    %1452 = vmatpush1.msra.mxu0 0.0
    %1453 = vmatprep.subr.mxu0 0.0
    %1454 = vmatpush1.msra.mxu0 0.0
    %1455 = vmatprep.subr.mxu0 0.0
    %1456 = vmatpush1.msra.mxu0 0.0
    %1457 = vmatprep.subr.mxu0 0.0
    %1458 = vmatpush1.msra.mxu0 0.0
    %1459 = vmatprep.subr.mxu0 0.0
    %1460 = vmatpush1.msra.mxu0 0.0
    %1461 = vmatprep.subr.mxu0 0.0
    %1462 = vmatpush1.msra.mxu0 0.0
    %1463 = vmatprep.subr.mxu0 0.0
    %1464 = vmatpush1.msra.mxu0 0.0
    %1465 = vmatprep.subr.mxu0 0.0
    %1466 = vmatpush1.msra.mxu0 0.0
    %1467 = vmatprep.subr.mxu0 0.0
    %1468 = vmatpush1.msra.mxu0 0.0
    %1469 = vmatprep.mubr.f32.mxu0 0.0
    %1470 = vmatmul.mubr.f32.gmra.mrb[0].mxu0 %v1332
    %v1471 = vpop.f32.mrb[0].mxu0
    %v1472 = vadd.f32 0.0, %v1471
    %v1473 = vpop.f32.mrb[0].mxu0
    %v1474 = vadd.f32 0.0, %v1473
    %1475 = vdwg.mxu0
    %v1477 = vsel %vm131, %v1288, 0
    %1479 = vmatprep.subr.mxu0 %v67
    %1480 = vmatpush1.msra.mxu0 %v66
    %1481 = vmatprep.subr.mxu0 %v69
    %1482 = vmatpush1.msra.mxu0 %v68
    %1483 = vmatprep.subr.mxu0 %v71
    %1484 = vmatpush1.msra.mxu0 %v70
    %1485 = vmatprep.subr.mxu0 %v73
    %1486 = vmatpush1.msra.mxu0 %v72
    %1487 = vmatprep.subr.mxu0 %v75
    %1488 = vmatpush1.msra.mxu0 %v74
    %1489 = vmatprep.subr.mxu0 %v77
    %1490 = vmatpush1.msra.mxu0 %v76
    %1491 = vmatprep.subr.mxu0 %v79
    %1492 = vmatpush1.msra.mxu0 %v78
    %1493 = vmatprep.subr.mxu0 %v81
    %1494 = vmatpush1.msra.mxu0 %v80
    %1495 = vmatprep.subr.mxu0 0.0
    %1496 = vmatpush1.msra.mxu0 0.0
    %1497 = vmatprep.subr.mxu0 0.0
    %1498 = vmatpush1.msra.mxu0 0.0
    %1499 = vmatprep.subr.mxu0 0.0
    %1500 = vmatpush1.msra.mxu0 0.0
    %1501 = vmatprep.subr.mxu0 0.0
    %1502 = vmatpush1.msra.mxu0 0.0
    %1503 = vmatprep.subr.mxu0 0.0
    %1504 = vmatpush1.msra.mxu0 0.0
    %1505 = vmatprep.subr.mxu0 0.0
    %1506 = vmatpush1.msra.mxu0 0.0
    %1507 = vmatprep.subr.mxu0 0.0
    %1508 = vmatpush1.msra.mxu0 0.0
    %1509 = vmatprep.subr.mxu0 0.0
    %1510 = vmatpush1.msra.mxu0 0.0
    %1511 = vmatprep.subr.mxu0 0.0
    %1512 = vmatpush1.msra.mxu0 0.0
    %1513 = vmatprep.subr.mxu0 0.0
    %1514 = vmatpush1.msra.mxu0 0.0
    %1515 = vmatprep.subr.mxu0 0.0
    %1516 = vmatpush1.msra.mxu0 0.0
    %1517 = vmatprep.subr.mxu0 0.0
    %1518 = vmatpush1.msra.mxu0 0.0
    %1519 = vmatprep.subr.mxu0 0.0
    %1520 = vmatpush1.msra.mxu0 0.0
    %1521 = vmatprep.subr.mxu0 0.0
    %1522 = vmatpush1.msra.mxu0 0.0
    %1523 = vmatprep.subr.mxu0 0.0
    %1524 = vmatpush1.msra.mxu0 0.0
    %1525 = vmatprep.subr.mxu0 0.0
    %1526 = vmatpush1.msra.mxu0 0.0
    %1527 = vmatprep.subr.mxu0 0.0
    %1528 = vmatpush1.msra.mxu0 0.0
    %1529 = vmatprep.subr.mxu0 0.0
    %1530 = vmatpush1.msra.mxu0 0.0
    %1531 = vmatprep.subr.mxu0 0.0
    %1532 = vmatpush1.msra.mxu0 0.0
    %1533 = vmatprep.subr.mxu0 0.0
    %1534 = vmatpush1.msra.mxu0 0.0
    %1535 = vmatprep.subr.mxu0 0.0
    %1536 = vmatpush1.msra.mxu0 0.0
    %1537 = vmatprep.subr.mxu0 0.0
    %1538 = vmatpush1.msra.mxu0 0.0
    %1539 = vmatprep.subr.mxu0 0.0
    %1540 = vmatpush1.msra.mxu0 0.0
    %1541 = vmatprep.subr.mxu0 0.0
    %1542 = vmatpush1.msra.mxu0 0.0
    %1543 = vmatprep.mubr.f32.mxu0 0.0
    %1544 = vmatmul.mubr.f32.gmra.mrb[0].mxu0 %v1477
    %v1545 = vpop.f32.mrb[0].mxu0
    %v1546 = vadd.f32 0.0, %v1545
    %v1547 = vpop.f32.mrb[0].mxu0
    %v1548 = vadd.f32 0.0, %v1547
    %1549 = vdwg.mxu0
    %v1550 = vadd.f32 %v1472, %v1546
    %v1551 = vadd.f32 %v1474, %v1548
    %v1552 = vadd.f32 %v1550, %v357
    %v1553 = vadd.f32 %v1551, %v361
    %v1554 = vxor.u32 %v1552, 2147483648
    %v1555 = vxor.u32 %v1553, 2147483648
    %v1556 = vmul.f32 %v1554, 1.442695
    %v1557 = vpow.pop %v1556
    %v1558 = vmul.f32 %v1555, 1.442695
    %v1559 = vpow.pop %v1558
    %v1560 = vadd.f32 %v1557, 1.0
    %v1561 = vadd.f32 %v1559, 1.0
    %v1562 = vrcp.pop %v1560
    %v1563 = vmul.f32 1.0, %v1562
    %v1564 = vrcp.pop %v1561
    %v1565 = vmul.f32 1.0, %v1564
    %v1566 = vmul.f32 %v1565, 2.0
    %v1567 = vsub.f32 %v1566, 1.0
    %v1568 = vmul.f32 %v1563, %v1282
    %1570 = vrot.lane.b32.xlu0 %v1567, 64
    %v1571 = vpop.permute.xlu0 %1570
    %v1573 = vmul.f32 %v1563, %v1571
    %1575 = vrot.lane.b32.xlu0 %v1573, 64
    %v1576 = vpop.permute.xlu0 %1575
    %v1578 = vadd.f32 %v1568, %v1576
    %v1579 = vtanh.pop %v1578
    %1581 = vrot.lane.b32.xlu0 %v1579, 64
    %v1582 = vpop.permute.xlu0 %1581
    %v1584 = vmul.f32 %v1565, %v1582
    %s1585 = scalar_lea.vmem %s0, 20
    %v1586 = vld [vmem:[%s1585] sm:$0xf]
    %v1589 = vcombine.low %v1401, %v1403
    %v1591 = vunpack.c.l.s4 1983009808
    %v1592 = vunpack.c.0.s8 %v1591
    %v1593 = vlaneseq
    %v1594 = vshrl.u32 %v1593, 7
    %v1595 = vsub.s32 %v1592, %v1594
    %v1596 = vrot.slane %v1589, %v1595
    %v1598 = vadd.f32 %v1586, %v1596
    %v1599 = vxor.u32 %v1598, 2147483648
    %v1600 = vmul.f32 %v1599, 1.442695
    %v1601 = vpow.pop %v1600
    %v1602 = vadd.f32 %v1601, 1.0
    %v1603 = vrcp.pop %v1602
    %v1604 = vmul.f32 1.0, %v1603
    %1606 = vrot.lane.b32.xlu0 %v1604, 64
    %v1607 = vpop.permute.xlu0 %1606
    %v1608 = vrot.slane %v1607, 2
    %v1610 = vmul.f32 %v1608, 2.0
    %v1611 = vsub.f32 %v1610, 1.0
    %v1612 = vmul.f32 %v1604, %v1322
    %v1613 = vmul.f32 %v1604, %v1611
    %1615 = vrot.lane.b32.xlu0 %v1613, 64
    %v1616 = vpop.permute.xlu0 %1615
    %v1618 = vadd.f32 %v1612, %v1616
    %v1619 = vtanh.pop %v1618
    %v1620 = vrot.slane %v1604, 2
    %1623 = vrot.lane.b32.xlu0 %v1619, 64
    %v1624 = vpop.permute.xlu0 %1623
    %v1626 = vmul.f32 %v1620, %v1624
    %v1628 = vsel %vm131, %v1626, 0
    %1630 = vmatprep.subr.mxu0 %v35
    %1631 = vmatpush1.msra.mxu0 %v34
    %1632 = vmatprep.subr.mxu0 %v39
    %1633 = vmatpush1.msra.mxu0 %v38
    %1634 = vmatprep.subr.mxu0 %v43
    %1635 = vmatpush1.msra.mxu0 %v42
    %1636 = vmatprep.subr.mxu0 %v47
    %1637 = vmatpush1.msra.mxu0 %v46
    %1638 = vmatprep.subr.mxu0 %v51
    %1639 = vmatpush1.msra.mxu0 %v50
    %1640 = vmatprep.subr.mxu0 %v55
    %1641 = vmatpush1.msra.mxu0 %v54
    %1642 = vmatprep.subr.mxu0 %v59
    %1643 = vmatpush1.msra.mxu0 %v58
    %1644 = vmatprep.subr.mxu0 %v63
    %1645 = vmatpush1.msra.mxu0 %v62
    %1646 = vmatprep.subr.mxu0 0.0
    %1647 = vmatpush1.msra.mxu0 0.0
    %1648 = vmatprep.subr.mxu0 0.0
    %1649 = vmatpush1.msra.mxu0 0.0
    %1650 = vmatprep.subr.mxu0 0.0
    %1651 = vmatpush1.msra.mxu0 0.0
    %1652 = vmatprep.subr.mxu0 0.0
    %1653 = vmatpush1.msra.mxu0 0.0
    %1654 = vmatprep.subr.mxu0 0.0
    %1655 = vmatpush1.msra.mxu0 0.0
    %1656 = vmatprep.subr.mxu0 0.0
    %1657 = vmatpush1.msra.mxu0 0.0
    %1658 = vmatprep.subr.mxu0 0.0
    %1659 = vmatpush1.msra.mxu0 0.0
    %1660 = vmatprep.subr.mxu0 0.0
    %1661 = vmatpush1.msra.mxu0 0.0
    %1662 = vmatprep.subr.mxu0 0.0
    %1663 = vmatpush1.msra.mxu0 0.0
    %1664 = vmatprep.subr.mxu0 0.0
    %1665 = vmatpush1.msra.mxu0 0.0
    %1666 = vmatprep.subr.mxu0 0.0
    %1667 = vmatpush1.msra.mxu0 0.0
    %1668 = vmatprep.subr.mxu0 0.0
    %1669 = vmatpush1.msra.mxu0 0.0
    %1670 = vmatprep.subr.mxu0 0.0
    %1671 = vmatpush1.msra.mxu0 0.0
    %1672 = vmatprep.subr.mxu0 0.0
    %1673 = vmatpush1.msra.mxu0 0.0
    %1674 = vmatprep.subr.mxu0 0.0
    %1675 = vmatpush1.msra.mxu0 0.0
    %1676 = vmatprep.subr.mxu0 0.0
    %1677 = vmatpush1.msra.mxu0 0.0
    %1678 = vmatprep.subr.mxu0 0.0
    %1679 = vmatpush1.msra.mxu0 0.0
    %1680 = vmatprep.subr.mxu0 0.0
    %1681 = vmatpush1.msra.mxu0 0.0
    %1682 = vmatprep.subr.mxu0 0.0
    %1683 = vmatpush1.msra.mxu0 0.0
    %1684 = vmatprep.subr.mxu0 0.0
    %1685 = vmatpush1.msra.mxu0 0.0
    %1686 = vmatprep.subr.mxu0 0.0
    %1687 = vmatpush1.msra.mxu0 0.0
    %1688 = vmatprep.subr.mxu0 0.0
    %1689 = vmatpush1.msra.mxu0 0.0
    %1690 = vmatprep.subr.mxu0 0.0
    %1691 = vmatpush1.msra.mxu0 0.0
    %1692 = vmatprep.subr.mxu0 0.0
    %1693 = vmatpush1.msra.mxu0 0.0
    %1694 = vmatprep.mubr.f32.mxu0 0.0
    %1695 = vmatmul.mubr.f32.gmra.mrb[0].mxu0 %v1628
    %v1696 = vpop.f32.mrb[0].mxu0
    %v1697 = vadd.f32 0.0, %v1696
    %v1698 = vpop.f32.mrb[0].mxu0
    %v1699 = vadd.f32 0.0, %v1698
    %1700 = vdwg.mxu0
    %1701 = vmatprep.subr.mxu0 %v37
    %1702 = vmatpush1.msra.mxu0 %v36
    %1703 = vmatprep.subr.mxu0 %v41
    %1704 = vmatpush1.msra.mxu0 %v40
    %1705 = vmatprep.subr.mxu0 %v45
    %1706 = vmatpush1.msra.mxu0 %v44
    %1707 = vmatprep.subr.mxu0 %v49
    %1708 = vmatpush1.msra.mxu0 %v48
    %1709 = vmatprep.subr.mxu0 %v53
    %1710 = vmatpush1.msra.mxu0 %v52
    %1711 = vmatprep.subr.mxu0 %v57
    %1712 = vmatpush1.msra.mxu0 %v56
    %1713 = vmatprep.subr.mxu0 %v61
    %1714 = vmatpush1.msra.mxu0 %v60
    %1715 = vmatprep.subr.mxu0 %v65
    %1716 = vmatpush1.msra.mxu0 %v64
    %1717 = vmatprep.subr.mxu0 0.0
    %1718 = vmatpush1.msra.mxu0 0.0
    %1719 = vmatprep.subr.mxu0 0.0
    %1720 = vmatpush1.msra.mxu0 0.0
    %1721 = vmatprep.subr.mxu0 0.0
    %1722 = vmatpush1.msra.mxu0 0.0
    %1723 = vmatprep.subr.mxu0 0.0
    %1724 = vmatpush1.msra.mxu0 0.0
    %1725 = vmatprep.subr.mxu0 0.0
    %1726 = vmatpush1.msra.mxu0 0.0
    %1727 = vmatprep.subr.mxu0 0.0
    %1728 = vmatpush1.msra.mxu0 0.0
    %1729 = vmatprep.subr.mxu0 0.0
    %1730 = vmatpush1.msra.mxu0 0.0
    %1731 = vmatprep.subr.mxu0 0.0
    %1732 = vmatpush1.msra.mxu0 0.0
    %1733 = vmatprep.subr.mxu0 0.0
    %1734 = vmatpush1.msra.mxu0 0.0
    %1735 = vmatprep.subr.mxu0 0.0
    %1736 = vmatpush1.msra.mxu0 0.0
    %1737 = vmatprep.subr.mxu0 0.0
    %1738 = vmatpush1.msra.mxu0 0.0
    %1739 = vmatprep.subr.mxu0 0.0
    %1740 = vmatpush1.msra.mxu0 0.0
    %1741 = vmatprep.subr.mxu0 0.0
    %1742 = vmatpush1.msra.mxu0 0.0
    %1743 = vmatprep.subr.mxu0 0.0
    %1744 = vmatpush1.msra.mxu0 0.0
    %1745 = vmatprep.subr.mxu0 0.0
    %1746 = vmatpush1.msra.mxu0 0.0
    %1747 = vmatprep.subr.mxu0 0.0
    %1748 = vmatpush1.msra.mxu0 0.0
    %1749 = vmatprep.subr.mxu0 0.0
    %1750 = vmatpush1.msra.mxu0 0.0
    %1751 = vmatprep.subr.mxu0 0.0
    %1752 = vmatpush1.msra.mxu0 0.0
    %1753 = vmatprep.subr.mxu0 0.0
    %1754 = vmatpush1.msra.mxu0 0.0
    %1755 = vmatprep.subr.mxu0 0.0
    %1756 = vmatpush1.msra.mxu0 0.0
    %1757 = vmatprep.subr.mxu0 0.0
    %1758 = vmatpush1.msra.mxu0 0.0
    %1759 = vmatprep.subr.mxu0 0.0
    %1760 = vmatpush1.msra.mxu0 0.0
    %1761 = vmatprep.subr.mxu0 0.0
    %1762 = vmatpush1.msra.mxu0 0.0
    %1763 = vmatprep.subr.mxu0 0.0
    %1764 = vmatpush1.msra.mxu0 0.0
    %1765 = vmatprep.mubr.f32.mxu0 0.0
    %1766 = vmatmul.mubr.f32.gmra.mrb[0].mxu0 %v1628
    %v1767 = vpop.f32.mrb[0].mxu0
    %v1768 = vadd.f32 0.0, %v1767
    %v1769 = vpop.f32.mrb[0].mxu0
    %v1770 = vadd.f32 0.0, %v1769
    %1771 = vdwg.mxu0
    %v1773 = vsel %vm131, %v1584, 0
    %1775 = vmatprep.subr.mxu0 %v67
    %1776 = vmatpush1.msra.mxu0 %v66
    %1777 = vmatprep.subr.mxu0 %v69
    %1778 = vmatpush1.msra.mxu0 %v68
    %1779 = vmatprep.subr.mxu0 %v71
    %1780 = vmatpush1.msra.mxu0 %v70
    %1781 = vmatprep.subr.mxu0 %v73
    %1782 = vmatpush1.msra.mxu0 %v72
    %1783 = vmatprep.subr.mxu0 %v75
    %1784 = vmatpush1.msra.mxu0 %v74
    %1785 = vmatprep.subr.mxu0 %v77
    %1786 = vmatpush1.msra.mxu0 %v76
    %1787 = vmatprep.subr.mxu0 %v79
    %1788 = vmatpush1.msra.mxu0 %v78
    %1789 = vmatprep.subr.mxu0 %v81
    %1790 = vmatpush1.msra.mxu0 %v80
    %1791 = vmatprep.subr.mxu0 0.0
    %1792 = vmatpush1.msra.mxu0 0.0
    %1793 = vmatprep.subr.mxu0 0.0
    %1794 = vmatpush1.msra.mxu0 0.0
    %1795 = vmatprep.subr.mxu0 0.0
    %1796 = vmatpush1.msra.mxu0 0.0
    %1797 = vmatprep.subr.mxu0 0.0
    %1798 = vmatpush1.msra.mxu0 0.0
    %1799 = vmatprep.subr.mxu0 0.0
    %1800 = vmatpush1.msra.mxu0 0.0
    %1801 = vmatprep.subr.mxu0 0.0
    %1802 = vmatpush1.msra.mxu0 0.0
    %1803 = vmatprep.subr.mxu0 0.0
    %1804 = vmatpush1.msra.mxu0 0.0
    %1805 = vmatprep.subr.mxu0 0.0
    %1806 = vmatpush1.msra.mxu0 0.0
    %1807 = vmatprep.subr.mxu0 0.0
    %1808 = vmatpush1.msra.mxu0 0.0
    %1809 = vmatprep.subr.mxu0 0.0
    %1810 = vmatpush1.msra.mxu0 0.0
    %1811 = vmatprep.subr.mxu0 0.0
    %1812 = vmatpush1.msra.mxu0 0.0
    %1813 = vmatprep.subr.mxu0 0.0
    %1814 = vmatpush1.msra.mxu0 0.0
    %1815 = vmatprep.subr.mxu0 0.0
    %1816 = vmatpush1.msra.mxu0 0.0
    %1817 = vmatprep.subr.mxu0 0.0
    %1818 = vmatpush1.msra.mxu0 0.0
    %1819 = vmatprep.subr.mxu0 0.0
    %1820 = vmatpush1.msra.mxu0 0.0
    %1821 = vmatprep.subr.mxu0 0.0
    %1822 = vmatpush1.msra.mxu0 0.0
    %1823 = vmatprep.subr.mxu0 0.0
    %1824 = vmatpush1.msra.mxu0 0.0
    %1825 = vmatprep.subr.mxu0 0.0
    %1826 = vmatpush1.msra.mxu0 0.0
    %1827 = vmatprep.subr.mxu0 0.0
    %1828 = vmatpush1.msra.mxu0 0.0
    %1829 = vmatprep.subr.mxu0 0.0
    %1830 = vmatpush1.msra.mxu0 0.0
    %1831 = vmatprep.subr.mxu0 0.0
    %1832 = vmatpush1.msra.mxu0 0.0
    %1833 = vmatprep.subr.mxu0 0.0
    %1834 = vmatpush1.msra.mxu0 0.0
    %1835 = vmatprep.subr.mxu0 0.0
    %1836 = vmatpush1.msra.mxu0 0.0
    %1837 = vmatprep.subr.mxu0 0.0
    %1838 = vmatpush1.msra.mxu0 0.0
    %1839 = vmatprep.mubr.f32.mxu0 0.0
    %1840 = vmatmul.mubr.f32.gmra.mrb[0].mxu0 %v1773
    %v1841 = vpop.f32.mrb[0].mxu0
    %v1842 = vadd.f32 0.0, %v1841
    %v1843 = vpop.f32.mrb[0].mxu0
    %v1844 = vadd.f32 0.0, %v1843
    %1845 = vdwg.mxu0
    %v1846 = vadd.f32 %v1768, %v1842
    %v1847 = vadd.f32 %v1770, %v1844
    %v1848 = vadd.f32 %v1846, %v357
    %v1849 = vadd.f32 %v1847, %v361
    %v1850 = vxor.u32 %v1848, 2147483648
    %v1851 = vxor.u32 %v1849, 2147483648
    %v1852 = vmul.f32 %v1850, 1.442695
    %v1853 = vpow.pop %v1852
    %v1854 = vmul.f32 %v1851, 1.442695
    %v1855 = vpow.pop %v1854
    %v1856 = vadd.f32 %v1853, 1.0
    %v1857 = vadd.f32 %v1855, 1.0
    %v1858 = vrcp.pop %v1856
    %v1859 = vmul.f32 1.0, %v1858
    %v1860 = vrcp.pop %v1857
    %v1861 = vmul.f32 1.0, %v1860
    %v1862 = vmul.f32 %v1861, 2.0
    %v1863 = vsub.f32 %v1862, 1.0
    %v1864 = vmul.f32 %v1859, %v1578
    %1866 = vrot.lane.b32.xlu0 %v1863, 64
    %v1867 = vpop.permute.xlu0 %1866
    %v1869 = vmul.f32 %v1859, %v1867
    %1871 = vrot.lane.b32.xlu0 %v1869, 64
    %v1872 = vpop.permute.xlu0 %1871
    %v1874 = vadd.f32 %v1864, %v1872
    %v1875 = vtanh.pop %v1874
    %1877 = vrot.lane.b32.xlu0 %v1875, 64
    %v1878 = vpop.permute.xlu0 %1877
    %v1880 = vmul.f32 %v1861, %v1878
    %s1881 = scalar_lea.vmem %s0, 24
    %v1882 = vld [vmem:[%s1881] sm:$0xf]
    %v1885 = vcombine.low %v1697, %v1699
    %v1887 = vunpack.c.l.s4 1983009808
    %v1888 = vunpack.c.0.s8 %v1887
    %v1889 = vlaneseq
    %v1890 = vshrl.u32 %v1889, 7
    %v1891 = vsub.s32 %v1888, %v1890
    %v1892 = vrot.slane %v1885, %v1891
    %v1894 = vadd.f32 %v1882, %v1892
    %v1895 = vxor.u32 %v1894, 2147483648
    %v1896 = vmul.f32 %v1895, 1.442695
    %v1897 = vpow.pop %v1896
    %v1898 = vadd.f32 %v1897, 1.0
    %v1899 = vrcp.pop %v1898
    %v1900 = vmul.f32 1.0, %v1899
    %1902 = vrot.lane.b32.xlu0 %v1900, 64
    %v1903 = vpop.permute.xlu0 %1902
    %v1904 = vrot.slane %v1903, 2
    %v1906 = vmul.f32 %v1904, 2.0
    %v1907 = vsub.f32 %v1906, 1.0
    %v1908 = vmul.f32 %v1900, %v1618
    %v1909 = vmul.f32 %v1900, %v1907
    %1911 = vrot.lane.b32.xlu0 %v1909, 64
    %v1912 = vpop.permute.xlu0 %1911
    %v1914 = vadd.f32 %v1908, %v1912
    %v1915 = vtanh.pop %v1914
    %v1916 = vrot.slane %v1900, 2
    %1919 = vrot.lane.b32.xlu0 %v1915, 64
    %v1920 = vpop.permute.xlu0 %1919
    %v1922 = vmul.f32 %v1916, %v1920
    %v1924 = vsel %vm131, %v1922, 0
    %1926 = vmatprep.subr.mxu0 %v35
    %1927 = vmatpush1.msra.mxu0 %v34
    %1928 = vmatprep.subr.mxu0 %v39
    %1929 = vmatpush1.msra.mxu0 %v38
    %1930 = vmatprep.subr.mxu0 %v43
    %1931 = vmatpush1.msra.mxu0 %v42
    %1932 = vmatprep.subr.mxu0 %v47
    %1933 = vmatpush1.msra.mxu0 %v46
    %1934 = vmatprep.subr.mxu0 %v51
    %1935 = vmatpush1.msra.mxu0 %v50
    %1936 = vmatprep.subr.mxu0 %v55
    %1937 = vmatpush1.msra.mxu0 %v54
    %1938 = vmatprep.subr.mxu0 %v59
    %1939 = vmatpush1.msra.mxu0 %v58
    %1940 = vmatprep.subr.mxu0 %v63
    %1941 = vmatpush1.msra.mxu0 %v62
    %1942 = vmatprep.subr.mxu0 0.0
    %1943 = vmatpush1.msra.mxu0 0.0
    %1944 = vmatprep.subr.mxu0 0.0
    %1945 = vmatpush1.msra.mxu0 0.0
    %1946 = vmatprep.subr.mxu0 0.0
    %1947 = vmatpush1.msra.mxu0 0.0
    %1948 = vmatprep.subr.mxu0 0.0
    %1949 = vmatpush1.msra.mxu0 0.0
    %1950 = vmatprep.subr.mxu0 0.0
    %1951 = vmatpush1.msra.mxu0 0.0
    %1952 = vmatprep.subr.mxu0 0.0
    %1953 = vmatpush1.msra.mxu0 0.0
    %1954 = vmatprep.subr.mxu0 0.0
    %1955 = vmatpush1.msra.mxu0 0.0
    %1956 = vmatprep.subr.mxu0 0.0
    %1957 = vmatpush1.msra.mxu0 0.0
    %1958 = vmatprep.subr.mxu0 0.0
    %1959 = vmatpush1.msra.mxu0 0.0
    %1960 = vmatprep.subr.mxu0 0.0
    %1961 = vmatpush1.msra.mxu0 0.0
    %1962 = vmatprep.subr.mxu0 0.0
    %1963 = vmatpush1.msra.mxu0 0.0
    %1964 = vmatprep.subr.mxu0 0.0
    %1965 = vmatpush1.msra.mxu0 0.0
    %1966 = vmatprep.subr.mxu0 0.0
    %1967 = vmatpush1.msra.mxu0 0.0
    %1968 = vmatprep.subr.mxu0 0.0
    %1969 = vmatpush1.msra.mxu0 0.0
    %1970 = vmatprep.subr.mxu0 0.0
    %1971 = vmatpush1.msra.mxu0 0.0
    %1972 = vmatprep.subr.mxu0 0.0
    %1973 = vmatpush1.msra.mxu0 0.0
    %1974 = vmatprep.subr.mxu0 0.0
    %1975 = vmatpush1.msra.mxu0 0.0
    %1976 = vmatprep.subr.mxu0 0.0
    %1977 = vmatpush1.msra.mxu0 0.0
    %1978 = vmatprep.subr.mxu0 0.0
    %1979 = vmatpush1.msra.mxu0 0.0
    %1980 = vmatprep.subr.mxu0 0.0
    %1981 = vmatpush1.msra.mxu0 0.0
    %1982 = vmatprep.subr.mxu0 0.0
    %1983 = vmatpush1.msra.mxu0 0.0
    %1984 = vmatprep.subr.mxu0 0.0
    %1985 = vmatpush1.msra.mxu0 0.0
    %1986 = vmatprep.subr.mxu0 0.0
    %1987 = vmatpush1.msra.mxu0 0.0
    %1988 = vmatprep.subr.mxu0 0.0
    %1989 = vmatpush1.msra.mxu0 0.0
    %1990 = vmatprep.mubr.f32.mxu0 0.0
    %1991 = vmatmul.mubr.f32.gmra.mrb[0].mxu0 %v1924
    %v1992 = vpop.f32.mrb[0].mxu0
    %v1993 = vadd.f32 0.0, %v1992
    %v1994 = vpop.f32.mrb[0].mxu0
    %v1995 = vadd.f32 0.0, %v1994
    %1996 = vdwg.mxu0
    %1997 = vmatprep.subr.mxu0 %v37
    %1998 = vmatpush1.msra.mxu0 %v36
    %1999 = vmatprep.subr.mxu0 %v41
    %2000 = vmatpush1.msra.mxu0 %v40
    %2001 = vmatprep.subr.mxu0 %v45
    %2002 = vmatpush1.msra.mxu0 %v44
    %2003 = vmatprep.subr.mxu0 %v49
    %2004 = vmatpush1.msra.mxu0 %v48
    %2005 = vmatprep.subr.mxu0 %v53
    %2006 = vmatpush1.msra.mxu0 %v52
    %2007 = vmatprep.subr.mxu0 %v57
    %2008 = vmatpush1.msra.mxu0 %v56
    %2009 = vmatprep.subr.mxu0 %v61
    %2010 = vmatpush1.msra.mxu0 %v60
    %2011 = vmatprep.subr.mxu0 %v65
    %2012 = vmatpush1.msra.mxu0 %v64
    %2013 = vmatprep.subr.mxu0 0.0
    %2014 = vmatpush1.msra.mxu0 0.0
    %2015 = vmatprep.subr.mxu0 0.0
    %2016 = vmatpush1.msra.mxu0 0.0
    %2017 = vmatprep.subr.mxu0 0.0
    %2018 = vmatpush1.msra.mxu0 0.0
    %2019 = vmatprep.subr.mxu0 0.0
    %2020 = vmatpush1.msra.mxu0 0.0
    %2021 = vmatprep.subr.mxu0 0.0
    %2022 = vmatpush1.msra.mxu0 0.0
    %2023 = vmatprep.subr.mxu0 0.0
    %2024 = vmatpush1.msra.mxu0 0.0
    %2025 = vmatprep.subr.mxu0 0.0
    %2026 = vmatpush1.msra.mxu0 0.0
    %2027 = vmatprep.subr.mxu0 0.0
    %2028 = vmatpush1.msra.mxu0 0.0
    %2029 = vmatprep.subr.mxu0 0.0
    %2030 = vmatpush1.msra.mxu0 0.0
    %2031 = vmatprep.subr.mxu0 0.0
    %2032 = vmatpush1.msra.mxu0 0.0
    %2033 = vmatprep.subr.mxu0 0.0
    %2034 = vmatpush1.msra.mxu0 0.0
    %2035 = vmatprep.subr.mxu0 0.0
    %2036 = vmatpush1.msra.mxu0 0.0
    %2037 = vmatprep.subr.mxu0 0.0
    %2038 = vmatpush1.msra.mxu0 0.0
    %2039 = vmatprep.subr.mxu0 0.0
    %2040 = vmatpush1.msra.mxu0 0.0
    %2041 = vmatprep.subr.mxu0 0.0
    %2042 = vmatpush1.msra.mxu0 0.0
    %2043 = vmatprep.subr.mxu0 0.0
    %2044 = vmatpush1.msra.mxu0 0.0
    %2045 = vmatprep.subr.mxu0 0.0
    %2046 = vmatpush1.msra.mxu0 0.0
    %2047 = vmatprep.subr.mxu0 0.0
    %2048 = vmatpush1.msra.mxu0 0.0
    %2049 = vmatprep.subr.mxu0 0.0
    %2050 = vmatpush1.msra.mxu0 0.0
    %2051 = vmatprep.subr.mxu0 0.0
    %2052 = vmatpush1.msra.mxu0 0.0
    %2053 = vmatprep.subr.mxu0 0.0
    %2054 = vmatpush1.msra.mxu0 0.0
    %2055 = vmatprep.subr.mxu0 0.0
    %2056 = vmatpush1.msra.mxu0 0.0
    %2057 = vmatprep.subr.mxu0 0.0
    %2058 = vmatpush1.msra.mxu0 0.0
    %2059 = vmatprep.subr.mxu0 0.0
    %2060 = vmatpush1.msra.mxu0 0.0
    %2061 = vmatprep.mubr.f32.mxu0 0.0
    %2062 = vmatmul.mubr.f32.gmra.mrb[0].mxu0 %v1924
    %v2063 = vpop.f32.mrb[0].mxu0
    %v2064 = vadd.f32 0.0, %v2063
    %v2065 = vpop.f32.mrb[0].mxu0
    %v2066 = vadd.f32 0.0, %v2065
    %2067 = vdwg.mxu0
    %v2069 = vsel %vm131, %v1880, 0
    %2071 = vmatprep.subr.mxu0 %v67
    %2072 = vmatpush1.msra.mxu0 %v66
    %2073 = vmatprep.subr.mxu0 %v69
    %2074 = vmatpush1.msra.mxu0 %v68
    %2075 = vmatprep.subr.mxu0 %v71
    %2076 = vmatpush1.msra.mxu0 %v70
    %2077 = vmatprep.subr.mxu0 %v73
    %2078 = vmatpush1.msra.mxu0 %v72
    %2079 = vmatprep.subr.mxu0 %v75
    %2080 = vmatpush1.msra.mxu0 %v74
    %2081 = vmatprep.subr.mxu0 %v77
    %2082 = vmatpush1.msra.mxu0 %v76
    %2083 = vmatprep.subr.mxu0 %v79
    %2084 = vmatpush1.msra.mxu0 %v78
    %2085 = vmatprep.subr.mxu0 %v81
    %2086 = vmatpush1.msra.mxu0 %v80
    %2087 = vmatprep.subr.mxu0 0.0
    %2088 = vmatpush1.msra.mxu0 0.0
    %2089 = vmatprep.subr.mxu0 0.0
    %2090 = vmatpush1.msra.mxu0 0.0
    %2091 = vmatprep.subr.mxu0 0.0
    %2092 = vmatpush1.msra.mxu0 0.0
    %2093 = vmatprep.subr.mxu0 0.0
    %2094 = vmatpush1.msra.mxu0 0.0
    %2095 = vmatprep.subr.mxu0 0.0
    %2096 = vmatpush1.msra.mxu0 0.0
    %2097 = vmatprep.subr.mxu0 0.0
    %2098 = vmatpush1.msra.mxu0 0.0
    %2099 = vmatprep.subr.mxu0 0.0
    %2100 = vmatpush1.msra.mxu0 0.0
    %2101 = vmatprep.subr.mxu0 0.0
    %2102 = vmatpush1.msra.mxu0 0.0
    %2103 = vmatprep.subr.mxu0 0.0
    %2104 = vmatpush1.msra.mxu0 0.0
    %2105 = vmatprep.subr.mxu0 0.0
    %2106 = vmatpush1.msra.mxu0 0.0
    %2107 = vmatprep.subr.mxu0 0.0
    %2108 = vmatpush1.msra.mxu0 0.0
    %2109 = vmatprep.subr.mxu0 0.0
    %2110 = vmatpush1.msra.mxu0 0.0
    %2111 = vmatprep.subr.mxu0 0.0
    %2112 = vmatpush1.msra.mxu0 0.0
    %2113 = vmatprep.subr.mxu0 0.0
    %2114 = vmatpush1.msra.mxu0 0.0
    %2115 = vmatprep.subr.mxu0 0.0
    %2116 = vmatpush1.msra.mxu0 0.0
    %2117 = vmatprep.subr.mxu0 0.0
    %2118 = vmatpush1.msra.mxu0 0.0
    %2119 = vmatprep.subr.mxu0 0.0
    %2120 = vmatpush1.msra.mxu0 0.0
    %2121 = vmatprep.subr.mxu0 0.0
    %2122 = vmatpush1.msra.mxu0 0.0
    %2123 = vmatprep.subr.mxu0 0.0
    %2124 = vmatpush1.msra.mxu0 0.0
    %2125 = vmatprep.subr.mxu0 0.0
    %2126 = vmatpush1.msra.mxu0 0.0
    %2127 = vmatprep.subr.mxu0 0.0
    %2128 = vmatpush1.msra.mxu0 0.0
    %2129 = vmatprep.subr.mxu0 0.0
    %2130 = vmatpush1.msra.mxu0 0.0
    %2131 = vmatprep.subr.mxu0 0.0
    %2132 = vmatpush1.msra.mxu0 0.0
    %2133 = vmatprep.subr.mxu0 0.0
    %2134 = vmatpush1.msra.mxu0 0.0
    %2135 = vmatprep.mubr.f32.mxu0 0.0
    %2136 = vmatmul.mubr.f32.gmra.mrb[0].mxu0 %v2069
    %v2137 = vpop.f32.mrb[0].mxu0
    %v2138 = vadd.f32 0.0, %v2137
    %v2139 = vpop.f32.mrb[0].mxu0
    %v2140 = vadd.f32 0.0, %v2139
    %2141 = vdwg.mxu0
    %v2142 = vadd.f32 %v2064, %v2138
    %v2143 = vadd.f32 %v2066, %v2140
    %v2144 = vadd.f32 %v2142, %v357
    %v2145 = vadd.f32 %v2143, %v361
    %v2146 = vxor.u32 %v2144, 2147483648
    %v2147 = vxor.u32 %v2145, 2147483648
    %v2148 = vmul.f32 %v2146, 1.442695
    %v2149 = vpow.pop %v2148
    %v2150 = vmul.f32 %v2147, 1.442695
    %v2151 = vpow.pop %v2150
    %v2152 = vadd.f32 %v2149, 1.0
    %v2153 = vadd.f32 %v2151, 1.0
    %v2154 = vrcp.pop %v2152
    %v2155 = vmul.f32 1.0, %v2154
    %v2156 = vrcp.pop %v2153
    %v2157 = vmul.f32 1.0, %v2156
    %v2158 = vmul.f32 %v2157, 2.0
    %v2159 = vsub.f32 %v2158, 1.0
    %v2160 = vmul.f32 %v2155, %v1874
    %2162 = vrot.lane.b32.xlu0 %v2159, 64
    %v2163 = vpop.permute.xlu0 %2162
    %v2165 = vmul.f32 %v2155, %v2163
    %2167 = vrot.lane.b32.xlu0 %v2165, 64
    %v2168 = vpop.permute.xlu0 %2167
    %v2170 = vadd.f32 %v2160, %v2168
    %v2171 = vtanh.pop %v2170
    %2173 = vrot.lane.b32.xlu0 %v2171, 64
    %v2174 = vpop.permute.xlu0 %2173
    %v2176 = vmul.f32 %v2157, %v2174
    %s2177 = scalar_lea.vmem %s0, 28
    %v2178 = vld [vmem:[%s2177] sm:$0xf]
    %v2181 = vcombine.low %v1993, %v1995
    %v2183 = vunpack.c.l.s4 1983009808
    %v2184 = vunpack.c.0.s8 %v2183
    %v2185 = vlaneseq
    %v2186 = vshrl.u32 %v2185, 7
    %v2187 = vsub.s32 %v2184, %v2186
    %v2188 = vrot.slane %v2181, %v2187
    %v2190 = vadd.f32 %v2178, %v2188
    %v2191 = vxor.u32 %v2190, 2147483648
    %v2192 = vmul.f32 %v2191, 1.442695
    %v2193 = vpow.pop %v2192
    %v2194 = vadd.f32 %v2193, 1.0
    %v2195 = vrcp.pop %v2194
    %v2196 = vmul.f32 1.0, %v2195
    %2198 = vrot.lane.b32.xlu0 %v2196, 64
    %v2199 = vpop.permute.xlu0 %2198
    %v2200 = vrot.slane %v2199, 2
    %v2202 = vmul.f32 %v2200, 2.0
    %v2203 = vsub.f32 %v2202, 1.0
    %v2204 = vmul.f32 %v2196, %v1914
    %v2205 = vmul.f32 %v2196, %v2203
    %2207 = vrot.lane.b32.xlu0 %v2205, 64
    %v2208 = vpop.permute.xlu0 %2207
    %v2210 = vadd.f32 %v2204, %v2208
    %v2211 = vtanh.pop %v2210
    %v2212 = vrot.slane %v2196, 2
    %2215 = vrot.lane.b32.xlu0 %v2211, 64
    %v2216 = vpop.permute.xlu0 %2215
    %v2218 = vmul.f32 %v2212, %v2216
    %v2220 = vsel %vm131, %v2218, 0
    %2222 = vmatprep.subr.mxu0 %v35
    %2223 = vmatpush1.msra.mxu0 %v34
    %2224 = vmatprep.subr.mxu0 %v39
    %2225 = vmatpush1.msra.mxu0 %v38
    %2226 = vmatprep.subr.mxu0 %v43
    %2227 = vmatpush1.msra.mxu0 %v42
    %2228 = vmatprep.subr.mxu0 %v47
    %2229 = vmatpush1.msra.mxu0 %v46
    %2230 = vmatprep.subr.mxu0 %v51
    %2231 = vmatpush1.msra.mxu0 %v50
    %2232 = vmatprep.subr.mxu0 %v55
    %2233 = vmatpush1.msra.mxu0 %v54
    %2234 = vmatprep.subr.mxu0 %v59
    %2235 = vmatpush1.msra.mxu0 %v58
    %2236 = vmatprep.subr.mxu0 %v63
    %2237 = vmatpush1.msra.mxu0 %v62
    %2238 = vmatprep.subr.mxu0 0.0
    %2239 = vmatpush1.msra.mxu0 0.0
    %2240 = vmatprep.subr.mxu0 0.0
    %2241 = vmatpush1.msra.mxu0 0.0
    %2242 = vmatprep.subr.mxu0 0.0
    %2243 = vmatpush1.msra.mxu0 0.0
    %2244 = vmatprep.subr.mxu0 0.0
    %2245 = vmatpush1.msra.mxu0 0.0
    %2246 = vmatprep.subr.mxu0 0.0
    %2247 = vmatpush1.msra.mxu0 0.0
    %2248 = vmatprep.subr.mxu0 0.0
    %2249 = vmatpush1.msra.mxu0 0.0
    %2250 = vmatprep.subr.mxu0 0.0
    %2251 = vmatpush1.msra.mxu0 0.0
    %2252 = vmatprep.subr.mxu0 0.0
    %2253 = vmatpush1.msra.mxu0 0.0
    %2254 = vmatprep.subr.mxu0 0.0
    %2255 = vmatpush1.msra.mxu0 0.0
    %2256 = vmatprep.subr.mxu0 0.0
    %2257 = vmatpush1.msra.mxu0 0.0
    %2258 = vmatprep.subr.mxu0 0.0
    %2259 = vmatpush1.msra.mxu0 0.0
    %2260 = vmatprep.subr.mxu0 0.0
    %2261 = vmatpush1.msra.mxu0 0.0
    %2262 = vmatprep.subr.mxu0 0.0
    %2263 = vmatpush1.msra.mxu0 0.0
    %2264 = vmatprep.subr.mxu0 0.0
    %2265 = vmatpush1.msra.mxu0 0.0
    %2266 = vmatprep.subr.mxu0 0.0
    %2267 = vmatpush1.msra.mxu0 0.0
    %2268 = vmatprep.subr.mxu0 0.0
    %2269 = vmatpush1.msra.mxu0 0.0
    %2270 = vmatprep.subr.mxu0 0.0
    %2271 = vmatpush1.msra.mxu0 0.0
    %2272 = vmatprep.subr.mxu0 0.0
    %2273 = vmatpush1.msra.mxu0 0.0
    %2274 = vmatprep.subr.mxu0 0.0
    %2275 = vmatpush1.msra.mxu0 0.0
    %2276 = vmatprep.subr.mxu0 0.0
    %2277 = vmatpush1.msra.mxu0 0.0
    %2278 = vmatprep.subr.mxu0 0.0
    %2279 = vmatpush1.msra.mxu0 0.0
    %2280 = vmatprep.subr.mxu0 0.0
    %2281 = vmatpush1.msra.mxu0 0.0
    %2282 = vmatprep.subr.mxu0 0.0
    %2283 = vmatpush1.msra.mxu0 0.0
    %2284 = vmatprep.subr.mxu0 0.0
    %2285 = vmatpush1.msra.mxu0 0.0
    %2286 = vmatprep.mubr.f32.mxu0 0.0
    %2287 = vmatmul.mubr.f32.gmra.mrb[0].mxu0 %v2220
    %v2288 = vpop.f32.mrb[0].mxu0
    %v2289 = vadd.f32 0.0, %v2288
    %v2290 = vpop.f32.mrb[0].mxu0
    %v2291 = vadd.f32 0.0, %v2290
    %2292 = vdwg.mxu0
    %2293 = vmatprep.subr.mxu0 %v37
    %2294 = vmatpush1.msra.mxu0 %v36
    %2295 = vmatprep.subr.mxu0 %v41
    %2296 = vmatpush1.msra.mxu0 %v40
    %2297 = vmatprep.subr.mxu0 %v45
    %2298 = vmatpush1.msra.mxu0 %v44
    %2299 = vmatprep.subr.mxu0 %v49
    %2300 = vmatpush1.msra.mxu0 %v48
    %2301 = vmatprep.subr.mxu0 %v53
    %2302 = vmatpush1.msra.mxu0 %v52
    %2303 = vmatprep.subr.mxu0 %v57
    %2304 = vmatpush1.msra.mxu0 %v56
    %2305 = vmatprep.subr.mxu0 %v61
    %2306 = vmatpush1.msra.mxu0 %v60
    %2307 = vmatprep.subr.mxu0 %v65
    %2308 = vmatpush1.msra.mxu0 %v64
    %2309 = vmatprep.subr.mxu0 0.0
    %2310 = vmatpush1.msra.mxu0 0.0
    %2311 = vmatprep.subr.mxu0 0.0
    %2312 = vmatpush1.msra.mxu0 0.0
    %2313 = vmatprep.subr.mxu0 0.0
    %2314 = vmatpush1.msra.mxu0 0.0
    %2315 = vmatprep.subr.mxu0 0.0
    %2316 = vmatpush1.msra.mxu0 0.0
    %2317 = vmatprep.subr.mxu0 0.0
    %2318 = vmatpush1.msra.mxu0 0.0
    %2319 = vmatprep.subr.mxu0 0.0
    %2320 = vmatpush1.msra.mxu0 0.0
    %2321 = vmatprep.subr.mxu0 0.0
    %2322 = vmatpush1.msra.mxu0 0.0
    %2323 = vmatprep.subr.mxu0 0.0
    %2324 = vmatpush1.msra.mxu0 0.0
    %2325 = vmatprep.subr.mxu0 0.0
    %2326 = vmatpush1.msra.mxu0 0.0
    %2327 = vmatprep.subr.mxu0 0.0
    %2328 = vmatpush1.msra.mxu0 0.0
    %2329 = vmatprep.subr.mxu0 0.0
    %2330 = vmatpush1.msra.mxu0 0.0
    %2331 = vmatprep.subr.mxu0 0.0
    %2332 = vmatpush1.msra.mxu0 0.0
    %2333 = vmatprep.subr.mxu0 0.0
    %2334 = vmatpush1.msra.mxu0 0.0
    %2335 = vmatprep.subr.mxu0 0.0
    %2336 = vmatpush1.msra.mxu0 0.0
    %2337 = vmatprep.subr.mxu0 0.0
    %2338 = vmatpush1.msra.mxu0 0.0
    %2339 = vmatprep.subr.mxu0 0.0
    %2340 = vmatpush1.msra.mxu0 0.0
    %2341 = vmatprep.subr.mxu0 0.0
    %2342 = vmatpush1.msra.mxu0 0.0
    %2343 = vmatprep.subr.mxu0 0.0
    %2344 = vmatpush1.msra.mxu0 0.0
    %2345 = vmatprep.subr.mxu0 0.0
    %2346 = vmatpush1.msra.mxu0 0.0
    %2347 = vmatprep.subr.mxu0 0.0
    %2348 = vmatpush1.msra.mxu0 0.0
    %2349 = vmatprep.subr.mxu0 0.0
    %2350 = vmatpush1.msra.mxu0 0.0
    %2351 = vmatprep.subr.mxu0 0.0
    %2352 = vmatpush1.msra.mxu0 0.0
    %2353 = vmatprep.subr.mxu0 0.0
    %2354 = vmatpush1.msra.mxu0 0.0
    %2355 = vmatprep.subr.mxu0 0.0
    %2356 = vmatpush1.msra.mxu0 0.0
    %2357 = vmatprep.mubr.f32.mxu0 0.0
    %2358 = vmatmul.mubr.f32.gmra.mrb[0].mxu0 %v2220
    %v2359 = vpop.f32.mrb[0].mxu0
    %v2360 = vadd.f32 0.0, %v2359
    %v2361 = vpop.f32.mrb[0].mxu0
    %v2362 = vadd.f32 0.0, %v2361
    %2363 = vdwg.mxu0
    %v2365 = vsel %vm131, %v2176, 0
    %2367 = vmatprep.subr.mxu0 %v67
    %2368 = vmatpush1.msra.mxu0 %v66
    %2369 = vmatprep.subr.mxu0 %v69
    %2370 = vmatpush1.msra.mxu0 %v68
    %2371 = vmatprep.subr.mxu0 %v71
    %2372 = vmatpush1.msra.mxu0 %v70
    %2373 = vmatprep.subr.mxu0 %v73
    %2374 = vmatpush1.msra.mxu0 %v72
    %2375 = vmatprep.subr.mxu0 %v75
    %2376 = vmatpush1.msra.mxu0 %v74
    %2377 = vmatprep.subr.mxu0 %v77
    %2378 = vmatpush1.msra.mxu0 %v76
    %2379 = vmatprep.subr.mxu0 %v79
    %2380 = vmatpush1.msra.mxu0 %v78
    %2381 = vmatprep.subr.mxu0 %v81
    %2382 = vmatpush1.msra.mxu0 %v80
    %2383 = vmatprep.subr.mxu0 0.0
    %2384 = vmatpush1.msra.mxu0 0.0
    %2385 = vmatprep.subr.mxu0 0.0
    %2386 = vmatpush1.msra.mxu0 0.0
    %2387 = vmatprep.subr.mxu0 0.0
    %2388 = vmatpush1.msra.mxu0 0.0
    %2389 = vmatprep.subr.mxu0 0.0
    %2390 = vmatpush1.msra.mxu0 0.0
    %2391 = vmatprep.subr.mxu0 0.0
    %2392 = vmatpush1.msra.mxu0 0.0
    %2393 = vmatprep.subr.mxu0 0.0
    %2394 = vmatpush1.msra.mxu0 0.0
    %2395 = vmatprep.subr.mxu0 0.0
    %2396 = vmatpush1.msra.mxu0 0.0
    %2397 = vmatprep.subr.mxu0 0.0
    %2398 = vmatpush1.msra.mxu0 0.0
    %2399 = vmatprep.subr.mxu0 0.0
    %2400 = vmatpush1.msra.mxu0 0.0
    %2401 = vmatprep.subr.mxu0 0.0
    %2402 = vmatpush1.msra.mxu0 0.0
    %2403 = vmatprep.subr.mxu0 0.0
    %2404 = vmatpush1.msra.mxu0 0.0
    %2405 = vmatprep.subr.mxu0 0.0
    %2406 = vmatpush1.msra.mxu0 0.0
    %2407 = vmatprep.subr.mxu0 0.0
    %2408 = vmatpush1.msra.mxu0 0.0
    %2409 = vmatprep.subr.mxu0 0.0
    %2410 = vmatpush1.msra.mxu0 0.0
    %2411 = vmatprep.subr.mxu0 0.0
    %2412 = vmatpush1.msra.mxu0 0.0
    %2413 = vmatprep.subr.mxu0 0.0
    %2414 = vmatpush1.msra.mxu0 0.0
    %2415 = vmatprep.subr.mxu0 0.0
    %2416 = vmatpush1.msra.mxu0 0.0
    %2417 = vmatprep.subr.mxu0 0.0
    %2418 = vmatpush1.msra.mxu0 0.0
    %2419 = vmatprep.subr.mxu0 0.0
    %2420 = vmatpush1.msra.mxu0 0.0
    %2421 = vmatprep.subr.mxu0 0.0
    %2422 = vmatpush1.msra.mxu0 0.0
    %2423 = vmatprep.subr.mxu0 0.0
    %2424 = vmatpush1.msra.mxu0 0.0
    %2425 = vmatprep.subr.mxu0 0.0
    %2426 = vmatpush1.msra.mxu0 0.0
    %2427 = vmatprep.subr.mxu0 0.0
    %2428 = vmatpush1.msra.mxu0 0.0
    %2429 = vmatprep.subr.mxu0 0.0
    %2430 = vmatpush1.msra.mxu0 0.0
    %2431 = vmatprep.mubr.f32.mxu0 0.0
    %2432 = vmatmul.mubr.f32.gmra.mrb[0].mxu0 %v2365
    %v2433 = vpop.f32.mrb[0].mxu0
    %v2434 = vadd.f32 0.0, %v2433
    %v2435 = vpop.f32.mrb[0].mxu0
    %v2436 = vadd.f32 0.0, %v2435
    %2437 = vdwg.mxu0
    %v2438 = vadd.f32 %v2360, %v2434
    %v2439 = vadd.f32 %v2362, %v2436
    %v2440 = vadd.f32 %v2438, %v357
    %v2441 = vadd.f32 %v2439, %v361
    %v2442 = vxor.u32 %v2440, 2147483648
    %v2443 = vxor.u32 %v2441, 2147483648
    %v2444 = vmul.f32 %v2442, 1.442695
    %v2445 = vpow.pop %v2444
    %v2446 = vmul.f32 %v2443, 1.442695
    %v2447 = vpow.pop %v2446
    %v2448 = vadd.f32 %v2445, 1.0
    %v2449 = vadd.f32 %v2447, 1.0
    %v2450 = vrcp.pop %v2448
    %v2451 = vmul.f32 1.0, %v2450
    %v2452 = vrcp.pop %v2449
    %v2453 = vmul.f32 1.0, %v2452
    %v2454 = vmul.f32 %v2453, 2.0
    %v2455 = vsub.f32 %v2454, 1.0
    %v2456 = vmul.f32 %v2451, %v2170
    %2458 = vrot.lane.b32.xlu0 %v2455, 64
    %v2459 = vpop.permute.xlu0 %2458
    %v2461 = vmul.f32 %v2451, %v2459
    %2463 = vrot.lane.b32.xlu0 %v2461, 64
    %v2464 = vpop.permute.xlu0 %2463
    %v2466 = vadd.f32 %v2456, %v2464
    %v2467 = vtanh.pop %v2466
    %2469 = vrot.lane.b32.xlu0 %v2467, 64
    %v2470 = vpop.permute.xlu0 %2469
    %v2472 = vmul.f32 %v2453, %v2470
    %vm2473 = vcmask 517120
    %2474 = vst.msk [vmem:[#allocation2] sm:$0x3] %vm2473, %v2218
    %v2477 = vunpack.c.l.s4 1983009808
    %v2478 = vunpack.c.0.s8 %v2477
    %v2479 = vlaneseq
    %v2480 = vshrl.u32 %v2479, 7
    %v2481 = vsub.s32 %v2478, %v2480
    %v2482 = vrot.slane %v2210, %v2481
    %2483 = vrot.lane.b32.xlu0 %v2482, 64
    %v2484 = vpop.permute.xlu0 %2483
    %2486 = vst.msk [vmem:[%s83] sm:$0x3] %vm2473, %v2484
    %2487 = vst.msk [vmem:[%s85] sm:$0x3] %vm2473, %v2472
    %2489 = vrot.lane.b32.xlu0 %v2466, 64
    %v2490 = vpop.permute.xlu0 %2489
    %2492 = vst.msk [vmem:[%s87] sm:$0x3] %vm2473, %v2490
    %v2495 = vcombine.low %v2289, %v2291
    %v2497 = vunpack.c.l.s4 1983009808
    %v2498 = vunpack.c.0.s8 %v2497
    %v2499 = vlaneseq
    %v2500 = vshrl.u32 %v2499, 7
    %v2501 = vsub.s32 %v2498, %v2500
    %v2502 = vrot.slane %v2495, %v2501
    %2504 = vst [vmem:[#allocation3] sm:$0xf] %v2502
    // Predicated region
    $region30: #{risk_sequence_forward.1} parent=1 // pred_check
      %p2505 = pneg %p24
    $region31: #{risk_sequence_forward.1} parent=1 // pred_check_branch
      %2507 = sbr.rel (%p2505) target = $region33
    $region32: #{risk_sequence_forward.1} parent=1 // pred_region
      %v2508 = vld [vmem:[%s4] sm:$0xff]
      %v2509 = vld [vmem:[%s4 + $0x8] sm:$0xff]
      %v2510 = vld [vmem:[%s4 + $0x10] sm:$0xff]
      %v2511 = vld [vmem:[%s4 + $0x18] sm:$0xff]
      %v2512 = vld [vmem:[%s4 + $0x20] sm:$0xff]
      %v2513 = vld [vmem:[%s4 + $0x28] sm:$0xff]
      %v2514 = vld [vmem:[%s4 + $0x30] sm:$0xff]
      %v2515 = vld [vmem:[%s4 + $0x38] sm:$0xff]
      %v2516 = vld [vmem:[%s5] sm:$0x1]
      %v2518 = vlaneseq
      %v2519 = vshrl.u32 %v2518, 7
      %v2520 = vsub.s32 0, %v2519
      %v2521 = vrot.slane %v2516, %v2520
      %v2524 = vsel %vm131, %v2472, 0
      %2526 = vmatprep.subr.mxu0 0.0
      %2527 = vmatpush1.msra.mxu0 %v2508
      %2528 = vmatprep.subr.mxu0 0.0
      %2529 = vmatpush1.msra.mxu0 %v2509
      %2530 = vmatprep.subr.mxu0 0.0
      %2531 = vmatpush1.msra.mxu0 %v2510
      %2532 = vmatprep.subr.mxu0 0.0
      %2533 = vmatpush1.msra.mxu0 %v2511
      %2534 = vmatprep.subr.mxu0 0.0
      %2535 = vmatpush1.msra.mxu0 %v2512
      %2536 = vmatprep.subr.mxu0 0.0
      %2537 = vmatpush1.msra.mxu0 %v2513
      %2538 = vmatprep.subr.mxu0 0.0
      %2539 = vmatpush1.msra.mxu0 %v2514
      %2540 = vmatprep.subr.mxu0 0.0
      %2541 = vmatpush1.msra.mxu0 %v2515
      %2542 = vmatprep.subr.mxu0 0.0
      %2543 = vmatpush1.msra.mxu0 0.0
      %2544 = vmatprep.subr.mxu0 0.0
      %2545 = vmatpush1.msra.mxu0 0.0
      %2546 = vmatprep.subr.mxu0 0.0
      %2547 = vmatpush1.msra.mxu0 0.0
      %2548 = vmatprep.subr.mxu0 0.0
      %2549 = vmatpush1.msra.mxu0 0.0
      %2550 = vmatprep.subr.mxu0 0.0
      %2551 = vmatpush1.msra.mxu0 0.0
      %2552 = vmatprep.subr.mxu0 0.0
      %2553 = vmatpush1.msra.mxu0 0.0
      %2554 = vmatprep.subr.mxu0 0.0
      %2555 = vmatpush1.msra.mxu0 0.0
      %2556 = vmatprep.subr.mxu0 0.0
      %2557 = vmatpush1.msra.mxu0 0.0
      %2558 = vmatprep.subr.mxu0 0.0
      %2559 = vmatpush1.msra.mxu0 0.0
      %2560 = vmatprep.subr.mxu0 0.0
      %2561 = vmatpush1.msra.mxu0 0.0
      %2562 = vmatprep.subr.mxu0 0.0
      %2563 = vmatpush1.msra.mxu0 0.0
      %2564 = vmatprep.subr.mxu0 0.0
      %2565 = vmatpush1.msra.mxu0 0.0
      %2566 = vmatprep.subr.mxu0 0.0
      %2567 = vmatpush1.msra.mxu0 0.0
      %2568 = vmatprep.subr.mxu0 0.0
      %2569 = vmatpush1.msra.mxu0 0.0
      %2570 = vmatprep.subr.mxu0 0.0
      %2571 = vmatpush1.msra.mxu0 0.0
      %2572 = vmatprep.subr.mxu0 0.0
      %2573 = vmatpush1.msra.mxu0 0.0
      %2574 = vmatprep.subr.mxu0 0.0
      %2575 = vmatpush1.msra.mxu0 0.0
      %2576 = vmatprep.subr.mxu0 0.0
      %2577 = vmatpush1.msra.mxu0 0.0
      %2578 = vmatprep.subr.mxu0 0.0
      %2579 = vmatpush1.msra.mxu0 0.0
      %2580 = vmatprep.subr.mxu0 0.0
      %2581 = vmatpush1.msra.mxu0 0.0
      %2582 = vmatprep.subr.mxu0 0.0
      %2583 = vmatpush1.msra.mxu0 0.0
      %2584 = vmatprep.subr.mxu0 0.0
      %2585 = vmatpush1.msra.mxu0 0.0
      %2586 = vmatprep.subr.mxu0 0.0
      %2587 = vmatpush1.msra.mxu0 0.0
      %2588 = vmatprep.subr.mxu0 0.0
      %2589 = vmatpush1.msra.mxu0 0.0
      %2590 = vmatprep.mubr.f32.mxu0 0.0
      %2591 = vmatmul.mubr.f32.gmra.mrb[0].mxu0 %v2524
      %v2592 = vpop.f32.mrb[0].mxu0
      %v2593 = vadd.f32 %v2521, %v2592
      %v2594 = vpop.f32.mrb[0].mxu0
      %2595 = vdwg.mxu0
      %v2596 = vxor.u32 %v2593, 2147483648
      %v2597 = vmul.f32 %v2596, 1.442695
      %v2598 = vpow.pop %v2597
      %v2599 = vadd.f32 %v2598, 1.0
      %v2600 = vrcp.pop %v2599
      %v2601 = vmul.f32 1.0, %v2600
      %vm2602 = vcmask 17408
      %2603 = vst.msk [vmem:[#allocation4] sm:$0x3] %vm2602, %v2601
    $region33: #{risk_sequence_forward.1} parent=1 // pred_fallthru
      _
    // Predicated region
    $region34: #{risk_sequence_forward.1} parent=1 // pred_check
      _
    $region35: #{risk_sequence_forward.1} parent=1 // pred_check_branch
      %2605 = sbr.rel (0) target = $region37
    $region36: #{risk_sequence_forward.1} parent=1 // pred_region
      %s2607 = ssub.s32 32, 32
      %2608 = vsyncadd [#allocation5], %s2607
      %s2610 = sshll.u32 [#allocation4], 4
      %s2611 = int_to_ptr.vmem [resolvable:$true] %s2610
      %2613 = dma.vmem_to_hbm [thread:$0]  %s2611, 32, %s6, [#allocation5]
    $region37: #{risk_sequence_forward.1} parent=1 // pred_fallthru
      _
    // Predicated region
    $region38: #{risk_sequence_forward.1} parent=1 // pred_check
      _
    $region39: #{risk_sequence_forward.1} parent=1 // pred_check_branch
      %2615 = sbr.rel (0) target = $region41
    $region40: #{risk_sequence_forward.1} parent=1 // pred_region
      %2616 = dma.done [#allocation5], 32
    $region41: #{risk_sequence_forward.1} parent=1 // pred_fallthru
      _
    %2617 = vsyncpa [#allocation5], 1

</llo_original>
